<compile_context>
chip_gen: v7x
topology: tpu7x:2x2x1
jax: 0.10.0
libtpu: 0.0.40
codegen_flags: <defaults>
</compile_context>

<pallas_src>
import functools

import jax
import jax.numpy as jnp
from jax import lax
from jax.experimental import pallas as pl
from jax.experimental.pallas import tpu as pltpu

FEAT = 32     # SimpleBody.out_feats
HID = 128     # DQNBase.gru_size


def _detect_256_deep_mxu():
    """True on v6e / v7x (256-deep MXU -> fuse the two hidden projections)."""
    try:
        kind = jax.devices()[0].device_kind.lower()
    except Exception:
        return False
    return any(tag in kind for tag in ("v6", "v7", "7x"))


_FUSE_HIDDEN = _detect_256_deep_mxu()


def _dqn_base_kernel(fuse_hidden,
                     states_ref,                    # (T*BB, C)  f32, per-tile time-major
                     w1_ref, b1_ref,                # (C, 32) bf16, (1, 32) f32
                     wih0_ref,                      # (32, 3H) bf16
                     whh_ref,                       # (2, H, 3H) bf16  OR  (2H, 6H) bf16 (fused)
                     bx0_ref, bhn0_ref,             # (1, 3H) f32 (b_ih0 + [b_hr0,b_hz0,0]), (1, H) f32
                     wih1_ref,                      # (H, 3H) bf16
                     bx1_ref, bhn1_ref,             # (1, 3H) f32 (b_ih1 + [b_hr1,b_hz1,0]), (1, H) f32
                     wlf_ref, blf_ref,              # (H, A_pad) bf16, (1, A_pad) f32
                     out_ref,                       # (BB, A_pad) f32
                     xp0_ref):                      # VMEM scratch (T*BB, 3H) f32
    TB, _ = states_ref.shape
    B = out_ref.shape[0]
    T = TB // B
    H = wih1_ref.shape[0]

    # ---- hoisted, time-invariant input path: relu(fc1) + layer-0 input projection ----
    # One batched MXU-friendly matmul pair over all timesteps; r/z thirds of b_hh0 folded in.
    x_all = states_ref[...].astype(jnp.bfloat16)                              # (T*BB, C)
    f_all = jnp.maximum(
        jnp.dot(x_all, w1_ref[...], preferred_element_type=jnp.float32) + b1_ref[...],
        0.0)                                                                  # (T*BB, 32) f32
    xp0_ref[...] = (jnp.dot(f_all.astype(jnp.bfloat16), wih0_ref[...],
                            preferred_element_type=jnp.float32)
                    + bx0_ref[...])                                           # (T*BB, 3H) f32

    # ---- hoisted weight / small-bias loads ----
    wih1 = wih1_ref[...]
    bx1 = bx1_ref[...]           # (1, 3H), broadcasts inside the add (no pinned (BB,3H) vregs)
    bhn0 = bhn0_ref[...]         # (1, H)
    bhn1 = bhn1_ref[...]         # (1, H)
    if fuse_hidden:
        whhf = whh_ref[...]      # (2H, 6H) block-diagonal
    else:
        whh0 = whh_ref[0]        # (H, 3H)
        whh1 = whh_ref[1]        # (H, 3H)

    def gates(xp, hp, h, bhn):
        # PyTorch GRU gate order: r, z, n.  r/z biases are already folded into xp;
        # the n-gate b_hh slice stays inside the r-multiplied term (PyTorch parity).
        xr, xz, xn = xp[:, :H], xp[:, H:2 * H], xp[:, 2 * H:]
        hr, hz, hn = hp[:, :H], hp[:, H:2 * H], hp[:, 2 * H:]
        r = jax.nn.sigmoid(xr + hr)
        z = jax.nn.sigmoid(xz + hz)
        n = jnp.tanh(xn + r * (hn + bhn))
        return (1.0 - z) * n + z * h

    def step(t, carry):
        h0, h1 = carry
        off = pl.multiple_of(t * B, B)
        xp0 = xp0_ref[pl.ds(off, B), :]                                       # (BB, 3H)
        if fuse_hidden:
            # v6e/v7x: one (BB,2H)@(2H,6H) matmul fills the 256-deep MXU; slice at the
            # lane-aligned 3H boundary.
            hcat = jnp.concatenate([h0, h1], axis=1).astype(jnp.bfloat16)     # (BB, 2H)
            hp = jnp.dot(hcat, whhf, preferred_element_type=jnp.float32)      # (BB, 6H)
            hp0, hp1 = hp[:, :3 * H], hp[:, 3 * H:]
        else:
            # v5e: K=128 already fills the MXU; issue the layer-1 hidden projection
            # (depends only on the previous h1) first so its MXU latency hides under
            # the layer-0 EUP/VPU gate math.
            hp1 = jnp.dot(h1.astype(jnp.bfloat16), whh1,
                          preferred_element_type=jnp.float32)
            hp0 = jnp.dot(h0.astype(jnp.bfloat16), whh0,
                          preferred_element_type=jnp.float32)
        h0n = gates(xp0, hp0, h0, bhn0)
        xp1 = jnp.dot(h0n.astype(jnp.bfloat16), wih1,
                      preferred_element_type=jnp.float32) + bx1
        h1n = gates(xp1, hp1, h1, bhn1)
        return (h0n, h1n)

    h0 = jnp.zeros((B, H), jnp.float32)
    h1 = jnp.zeros((B, H), jnp.float32)
    # Full unroll only while T is small; modest unroll otherwise (keeps LLO visibility
    # without blowing up live ranges).
    h0, h1 = lax.fori_loop(0, T, step, (h0, h1),
                           unroll=(True if T <= 16 else 4))

    # Final Linear(gru_size, num_actions) on the last timestep, lane-dense (A padded to 128).
    # TODO(synk): bf16 gate math on v6e/v7x and bf16 xp0 + time-chunked grid for large T.
    out_ref[...] = (jnp.dot(h1.astype(jnp.bfloat16), wlf_ref[...],
                            preferred_element_type=jnp.float32)
                    + blf_ref[...]).astype(out_ref.dtype)


def init_params(key, num_channels, num_actions):
    """Deterministic synthetic params with PyTorch-default-like uniform init, PyTorch shapes."""
    ks = jax.random.split(key, 12)

    def u(k, shape, fan_in):
        bound = 1.0 / jnp.sqrt(jnp.float32(fan_in))
        return jax.random.uniform(k, shape, jnp.float32, -bound, bound)

    return {
        # SimpleBody.fc1
        "w1":    u(ks[0], (FEAT, num_channels), num_channels),
        "b1":    u(ks[1], (FEAT,), num_channels),
        # GRU layer 0 (input 32 -> hidden 128), gate order r,z,n
        "w_ih0": u(ks[2], (3 * HID, FEAT), HID),
        "w_hh0": u(ks[3], (3 * HID, HID), HID),
        "b_ih0": u(ks[4], (3 * HID,), HID),
        "b_hh0": u(ks[5], (3 * HID,), HID),
        # GRU layer 1 (input 128 -> hidden 128)
        "w_ih1": u(ks[6], (3 * HID, HID), HID),
        "w_hh1": u(ks[7], (3 * HID, HID), HID),
        "b_ih1": u(ks[8], (3 * HID,), HID),
        "b_hh1": u(ks[9], (3 * HID,), HID),
        # lf
        "w_lf":  u(ks[10], (num_actions, HID), HID),
        "b_lf":  u(ks[11], (num_actions,), HID),
    }


@jax.jit
def dqn_base_forward(states, params):
    """states: (B, T, num_channels) float32 -> (B, num_actions) float32."""
    B, T, C = states.shape
    A = params["w_lf"].shape[0]
    H = HID

    # Adaptive batch tile: big tiles for MXU row occupancy, 16 floor for tiny batches.
    BB = 256 if B >= 256 else (128 if B >= 128 else 16)
    B_pad = pl.cdiv(B, BB) * BB
    n_tiles = B_pad // BB
    A_pad = pl.cdiv(max(A, 1), 128) * 128          # lane-dense output store

    # Per-tile, time-major contiguous slab: (tile, T, BB, C) -> flat (n_tiles*T*BB, C).
    states_p = jnp.pad(states, ((0, B_pad - B), (0, 0), (0, 0)))
    states_flat = (states_p.reshape(n_tiles, BB, T, C)
                   .transpose(0, 2, 1, 3)
                   .reshape(n_tiles * T * BB, C))

    bf = lambda w: w.astype(jnp.bfloat16)
    zH = jnp.zeros((H,), jnp.float32)
    # Fold r/z thirds of b_hh into the x-side biases; keep the n-gate b_hh slices separate.
    bx0 = (params["b_ih0"] + jnp.concatenate([params["b_hh0"][:2 * H], zH])).reshape(1, -1)
    bhn0 = params["b_hh0"][2 * H:].reshape(1, -1)
    bx1 = (params["b_ih1"] + jnp.concatenate([params["b_hh1"][:2 * H], zH])).reshape(1, -1)
    bhn1 = params["b_hh1"][2 * H:].reshape(1, -1)

    fuse_hidden = _FUSE_HIDDEN
    if fuse_hidden:
        zblk = jnp.zeros((H, 3 * H), jnp.float32)
        whh = bf(jnp.concatenate(
            [jnp.concatenate([params["w_hh0"].T, zblk], axis=1),
             jnp.concatenate([zblk, params["w_hh1"].T], axis=1)], axis=0))   # (2H, 6H)
    else:
        whh = bf(jnp.stack([params["w_hh0"].T, params["w_hh1"].T]))          # (2, H, 3H)

    wlf = jnp.zeros((H, A_pad), jnp.float32).at[:, :A].set(params["w_lf"].T)
    blf = jnp.zeros((1, A_pad), jnp.float32).at[0, :A].set(params["b_lf"])

    args = (
        states_flat,
        bf(params["w1"].T), params["b1"].reshape(1, -1),
        bf(params["w_ih0"].T), whh, bx0, bhn0,
        bf(params["w_ih1"].T), bx1, bhn1,
        bf(wlf), blf,
    )

    def full_spec(a):
        n = a.ndim
        return pl.BlockSpec(a.shape, lambda i, n=n: (0,) * n)

    in_specs = ([pl.BlockSpec((T * BB, C), lambda i: (i, 0))]
                + [full_spec(a) for a in args[1:]])
    out_specs = pl.BlockSpec((BB, A_pad), lambda i: (i, 0))

    # TODO(synk): for very large T (esp. v7x's 64 MiB VMEM), chunk the time axis with an
    # "arbitrary" grid dim, carry h0/h1 in VMEM scratch, and store xp0 in bf16.
    out_p = pl.pallas_call(
        functools.partial(_dqn_base_kernel, fuse_hidden),
        out_shape=jax.ShapeDtypeStruct((B_pad, A_pad), jnp.float32),
        grid=(n_tiles,),
        in_specs=in_specs,
        out_specs=out_specs,
        scratch_shapes=[pltpu.VMEM((T * BB, 3 * HID), jnp.float32)],
        compiler_params=pltpu.CompilerParams(
            dimension_semantics=("parallel",),     # shard batch tiles across TCs (v7x)
            vmem_limit_bytes=32 * 1024 * 1024,
        ),
    )(*args)
    return out_p[:B, :A]


def dqn_base_reference(states, p):
    """Pure-JAX f32 reference matching torch.nn.GRU semantics (gate order r,z,n)."""
    feats = jax.nn.relu(states @ p["w1"].T + p["b1"])

    def gru_layer(x, w_ih, w_hh, b_ih, b_hh):
        B = x.shape[0]
        H = w_hh.shape[1]

        def cell(h, x_t):
            gi = x_t @ w_ih.T + b_ih
            gh = h @ w_hh.T + b_hh
            r = jax.nn.sigmoid(gi[:, :H] + gh[:, :H])
            z = jax.nn.sigmoid(gi[:, H:2 * H] + gh[:, H:2 * H])
            n = jnp.tanh(gi[:, 2 * H:] + r * gh[:, 2 * H:])
            hn = (1.0 - z) * n + z * h
            return hn, hn

        h0 = jnp.zeros((B, H), jnp.float32)
        _, hs = lax.scan(cell, h0, jnp.swapaxes(x, 0, 1))
        return jnp.swapaxes(hs, 0, 1)

    y = gru_layer(feats, p["w_ih0"], p["w_hh0"], p["b_ih0"], p["b_hh0"])
    y = gru_layer(y, p["w_ih1"], p["w_hh1"], p["b_ih1"], p["b_hh1"])
    out = y @ p["w_lf"].T + p["b_lf"]
    return out[:, -1, :]


if __name__ == "__main__":
    B, T, C, A = 2, 8, 4, 6   # batch, seq, num_channels, num_actions

    key = jax.random.PRNGKey(0)
    k_params, k_states = jax.random.split(key)
    params = init_params(k_params, num_channels=C, num_actions=A)
    states = jax.random.normal(k_states, (B, T, C), jnp.float32)

    out = dqn_base_forward(states, params)
    out = jax.block_until_ready(out)

    ref = dqn_base_reference(states, params)
    assert out.shape == (B, A), out.shape
    # Tolerance covers bf16 weight/activation quantization inside the kernel
    # (f32 accumulation, f32 gates/carry); structure/semantics identical to the f32 module.
    assert jnp.allclose(out, ref, atol=1e-2, rtol=1e-2), (out, ref)

    print("KERNEL_OK")
</pallas_src>

<mosaic_0001>
module attributes {stable_mosaic.version = 11 : i64} {
  func.func @_dqn_base_kernel(%arg0: i32, %arg1: memref<128x4xf32, #tpu.memory_space<vmem>>, %arg2: memref<4x32xbf16, #tpu.memory_space<vmem>>, %arg3: memref<1x32xf32, #tpu.memory_space<vmem>>, %arg4: memref<32x384xbf16, #tpu.memory_space<vmem>>, %arg5: memref<2x128x384xbf16, #tpu.memory_space<vmem>>, %arg6: memref<1x384xf32, #tpu.memory_space<vmem>>, %arg7: memref<1x128xf32, #tpu.memory_space<vmem>>, %arg8: memref<128x384xbf16, #tpu.memory_space<vmem>>, %arg9: memref<1x384xf32, #tpu.memory_space<vmem>>, %arg10: memref<1x128xf32, #tpu.memory_space<vmem>>, %arg11: memref<128x128xbf16, #tpu.memory_space<vmem>>, %arg12: memref<1x128xf32, #tpu.memory_space<vmem>>, %arg13: memref<16x128xf32, #tpu.memory_space<vmem>>, %arg14: memref<128x384xf32, #tpu.memory_space<vmem>>) attributes {dimension_semantics = [#tpu.dimension_semantics<parallel>], iteration_bounds = array<i64: 1>, scalar_prefetch = 0 : i64, scratch_operands = 1 : i64, tpu.core_type = #tpu.core_type<tc>, window_params = [{transform_indices = @transform_0, window_bounds = array<i64: 128, 4>}, {pipeline_mode = #tpu.pipeline_mode<synchronous>, transform_indices = @transform_1, window_bounds = array<i64: 4, 32>}, {pipeline_mode = #tpu.pipeline_mode<synchronous>, transform_indices = @transform_2, window_bounds = array<i64: 1, 32>}, {pipeline_mode = #tpu.pipeline_mode<synchronous>, transform_indices = @transform_3, window_bounds = array<i64: 32, 384>}, {pipeline_mode = #tpu.pipeline_mode<synchronous>, transform_indices = @transform_4, window_bounds = array<i64: 2, 128, 384>}, {pipeline_mode = #tpu.pipeline_mode<synchronous>, transform_indices = @transform_5, window_bounds = array<i64: 1, 384>}, {pipeline_mode = #tpu.pipeline_mode<synchronous>, transform_indices = @transform_6, window_bounds = array<i64: 1, 128>}, {pipeline_mode = #tpu.pipeline_mode<synchronous>, transform_indices = @transform_7, window_bounds = array<i64: 128, 384>}, {pipeline_mode = #tpu.pipeline_mode<synchronous>, transform_indices = @transform_8, window_bounds = array<i64: 1, 384>}, {pipeline_mode = #tpu.pipeline_mode<synchronous>, transform_indices = @transform_9, window_bounds = array<i64: 1, 128>}, {pipeline_mode = #tpu.pipeline_mode<synchronous>, transform_indices = @transform_10, window_bounds = array<i64: 128, 128>}, {pipeline_mode = #tpu.pipeline_mode<synchronous>, transform_indices = @transform_11, window_bounds = array<i64: 1, 128>}, {transform_indices = @transform_12, window_bounds = array<i64: 16, 128>}]} {
    %c0 = arith.constant 0 : index
    %c0_0 = arith.constant 0 : index
    %0 = vector.load %arg1[%c0, %c0_0] : memref<128x4xf32, #tpu.memory_space<vmem>>, vector<128x4xf32>
    %1 = arith.truncf %0 : vector<128x4xf32> to vector<128x4xbf16>
    %c0_1 = arith.constant 0 : index
    %c0_2 = arith.constant 0 : index
    %2 = vector.load %arg2[%c0_1, %c0_2] : memref<4x32xbf16, #tpu.memory_space<vmem>>, vector<4x32xbf16>
    %cst = arith.constant dense<0.000000e+00> : vector<128x32xf32>
    %3 = tpu.matmul %1, %2, %cst {dimension_numbers = #tpu.dot_dimension_numbers<[1], [0], [0], [1], [0, 0, 1, 1], [], []>} : vector<128x4xbf16>, vector<4x32xbf16>, vector<128x32xf32> -> vector<128x32xf32>
    %c0_3 = arith.constant 0 : index
    %c0_4 = arith.constant 0 : index
    %4 = vector.load %arg3[%c0_3, %c0_4] : memref<1x32xf32, #tpu.memory_space<vmem>>, vector<1x32xf32>
    %5 = vector.broadcast %4 : vector<1x32xf32> to vector<128x32xf32>
    %6 = arith.addf %3, %5 : vector<128x32xf32>
    %cst_5 = arith.constant 0.000000e+00 : f32
    %7 = vector.broadcast %cst_5 : f32 to vector<128x32xf32>
    %8 = arith.maximumf %6, %7 : vector<128x32xf32>
    %9 = arith.truncf %8 : vector<128x32xf32> to vector<128x32xbf16>
    %c0_6 = arith.constant 0 : index
    %c0_7 = arith.constant 0 : index
    %10 = vector.load %arg4[%c0_6, %c0_7] : memref<32x384xbf16, #tpu.memory_space<vmem>>, vector<32x384xbf16>
    %cst_8 = arith.constant dense<0.000000e+00> : vector<128x384xf32>
    %11 = tpu.matmul %9, %10, %cst_8 {dimension_numbers = #tpu.dot_dimension_numbers<[1], [0], [0], [1], [0, 0, 1, 1], [], []>} : vector<128x32xbf16>, vector<32x384xbf16>, vector<128x384xf32> -> vector<128x384xf32>
    %c0_9 = arith.constant 0 : index
    %c0_10 = arith.constant 0 : index
    %12 = vector.load %arg6[%c0_9, %c0_10] : memref<1x384xf32, #tpu.memory_space<vmem>>, vector<1x384xf32>
    %13 = vector.broadcast %12 : vector<1x384xf32> to vector<128x384xf32>
    %14 = arith.addf %11, %13 : vector<128x384xf32>
    %c0_11 = arith.constant 0 : index
    %c0_12 = arith.constant 0 : index
    %15 = vector.load %arg14[%c0_11, %c0_12] : memref<128x384xf32, #tpu.memory_space<vmem>>, vector<128x384xf32>
    tpu.vector_store %arg14[%c0_11, %c0_12], %14 {strides = array<i32>} : memref<128x384xf32, #tpu.memory_space<vmem>>, vector<128x384xf32>,
    %c0_13 = arith.constant 0 : index
    %c0_14 = arith.constant 0 : index
    %16 = vector.load %arg8[%c0_13, %c0_14] : memref<128x384xbf16, #tpu.memory_space<vmem>>, vector<128x384xbf16>
    %c0_15 = arith.constant 0 : index
    %c0_16 = arith.constant 0 : index
    %17 = vector.load %arg9[%c0_15, %c0_16] : memref<1x384xf32, #tpu.memory_space<vmem>>, vector<1x384xf32>
    %c0_17 = arith.constant 0 : index
    %c0_18 = arith.constant 0 : index
    %18 = vector.load %arg7[%c0_17, %c0_18] : memref<1x128xf32, #tpu.memory_space<vmem>>, vector<1x128xf32>
    %c0_19 = arith.constant 0 : index
    %c0_20 = arith.constant 0 : index
    %19 = vector.load %arg10[%c0_19, %c0_20] : memref<1x128xf32, #tpu.memory_space<vmem>>, vector<1x128xf32>
    %c0_21 = arith.constant 0 : index
    %c0_22 = arith.constant 0 : index
    %c0_23 = arith.constant 0 : index
    %20 = vector.load %arg5[%c0_21, %c0_22, %c0_23] : memref<2x128x384xbf16, #tpu.memory_space<vmem>>, vector<1x128x384xbf16>
    %21 = vector.shape_cast %20 : vector<1x128x384xbf16> to vector<128x384xbf16>
    %c1 = arith.constant 1 : index
    %c0_24 = arith.constant 0 : index
    %c0_25 = arith.constant 0 : index
    %22 = vector.load %arg5[%c1, %c0_24, %c0_25] : memref<2x128x384xbf16, #tpu.memory_space<vmem>>, vector<1x128x384xbf16>
    %23 = vector.shape_cast %22 : vector<1x128x384xbf16> to vector<128x384xbf16>
    %cst_26 = arith.constant 0.000000e+00 : f32
    %24 = vector.broadcast %cst_26 : f32 to vector<16x128xf32>
    %cst_27 = arith.constant 0.000000e+00 : f32
    %25 = vector.broadcast %cst_27 : f32 to vector<16x128xf32>
    %c0_i32 = arith.constant 0 : i32
    %c16_i32 = arith.constant 16 : i32
    %26 = arith.muli %c0_i32, %c16_i32 : i32
    %27 = tpu.assume_multiple %26, 16 : i32
    %28 = arith.index_cast %27 : i32 to index
    %c0_28 = arith.constant 0 : index
    %29 = vector.load %arg14[%28, %c0_28] : memref<128x384xf32, #tpu.memory_space<vmem>>, vector<16x384xf32>
    %30 = arith.truncf %25 : vector<16x128xf32> to vector<16x128xbf16>
    %cst_29 = arith.constant dense<0.000000e+00> : vector<16x384xf32>
    %31 = tpu.matmul %30, %23, %cst_29 {dimension_numbers = #tpu.dot_dimension_numbers<[1], [0], [0], [1], [0, 0, 1, 1], [], []>} : vector<16x128xbf16>, vector<128x384xbf16>, vector<16x384xf32> -> vector<16x384xf32>
    %32 = arith.truncf %24 : vector<16x128xf32> to vector<16x128xbf16>
    %cst_30 = arith.constant dense<0.000000e+00> : vector<16x384xf32>
    %33 = tpu.matmul %32, %21, %cst_30 {dimension_numbers = #tpu.dot_dimension_numbers<[1], [0], [0], [1], [0, 0, 1, 1], [], []>} : vector<16x128xbf16>, vector<128x384xbf16>, vector<16x384xf32> -> vector<16x384xf32>
    %34 = vector.extract_strided_slice %29 {offsets = [0, 0], sizes = [16, 128], strides = [1, 1]} : vector<16x384xf32> to vector<16x128xf32>
    %35 = vector.extract_strided_slice %29 {offsets = [0, 128], sizes = [16, 128], strides = [1, 1]} : vector<16x384xf32> to vector<16x128xf32>
    %36 = vector.extract_strided_slice %29 {offsets = [0, 256], sizes = [16, 128], strides = [1, 1]} : vector<16x384xf32> to vector<16x128xf32>
    %37 = vector.extract_strided_slice %33 {offsets = [0, 0], sizes = [16, 128], strides = [1, 1]} : vector<16x384xf32> to vector<16x128xf32>
    %38 = vector.extract_strided_slice %33 {offsets = [0, 128], sizes = [16, 128], strides = [1, 1]} : vector<16x384xf32> to vector<16x128xf32>
    %39 = vector.extract_strided_slice %33 {offsets = [0, 256], sizes = [16, 128], strides = [1, 1]} : vector<16x384xf32> to vector<16x128xf32>
    %40 = arith.addf %34, %37 : vector<16x128xf32>
    %41 = arith.negf %40 : vector<16x128xf32>
    %42 = math.exp %41 : vector<16x128xf32>
    %cst_31 = arith.constant 1.000000e+00 : f32
    %43 = vector.broadcast %cst_31 : f32 to vector<16x128xf32>
    %44 = arith.addf %43, %42 : vector<16x128xf32>
    %45 = arith.divf %43, %44 : vector<16x128xf32>
    %46 = arith.addf %35, %38 : vector<16x128xf32>
    %47 = arith.negf %46 : vector<16x128xf32>
    %48 = math.exp %47 : vector<16x128xf32>
    %cst_32 = arith.constant 1.000000e+00 : f32
    %49 = vector.broadcast %cst_32 : f32 to vector<16x128xf32>
    %50 = arith.addf %49, %48 : vector<16x128xf32>
    %51 = arith.divf %49, %50 : vector<16x128xf32>
    %52 = vector.broadcast %18 : vector<1x128xf32> to vector<16x128xf32>
    %53 = arith.addf %39, %52 : vector<16x128xf32>
    %54 = arith.mulf %45, %53 : vector<16x128xf32>
    %55 = arith.addf %36, %54 : vector<16x128xf32>
    %56 = math.tanh %55 : vector<16x128xf32>
    %cst_33 = arith.constant 1.000000e+00 : f32
    %57 = vector.broadcast %cst_33 : f32 to vector<16x128xf32>
    %58 = arith.subf %57, %51 : vector<16x128xf32>
    %59 = arith.mulf %58, %56 : vector<16x128xf32>
    %60 = arith.mulf %51, %24 : vector<16x128xf32>
    %61 = arith.addf %59, %60 : vector<16x128xf32>
    %62 = arith.truncf %61 : vector<16x128xf32> to vector<16x128xbf16>
    %cst_34 = arith.constant dense<0.000000e+00> : vector<16x384xf32>
    %63 = tpu.matmul %62, %16, %cst_34 {dimension_numbers = #tpu.dot_dimension_numbers<[1], [0], [0], [1], [0, 0, 1, 1], [], []>} : vector<16x128xbf16>, vector<128x384xbf16>, vector<16x384xf32> -> vector<16x384xf32>
    %64 = vector.broadcast %17 : vector<1x384xf32> to vector<16x384xf32>
    %65 = arith.addf %63, %64 : vector<16x384xf32>
    %66 = vector.extract_strided_slice %65 {offsets = [0, 0], sizes = [16, 128], strides = [1, 1]} : vector<16x384xf32> to vector<16x128xf32>
    %67 = vector.extract_strided_slice %65 {offsets = [0, 128], sizes = [16, 128], strides = [1, 1]} : vector<16x384xf32> to vector<16x128xf32>
    %68 = vector.extract_strided_slice %65 {offsets = [0, 256], sizes = [16, 128], strides = [1, 1]} : vector<16x384xf32> to vector<16x128xf32>
    %69 = vector.extract_strided_slice %31 {offsets = [0, 0], sizes = [16, 128], strides = [1, 1]} : vector<16x384xf32> to vector<16x128xf32>
    %70 = vector.extract_strided_slice %31 {offsets = [0, 128], sizes = [16, 128], strides = [1, 1]} : vector<16x384xf32> to vector<16x128xf32>
    %71 = vector.extract_strided_slice %31 {offsets = [0, 256], sizes = [16, 128], strides = [1, 1]} : vector<16x384xf32> to vector<16x128xf32>
    %72 = arith.addf %66, %69 : vector<16x128xf32>
    %73 = arith.negf %72 : vector<16x128xf32>
    %74 = math.exp %73 : vector<16x128xf32>
    %cst_35 = arith.constant 1.000000e+00 : f32
    %75 = vector.broadcast %cst_35 : f32 to vector<16x128xf32>
    %76 = arith.addf %75, %74 : vector<16x128xf32>
    %77 = arith.divf %75, %76 : vector<16x128xf32>
    %78 = arith.addf %67, %70 : vector<16x128xf32>
    %79 = arith.negf %78 : vector<16x128xf32>
    %80 = math.exp %79 : vector<16x128xf32>
    %cst_36 = arith.constant 1.000000e+00 : f32
    %81 = vector.broadcast %cst_36 : f32 to vector<16x128xf32>
    %82 = arith.addf %81, %80 : vector<16x128xf32>
    %83 = arith.divf %81, %82 : vector<16x128xf32>
    %84 = vector.broadcast %19 : vector<1x128xf32> to vector<16x128xf32>
    %85 = arith.addf %71, %84 : vector<16x128xf32>
    %86 = arith.mulf %77, %85 : vector<16x128xf32>
    %87 = arith.addf %68, %86 : vector<16x128xf32>
    %88 = math.tanh %87 : vector<16x128xf32>
    %cst_37 = arith.constant 1.000000e+00 : f32
    %89 = vector.broadcast %cst_37 : f32 to vector<16x128xf32>
    %90 = arith.subf %89, %83 : vector<16x128xf32>
    %91 = arith.mulf %90, %88 : vector<16x128xf32>
    %92 = arith.mulf %83, %25 : vector<16x128xf32>
    %93 = arith.addf %91, %92 : vector<16x128xf32>
    %c1_i32 = arith.constant 1 : i32
    %c16_i32_38 = arith.constant 16 : i32
    %94 = arith.muli %c1_i32, %c16_i32_38 : i32
    %95 = tpu.assume_multiple %94, 16 : i32
    %96 = arith.index_cast %95 : i32 to index
    %c0_39 = arith.constant 0 : index
    %97 = vector.load %arg14[%96, %c0_39] : memref<128x384xf32, #tpu.memory_space<vmem>>, vector<16x384xf32>
    %98 = arith.truncf %93 : vector<16x128xf32> to vector<16x128xbf16>
    %cst_40 = arith.constant dense<0.000000e+00> : vector<16x384xf32>
    %99 = tpu.matmul %98, %23, %cst_40 {dimension_numbers = #tpu.dot_dimension_numbers<[1], [0], [0], [1], [0, 0, 1, 1], [], []>} : vector<16x128xbf16>, vector<128x384xbf16>, vector<16x384xf32> -> vector<16x384xf32>
    %100 = arith.truncf %61 : vector<16x128xf32> to vector<16x128xbf16>
    %cst_41 = arith.constant dense<0.000000e+00> : vector<16x384xf32>
    %101 = tpu.matmul %100, %21, %cst_41 {dimension_numbers = #tpu.dot_dimension_numbers<[1], [0], [0], [1], [0, 0, 1, 1], [], []>} : vector<16x128xbf16>, vector<128x384xbf16>, vector<16x384xf32> -> vector<16x384xf32>
    %102 = vector.extract_strided_slice %97 {offsets = [0, 0], sizes = [16, 128], strides = [1, 1]} : vector<16x384xf32> to vector<16x128xf32>
    %103 = vector.extract_strided_slice %97 {offsets = [0, 128], sizes = [16, 128], strides = [1, 1]} : vector<16x384xf32> to vector<16x128xf32>
    %104 = vector.extract_strided_slice %97 {offsets = [0, 256], sizes = [16, 128], strides = [1, 1]} : vector<16x384xf32> to vector<16x128xf32>
    %105 = vector.extract_strided_slice %101 {offsets = [0, 0], sizes = [16, 128], strides = [1, 1]} : vector<16x384xf32> to vector<16x128xf32>
    %106 = vector.extract_strided_slice %101 {offsets = [0, 128], sizes = [16, 128], strides = [1, 1]} : vector<16x384xf32> to vector<16x128xf32>
    %107 = vector.extract_strided_slice %101 {offsets = [0, 256], sizes = [16, 128], strides = [1, 1]} : vector<16x384xf32> to vector<16x128xf32>
    %108 = arith.addf %102, %105 : vector<16x128xf32>
    %109 = arith.negf %108 : vector<16x128xf32>
    %110 = math.exp %109 : vector<16x128xf32>
    %cst_42 = arith.constant 1.000000e+00 : f32
    %111 = vector.broadcast %cst_42 : f32 to vector<16x128xf32>
    %112 = arith.addf %111, %110 : vector<16x128xf32>
    %113 = arith.divf %111, %112 : vector<16x128xf32>
    %114 = arith.addf %103, %106 : vector<16x128xf32>
    %115 = arith.negf %114 : vector<16x128xf32>
    %116 = math.exp %115 : vector<16x128xf32>
    %cst_43 = arith.constant 1.000000e+00 : f32
    %117 = vector.broadcast %cst_43 : f32 to vector<16x128xf32>
    %118 = arith.addf %117, %116 : vector<16x128xf32>
    %119 = arith.divf %117, %118 : vector<16x128xf32>
    %120 = vector.broadcast %18 : vector<1x128xf32> to vector<16x128xf32>
    %121 = arith.addf %107, %120 : vector<16x128xf32>
    %122 = arith.mulf %113, %121 : vector<16x128xf32>
    %123 = arith.addf %104, %122 : vector<16x128xf32>
    %124 = math.tanh %123 : vector<16x128xf32>
    %cst_44 = arith.constant 1.000000e+00 : f32
    %125 = vector.broadcast %cst_44 : f32 to vector<16x128xf32>
    %126 = arith.subf %125, %119 : vector<16x128xf32>
    %127 = arith.mulf %126, %124 : vector<16x128xf32>
    %128 = arith.mulf %119, %61 : vector<16x128xf32>
    %129 = arith.addf %127, %128 : vector<16x128xf32>
    %130 = arith.truncf %129 : vector<16x128xf32> to vector<16x128xbf16>
    %cst_45 = arith.constant dense<0.000000e+00> : vector<16x384xf32>
    %131 = tpu.matmul %130, %16, %cst_45 {dimension_numbers = #tpu.dot_dimension_numbers<[1], [0], [0], [1], [0, 0, 1, 1], [], []>} : vector<16x128xbf16>, vector<128x384xbf16>, vector<16x384xf32> -> vector<16x384xf32>
    %132 = vector.broadcast %17 : vector<1x384xf32> to vector<16x384xf32>
    %133 = arith.addf %131, %132 : vector<16x384xf32>
    %134 = vector.extract_strided_slice %133 {offsets = [0, 0], sizes = [16, 128], strides = [1, 1]} : vector<16x384xf32> to vector<16x128xf32>
    %135 = vector.extract_strided_slice %133 {offsets = [0, 128], sizes = [16, 128], strides = [1, 1]} : vector<16x384xf32> to vector<16x128xf32>
    %136 = vector.extract_strided_slice %133 {offsets = [0, 256], sizes = [16, 128], strides = [1, 1]} : vector<16x384xf32> to vector<16x128xf32>
    %137 = vector.extract_strided_slice %99 {offsets = [0, 0], sizes = [16, 128], strides = [1, 1]} : vector<16x384xf32> to vector<16x128xf32>
    %138 = vector.extract_strided_slice %99 {offsets = [0, 128], sizes = [16, 128], strides = [1, 1]} : vector<16x384xf32> to vector<16x128xf32>
    %139 = vector.extract_strided_slice %99 {offsets = [0, 256], sizes = [16, 128], strides = [1, 1]} : vector<16x384xf32> to vector<16x128xf32>
    %140 = arith.addf %134, %137 : vector<16x128xf32>
    %141 = arith.negf %140 : vector<16x128xf32>
    %142 = math.exp %141 : vector<16x128xf32>
    %cst_46 = arith.constant 1.000000e+00 : f32
    %143 = vector.broadcast %cst_46 : f32 to vector<16x128xf32>
    %144 = arith.addf %143, %142 : vector<16x128xf32>
    %145 = arith.divf %143, %144 : vector<16x128xf32>
    %146 = arith.addf %135, %138 : vector<16x128xf32>
    %147 = arith.negf %146 : vector<16x128xf32>
    %148 = math.exp %147 : vector<16x128xf32>
    %cst_47 = arith.constant 1.000000e+00 : f32
    %149 = vector.broadcast %cst_47 : f32 to vector<16x128xf32>
    %150 = arith.addf %149, %148 : vector<16x128xf32>
    %151 = arith.divf %149, %150 : vector<16x128xf32>
    %152 = vector.broadcast %19 : vector<1x128xf32> to vector<16x128xf32>
    %153 = arith.addf %139, %152 : vector<16x128xf32>
    %154 = arith.mulf %145, %153 : vector<16x128xf32>
    %155 = arith.addf %136, %154 : vector<16x128xf32>
    %156 = math.tanh %155 : vector<16x128xf32>
    %cst_48 = arith.constant 1.000000e+00 : f32
    %157 = vector.broadcast %cst_48 : f32 to vector<16x128xf32>
    %158 = arith.subf %157, %151 : vector<16x128xf32>
    %159 = arith.mulf %158, %156 : vector<16x128xf32>
    %160 = arith.mulf %151, %93 : vector<16x128xf32>
    %161 = arith.addf %159, %160 : vector<16x128xf32>
    %c2_i32 = arith.constant 2 : i32
    %c16_i32_49 = arith.constant 16 : i32
    %162 = arith.muli %c2_i32, %c16_i32_49 : i32
    %163 = tpu.assume_multiple %162, 16 : i32
    %164 = arith.index_cast %163 : i32 to index
    %c0_50 = arith.constant 0 : index
    %165 = vector.load %arg14[%164, %c0_50] : memref<128x384xf32, #tpu.memory_space<vmem>>, vector<16x384xf32>
    %166 = arith.truncf %161 : vector<16x128xf32> to vector<16x128xbf16>
    %cst_51 = arith.constant dense<0.000000e+00> : vector<16x384xf32>
    %167 = tpu.matmul %166, %23, %cst_51 {dimension_numbers = #tpu.dot_dimension_numbers<[1], [0], [0], [1], [0, 0, 1, 1], [], []>} : vector<16x128xbf16>, vector<128x384xbf16>, vector<16x384xf32> -> vector<16x384xf32>
    %168 = arith.truncf %129 : vector<16x128xf32> to vector<16x128xbf16>
    %cst_52 = arith.constant dense<0.000000e+00> : vector<16x384xf32>
    %169 = tpu.matmul %168, %21, %cst_52 {dimension_numbers = #tpu.dot_dimension_numbers<[1], [0], [0], [1], [0, 0, 1, 1], [], []>} : vector<16x128xbf16>, vector<128x384xbf16>, vector<16x384xf32> -> vector<16x384xf32>
    %170 = vector.extract_strided_slice %165 {offsets = [0, 0], sizes = [16, 128], strides = [1, 1]} : vector<16x384xf32> to vector<16x128xf32>
    %171 = vector.extract_strided_slice %165 {offsets = [0, 128], sizes = [16, 128], strides = [1, 1]} : vector<16x384xf32> to vector<16x128xf32>
    %172 = vector.extract_strided_slice %165 {offsets = [0, 256], sizes = [16, 128], strides = [1, 1]} : vector<16x384xf32> to vector<16x128xf32>
    %173 = vector.extract_strided_slice %169 {offsets = [0, 0], sizes = [16, 128], strides = [1, 1]} : vector<16x384xf32> to vector<16x128xf32>
    %174 = vector.extract_strided_slice %169 {offsets = [0, 128], sizes = [16, 128], strides = [1, 1]} : vector<16x384xf32> to vector<16x128xf32>
    %175 = vector.extract_strided_slice %169 {offsets = [0, 256], sizes = [16, 128], strides = [1, 1]} : vector<16x384xf32> to vector<16x128xf32>
    %176 = arith.addf %170, %173 : vector<16x128xf32>
    %177 = arith.negf %176 : vector<16x128xf32>
    %178 = math.exp %177 : vector<16x128xf32>
    %cst_53 = arith.constant 1.000000e+00 : f32
    %179 = vector.broadcast %cst_53 : f32 to vector<16x128xf32>
    %180 = arith.addf %179, %178 : vector<16x128xf32>
    %181 = arith.divf %179, %180 : vector<16x128xf32>
    %182 = arith.addf %171, %174 : vector<16x128xf32>
    %183 = arith.negf %182 : vector<16x128xf32>
    %184 = math.exp %183 : vector<16x128xf32>
    %cst_54 = arith.constant 1.000000e+00 : f32
    %185 = vector.broadcast %cst_54 : f32 to vector<16x128xf32>
    %186 = arith.addf %185, %184 : vector<16x128xf32>
    %187 = arith.divf %185, %186 : vector<16x128xf32>
    %188 = vector.broadcast %18 : vector<1x128xf32> to vector<16x128xf32>
    %189 = arith.addf %175, %188 : vector<16x128xf32>
    %190 = arith.mulf %181, %189 : vector<16x128xf32>
    %191 = arith.addf %172, %190 : vector<16x128xf32>
    %192 = math.tanh %191 : vector<16x128xf32>
    %cst_55 = arith.constant 1.000000e+00 : f32
    %193 = vector.broadcast %cst_55 : f32 to vector<16x128xf32>
    %194 = arith.subf %193, %187 : vector<16x128xf32>
    %195 = arith.mulf %194, %192 : vector<16x128xf32>
    %196 = arith.mulf %187, %129 : vector<16x128xf32>
    %197 = arith.addf %195, %196 : vector<16x128xf32>
    %198 = arith.truncf %197 : vector<16x128xf32> to vector<16x128xbf16>
    %cst_56 = arith.constant dense<0.000000e+00> : vector<16x384xf32>
    %199 = tpu.matmul %198, %16, %cst_56 {dimension_numbers = #tpu.dot_dimension_numbers<[1], [0], [0], [1], [0, 0, 1, 1], [], []>} : vector<16x128xbf16>, vector<128x384xbf16>, vector<16x384xf32> -> vector<16x384xf32>
    %200 = vector.broadcast %17 : vector<1x384xf32> to vector<16x384xf32>
    %201 = arith.addf %199, %200 : vector<16x384xf32>
    %202 = vector.extract_strided_slice %201 {offsets = [0, 0], sizes = [16, 128], strides = [1, 1]} : vector<16x384xf32> to vector<16x128xf32>
    %203 = vector.extract_strided_slice %201 {offsets = [0, 128], sizes = [16, 128], strides = [1, 1]} : vector<16x384xf32> to vector<16x128xf32>
    %204 = vector.extract_strided_slice %201 {offsets = [0, 256], sizes = [16, 128], strides = [1, 1]} : vector<16x384xf32> to vector<16x128xf32>
    %205 = vector.extract_strided_slice %167 {offsets = [0, 0], sizes = [16, 128], strides = [1, 1]} : vector<16x384xf32> to vector<16x128xf32>
    %206 = vector.extract_strided_slice %167 {offsets = [0, 128], sizes = [16, 128], strides = [1, 1]} : vector<16x384xf32> to vector<16x128xf32>
    %207 = vector.extract_strided_slice %167 {offsets = [0, 256], sizes = [16, 128], strides = [1, 1]} : vector<16x384xf32> to vector<16x128xf32>
    %208 = arith.addf %202, %205 : vector<16x128xf32>
    %209 = arith.negf %208 : vector<16x128xf32>
    %210 = math.exp %209 : vector<16x128xf32>
    %cst_57 = arith.constant 1.000000e+00 : f32
    %211 = vector.broadcast %cst_57 : f32 to vector<16x128xf32>
    %212 = arith.addf %211, %210 : vector<16x128xf32>
    %213 = arith.divf %211, %212 : vector<16x128xf32>
    %214 = arith.addf %203, %206 : vector<16x128xf32>
    %215 = arith.negf %214 : vector<16x128xf32>
    %216 = math.exp %215 : vector<16x128xf32>
    %cst_58 = arith.constant 1.000000e+00 : f32
    %217 = vector.broadcast %cst_58 : f32 to vector<16x128xf32>
    %218 = arith.addf %217, %216 : vector<16x128xf32>
    %219 = arith.divf %217, %218 : vector<16x128xf32>
    %220 = vector.broadcast %19 : vector<1x128xf32> to vector<16x128xf32>
    %221 = arith.addf %207, %220 : vector<16x128xf32>
    %222 = arith.mulf %213, %221 : vector<16x128xf32>
    %223 = arith.addf %204, %222 : vector<16x128xf32>
    %224 = math.tanh %223 : vector<16x128xf32>
    %cst_59 = arith.constant 1.000000e+00 : f32
    %225 = vector.broadcast %cst_59 : f32 to vector<16x128xf32>
    %226 = arith.subf %225, %219 : vector<16x128xf32>
    %227 = arith.mulf %226, %224 : vector<16x128xf32>
    %228 = arith.mulf %219, %161 : vector<16x128xf32>
    %229 = arith.addf %227, %228 : vector<16x128xf32>
    %c3_i32 = arith.constant 3 : i32
    %c16_i32_60 = arith.constant 16 : i32
    %230 = arith.muli %c3_i32, %c16_i32_60 : i32
    %231 = tpu.assume_multiple %230, 16 : i32
    %232 = arith.index_cast %231 : i32 to index
    %c0_61 = arith.constant 0 : index
    %233 = vector.load %arg14[%232, %c0_61] : memref<128x384xf32, #tpu.memory_space<vmem>>, vector<16x384xf32>
    %234 = arith.truncf %229 : vector<16x128xf32> to vector<16x128xbf16>
    %cst_62 = arith.constant dense<0.000000e+00> : vector<16x384xf32>
    %235 = tpu.matmul %234, %23, %cst_62 {dimension_numbers = #tpu.dot_dimension_numbers<[1], [0], [0], [1], [0, 0, 1, 1], [], []>} : vector<16x128xbf16>, vector<128x384xbf16>, vector<16x384xf32> -> vector<16x384xf32>
    %236 = arith.truncf %197 : vector<16x128xf32> to vector<16x128xbf16>
    %cst_63 = arith.constant dense<0.000000e+00> : vector<16x384xf32>
    %237 = tpu.matmul %236, %21, %cst_63 {dimension_numbers = #tpu.dot_dimension_numbers<[1], [0], [0], [1], [0, 0, 1, 1], [], []>} : vector<16x128xbf16>, vector<128x384xbf16>, vector<16x384xf32> -> vector<16x384xf32>
    %238 = vector.extract_strided_slice %233 {offsets = [0, 0], sizes = [16, 128], strides = [1, 1]} : vector<16x384xf32> to vector<16x128xf32>
    %239 = vector.extract_strided_slice %233 {offsets = [0, 128], sizes = [16, 128], strides = [1, 1]} : vector<16x384xf32> to vector<16x128xf32>
    %240 = vector.extract_strided_slice %233 {offsets = [0, 256], sizes = [16, 128], strides = [1, 1]} : vector<16x384xf32> to vector<16x128xf32>
    %241 = vector.extract_strided_slice %237 {offsets = [0, 0], sizes = [16, 128], strides = [1, 1]} : vector<16x384xf32> to vector<16x128xf32>
    %242 = vector.extract_strided_slice %237 {offsets = [0, 128], sizes = [16, 128], strides = [1, 1]} : vector<16x384xf32> to vector<16x128xf32>
    %243 = vector.extract_strided_slice %237 {offsets = [0, 256], sizes = [16, 128], strides = [1, 1]} : vector<16x384xf32> to vector<16x128xf32>
    %244 = arith.addf %238, %241 : vector<16x128xf32>
    %245 = arith.negf %244 : vector<16x128xf32>
    %246 = math.exp %245 : vector<16x128xf32>
    %cst_64 = arith.constant 1.000000e+00 : f32
    %247 = vector.broadcast %cst_64 : f32 to vector<16x128xf32>
    %248 = arith.addf %247, %246 : vector<16x128xf32>
    %249 = arith.divf %247, %248 : vector<16x128xf32>
    %250 = arith.addf %239, %242 : vector<16x128xf32>
    %251 = arith.negf %250 : vector<16x128xf32>
    %252 = math.exp %251 : vector<16x128xf32>
    %cst_65 = arith.constant 1.000000e+00 : f32
    %253 = vector.broadcast %cst_65 : f32 to vector<16x128xf32>
    %254 = arith.addf %253, %252 : vector<16x128xf32>
    %255 = arith.divf %253, %254 : vector<16x128xf32>
    %256 = vector.broadcast %18 : vector<1x128xf32> to vector<16x128xf32>
    %257 = arith.addf %243, %256 : vector<16x128xf32>
    %258 = arith.mulf %249, %257 : vector<16x128xf32>
    %259 = arith.addf %240, %258 : vector<16x128xf32>
    %260 = math.tanh %259 : vector<16x128xf32>
    %cst_66 = arith.constant 1.000000e+00 : f32
    %261 = vector.broadcast %cst_66 : f32 to vector<16x128xf32>
    %262 = arith.subf %261, %255 : vector<16x128xf32>
    %263 = arith.mulf %262, %260 : vector<16x128xf32>
    %264 = arith.mulf %255, %197 : vector<16x128xf32>
    %265 = arith.addf %263, %264 : vector<16x128xf32>
    %266 = arith.truncf %265 : vector<16x128xf32> to vector<16x128xbf16>
    %cst_67 = arith.constant dense<0.000000e+00> : vector<16x384xf32>
    %267 = tpu.matmul %266, %16, %cst_67 {dimension_numbers = #tpu.dot_dimension_numbers<[1], [0], [0], [1], [0, 0, 1, 1], [], []>} : vector<16x128xbf16>, vector<128x384xbf16>, vector<16x384xf32> -> vector<16x384xf32>
    %268 = vector.broadcast %17 : vector<1x384xf32> to vector<16x384xf32>
    %269 = arith.addf %267, %268 : vector<16x384xf32>
    %270 = vector.extract_strided_slice %269 {offsets = [0, 0], sizes = [16, 128], strides = [1, 1]} : vector<16x384xf32> to vector<16x128xf32>
    %271 = vector.extract_strided_slice %269 {offsets = [0, 128], sizes = [16, 128], strides = [1, 1]} : vector<16x384xf32> to vector<16x128xf32>
    %272 = vector.extract_strided_slice %269 {offsets = [0, 256], sizes = [16, 128], strides = [1, 1]} : vector<16x384xf32> to vector<16x128xf32>
    %273 = vector.extract_strided_slice %235 {offsets = [0, 0], sizes = [16, 128], strides = [1, 1]} : vector<16x384xf32> to vector<16x128xf32>
    %274 = vector.extract_strided_slice %235 {offsets = [0, 128], sizes = [16, 128], strides = [1, 1]} : vector<16x384xf32> to vector<16x128xf32>
    %275 = vector.extract_strided_slice %235 {offsets = [0, 256], sizes = [16, 128], strides = [1, 1]} : vector<16x384xf32> to vector<16x128xf32>
    %276 = arith.addf %270, %273 : vector<16x128xf32>
    %277 = arith.negf %276 : vector<16x128xf32>
    %278 = math.exp %277 : vector<16x128xf32>
    %cst_68 = arith.constant 1.000000e+00 : f32
    %279 = vector.broadcast %cst_68 : f32 to vector<16x128xf32>
    %280 = arith.addf %279, %278 : vector<16x128xf32>
    %281 = arith.divf %279, %280 : vector<16x128xf32>
    %282 = arith.addf %271, %274 : vector<16x128xf32>
    %283 = arith.negf %282 : vector<16x128xf32>
    %284 = math.exp %283 : vector<16x128xf32>
    %cst_69 = arith.constant 1.000000e+00 : f32
    %285 = vector.broadcast %cst_69 : f32 to vector<16x128xf32>
    %286 = arith.addf %285, %284 : vector<16x128xf32>
    %287 = arith.divf %285, %286 : vector<16x128xf32>
    %288 = vector.broadcast %19 : vector<1x128xf32> to vector<16x128xf32>
    %289 = arith.addf %275, %288 : vector<16x128xf32>
    %290 = arith.mulf %281, %289 : vector<16x128xf32>
    %291 = arith.addf %272, %290 : vector<16x128xf32>
    %292 = math.tanh %291 : vector<16x128xf32>
    %cst_70 = arith.constant 1.000000e+00 : f32
    %293 = vector.broadcast %cst_70 : f32 to vector<16x128xf32>
    %294 = arith.subf %293, %287 : vector<16x128xf32>
    %295 = arith.mulf %294, %292 : vector<16x128xf32>
    %296 = arith.mulf %287, %229 : vector<16x128xf32>
    %297 = arith.addf %295, %296 : vector<16x128xf32>
    %c4_i32 = arith.constant 4 : i32
    %c16_i32_71 = arith.constant 16 : i32
    %298 = arith.muli %c4_i32, %c16_i32_71 : i32
    %299 = tpu.assume_multiple %298, 16 : i32
    %300 = arith.index_cast %299 : i32 to index
    %c0_72 = arith.constant 0 : index
    %301 = vector.load %arg14[%300, %c0_72] : memref<128x384xf32, #tpu.memory_space<vmem>>, vector<16x384xf32>
    %302 = arith.truncf %297 : vector<16x128xf32> to vector<16x128xbf16>
    %cst_73 = arith.constant dense<0.000000e+00> : vector<16x384xf32>
    %303 = tpu.matmul %302, %23, %cst_73 {dimension_numbers = #tpu.dot_dimension_numbers<[1], [0], [0], [1], [0, 0, 1, 1], [], []>} : vector<16x128xbf16>, vector<128x384xbf16>, vector<16x384xf32> -> vector<16x384xf32>
    %304 = arith.truncf %265 : vector<16x128xf32> to vector<16x128xbf16>
    %cst_74 = arith.constant dense<0.000000e+00> : vector<16x384xf32>
    %305 = tpu.matmul %304, %21, %cst_74 {dimension_numbers = #tpu.dot_dimension_numbers<[1], [0], [0], [1], [0, 0, 1, 1], [], []>} : vector<16x128xbf16>, vector<128x384xbf16>, vector<16x384xf32> -> vector<16x384xf32>
    %306 = vector.extract_strided_slice %301 {offsets = [0, 0], sizes = [16, 128], strides = [1, 1]} : vector<16x384xf32> to vector<16x128xf32>
    %307 = vector.extract_strided_slice %301 {offsets = [0, 128], sizes = [16, 128], strides = [1, 1]} : vector<16x384xf32> to vector<16x128xf32>
    %308 = vector.extract_strided_slice %301 {offsets = [0, 256], sizes = [16, 128], strides = [1, 1]} : vector<16x384xf32> to vector<16x128xf32>
    %309 = vector.extract_strided_slice %305 {offsets = [0, 0], sizes = [16, 128], strides = [1, 1]} : vector<16x384xf32> to vector<16x128xf32>
    %310 = vector.extract_strided_slice %305 {offsets = [0, 128], sizes = [16, 128], strides = [1, 1]} : vector<16x384xf32> to vector<16x128xf32>
    %311 = vector.extract_strided_slice %305 {offsets = [0, 256], sizes = [16, 128], strides = [1, 1]} : vector<16x384xf32> to vector<16x128xf32>
    %312 = arith.addf %306, %309 : vector<16x128xf32>
    %313 = arith.negf %312 : vector<16x128xf32>
    %314 = math.exp %313 : vector<16x128xf32>
    %cst_75 = arith.constant 1.000000e+00 : f32
    %315 = vector.broadcast %cst_75 : f32 to vector<16x128xf32>
    %316 = arith.addf %315, %314 : vector<16x128xf32>
    %317 = arith.divf %315, %316 : vector<16x128xf32>
    %318 = arith.addf %307, %310 : vector<16x128xf32>
    %319 = arith.negf %318 : vector<16x128xf32>
    %320 = math.exp %319 : vector<16x128xf32>
    %cst_76 = arith.constant 1.000000e+00 : f32
    %321 = vector.broadcast %cst_76 : f32 to vector<16x128xf32>
    %322 = arith.addf %321, %320 : vector<16x128xf32>
    %323 = arith.divf %321, %322 : vector<16x128xf32>
    %324 = vector.broadcast %18 : vector<1x128xf32> to vector<16x128xf32>
    %325 = arith.addf %311, %324 : vector<16x128xf32>
    %326 = arith.mulf %317, %325 : vector<16x128xf32>
    %327 = arith.addf %308, %326 : vector<16x128xf32>
    %328 = math.tanh %327 : vector<16x128xf32>
    %cst_77 = arith.constant 1.000000e+00 : f32
    %329 = vector.broadcast %cst_77 : f32 to vector<16x128xf32>
    %330 = arith.subf %329, %323 : vector<16x128xf32>
    %331 = arith.mulf %330, %328 : vector<16x128xf32>
    %332 = arith.mulf %323, %265 : vector<16x128xf32>
    %333 = arith.addf %331, %332 : vector<16x128xf32>
    %334 = arith.truncf %333 : vector<16x128xf32> to vector<16x128xbf16>
    %cst_78 = arith.constant dense<0.000000e+00> : vector<16x384xf32>
    %335 = tpu.matmul %334, %16, %cst_78 {dimension_numbers = #tpu.dot_dimension_numbers<[1], [0], [0], [1], [0, 0, 1, 1], [], []>} : vector<16x128xbf16>, vector<128x384xbf16>, vector<16x384xf32> -> vector<16x384xf32>
    %336 = vector.broadcast %17 : vector<1x384xf32> to vector<16x384xf32>
    %337 = arith.addf %335, %336 : vector<16x384xf32>
    %338 = vector.extract_strided_slice %337 {offsets = [0, 0], sizes = [16, 128], strides = [1, 1]} : vector<16x384xf32> to vector<16x128xf32>
    %339 = vector.extract_strided_slice %337 {offsets = [0, 128], sizes = [16, 128], strides = [1, 1]} : vector<16x384xf32> to vector<16x128xf32>
    %340 = vector.extract_strided_slice %337 {offsets = [0, 256], sizes = [16, 128], strides = [1, 1]} : vector<16x384xf32> to vector<16x128xf32>
    %341 = vector.extract_strided_slice %303 {offsets = [0, 0], sizes = [16, 128], strides = [1, 1]} : vector<16x384xf32> to vector<16x128xf32>
    %342 = vector.extract_strided_slice %303 {offsets = [0, 128], sizes = [16, 128], strides = [1, 1]} : vector<16x384xf32> to vector<16x128xf32>
    %343 = vector.extract_strided_slice %303 {offsets = [0, 256], sizes = [16, 128], strides = [1, 1]} : vector<16x384xf32> to vector<16x128xf32>
    %344 = arith.addf %338, %341 : vector<16x128xf32>
    %345 = arith.negf %344 : vector<16x128xf32>
    %346 = math.exp %345 : vector<16x128xf32>
    %cst_79 = arith.constant 1.000000e+00 : f32
    %347 = vector.broadcast %cst_79 : f32 to vector<16x128xf32>
    %348 = arith.addf %347, %346 : vector<16x128xf32>
    %349 = arith.divf %347, %348 : vector<16x128xf32>
    %350 = arith.addf %339, %342 : vector<16x128xf32>
    %351 = arith.negf %350 : vector<16x128xf32>
    %352 = math.exp %351 : vector<16x128xf32>
    %cst_80 = arith.constant 1.000000e+00 : f32
    %353 = vector.broadcast %cst_80 : f32 to vector<16x128xf32>
    %354 = arith.addf %353, %352 : vector<16x128xf32>
    %355 = arith.divf %353, %354 : vector<16x128xf32>
    %356 = vector.broadcast %19 : vector<1x128xf32> to vector<16x128xf32>
    %357 = arith.addf %343, %356 : vector<16x128xf32>
    %358 = arith.mulf %349, %357 : vector<16x128xf32>
    %359 = arith.addf %340, %358 : vector<16x128xf32>
    %360 = math.tanh %359 : vector<16x128xf32>
    %cst_81 = arith.constant 1.000000e+00 : f32
    %361 = vector.broadcast %cst_81 : f32 to vector<16x128xf32>
    %362 = arith.subf %361, %355 : vector<16x128xf32>
    %363 = arith.mulf %362, %360 : vector<16x128xf32>
    %364 = arith.mulf %355, %297 : vector<16x128xf32>
    %365 = arith.addf %363, %364 : vector<16x128xf32>
    %c5_i32 = arith.constant 5 : i32
    %c16_i32_82 = arith.constant 16 : i32
    %366 = arith.muli %c5_i32, %c16_i32_82 : i32
    %367 = tpu.assume_multiple %366, 16 : i32
    %368 = arith.index_cast %367 : i32 to index
    %c0_83 = arith.constant 0 : index
    %369 = vector.load %arg14[%368, %c0_83] : memref<128x384xf32, #tpu.memory_space<vmem>>, vector<16x384xf32>
    %370 = arith.truncf %365 : vector<16x128xf32> to vector<16x128xbf16>
    %cst_84 = arith.constant dense<0.000000e+00> : vector<16x384xf32>
    %371 = tpu.matmul %370, %23, %cst_84 {dimension_numbers = #tpu.dot_dimension_numbers<[1], [0], [0], [1], [0, 0, 1, 1], [], []>} : vector<16x128xbf16>, vector<128x384xbf16>, vector<16x384xf32> -> vector<16x384xf32>
    %372 = arith.truncf %333 : vector<16x128xf32> to vector<16x128xbf16>
    %cst_85 = arith.constant dense<0.000000e+00> : vector<16x384xf32>
    %373 = tpu.matmul %372, %21, %cst_85 {dimension_numbers = #tpu.dot_dimension_numbers<[1], [0], [0], [1], [0, 0, 1, 1], [], []>} : vector<16x128xbf16>, vector<128x384xbf16>, vector<16x384xf32> -> vector<16x384xf32>
    %374 = vector.extract_strided_slice %369 {offsets = [0, 0], sizes = [16, 128], strides = [1, 1]} : vector<16x384xf32> to vector<16x128xf32>
    %375 = vector.extract_strided_slice %369 {offsets = [0, 128], sizes = [16, 128], strides = [1, 1]} : vector<16x384xf32> to vector<16x128xf32>
    %376 = vector.extract_strided_slice %369 {offsets = [0, 256], sizes = [16, 128], strides = [1, 1]} : vector<16x384xf32> to vector<16x128xf32>
    %377 = vector.extract_strided_slice %373 {offsets = [0, 0], sizes = [16, 128], strides = [1, 1]} : vector<16x384xf32> to vector<16x128xf32>
    %378 = vector.extract_strided_slice %373 {offsets = [0, 128], sizes = [16, 128], strides = [1, 1]} : vector<16x384xf32> to vector<16x128xf32>
    %379 = vector.extract_strided_slice %373 {offsets = [0, 256], sizes = [16, 128], strides = [1, 1]} : vector<16x384xf32> to vector<16x128xf32>
    %380 = arith.addf %374, %377 : vector<16x128xf32>
    %381 = arith.negf %380 : vector<16x128xf32>
    %382 = math.exp %381 : vector<16x128xf32>
    %cst_86 = arith.constant 1.000000e+00 : f32
    %383 = vector.broadcast %cst_86 : f32 to vector<16x128xf32>
    %384 = arith.addf %383, %382 : vector<16x128xf32>
    %385 = arith.divf %383, %384 : vector<16x128xf32>
    %386 = arith.addf %375, %378 : vector<16x128xf32>
    %387 = arith.negf %386 : vector<16x128xf32>
    %388 = math.exp %387 : vector<16x128xf32>
    %cst_87 = arith.constant 1.000000e+00 : f32
    %389 = vector.broadcast %cst_87 : f32 to vector<16x128xf32>
    %390 = arith.addf %389, %388 : vector<16x128xf32>
    %391 = arith.divf %389, %390 : vector<16x128xf32>
    %392 = vector.broadcast %18 : vector<1x128xf32> to vector<16x128xf32>
    %393 = arith.addf %379, %392 : vector<16x128xf32>
    %394 = arith.mulf %385, %393 : vector<16x128xf32>
    %395 = arith.addf %376, %394 : vector<16x128xf32>
    %396 = math.tanh %395 : vector<16x128xf32>
    %cst_88 = arith.constant 1.000000e+00 : f32
    %397 = vector.broadcast %cst_88 : f32 to vector<16x128xf32>
    %398 = arith.subf %397, %391 : vector<16x128xf32>
    %399 = arith.mulf %398, %396 : vector<16x128xf32>
    %400 = arith.mulf %391, %333 : vector<16x128xf32>
    %401 = arith.addf %399, %400 : vector<16x128xf32>
    %402 = arith.truncf %401 : vector<16x128xf32> to vector<16x128xbf16>
    %cst_89 = arith.constant dense<0.000000e+00> : vector<16x384xf32>
    %403 = tpu.matmul %402, %16, %cst_89 {dimension_numbers = #tpu.dot_dimension_numbers<[1], [0], [0], [1], [0, 0, 1, 1], [], []>} : vector<16x128xbf16>, vector<128x384xbf16>, vector<16x384xf32> -> vector<16x384xf32>
    %404 = vector.broadcast %17 : vector<1x384xf32> to vector<16x384xf32>
    %405 = arith.addf %403, %404 : vector<16x384xf32>
    %406 = vector.extract_strided_slice %405 {offsets = [0, 0], sizes = [16, 128], strides = [1, 1]} : vector<16x384xf32> to vector<16x128xf32>
    %407 = vector.extract_strided_slice %405 {offsets = [0, 128], sizes = [16, 128], strides = [1, 1]} : vector<16x384xf32> to vector<16x128xf32>
    %408 = vector.extract_strided_slice %405 {offsets = [0, 256], sizes = [16, 128], strides = [1, 1]} : vector<16x384xf32> to vector<16x128xf32>
    %409 = vector.extract_strided_slice %371 {offsets = [0, 0], sizes = [16, 128], strides = [1, 1]} : vector<16x384xf32> to vector<16x128xf32>
    %410 = vector.extract_strided_slice %371 {offsets = [0, 128], sizes = [16, 128], strides = [1, 1]} : vector<16x384xf32> to vector<16x128xf32>
    %411 = vector.extract_strided_slice %371 {offsets = [0, 256], sizes = [16, 128], strides = [1, 1]} : vector<16x384xf32> to vector<16x128xf32>
    %412 = arith.addf %406, %409 : vector<16x128xf32>
    %413 = arith.negf %412 : vector<16x128xf32>
    %414 = math.exp %413 : vector<16x128xf32>
    %cst_90 = arith.constant 1.000000e+00 : f32
    %415 = vector.broadcast %cst_90 : f32 to vector<16x128xf32>
    %416 = arith.addf %415, %414 : vector<16x128xf32>
    %417 = arith.divf %415, %416 : vector<16x128xf32>
    %418 = arith.addf %407, %410 : vector<16x128xf32>
    %419 = arith.negf %418 : vector<16x128xf32>
    %420 = math.exp %419 : vector<16x128xf32>
    %cst_91 = arith.constant 1.000000e+00 : f32
    %421 = vector.broadcast %cst_91 : f32 to vector<16x128xf32>
    %422 = arith.addf %421, %420 : vector<16x128xf32>
    %423 = arith.divf %421, %422 : vector<16x128xf32>
    %424 = vector.broadcast %19 : vector<1x128xf32> to vector<16x128xf32>
    %425 = arith.addf %411, %424 : vector<16x128xf32>
    %426 = arith.mulf %417, %425 : vector<16x128xf32>
    %427 = arith.addf %408, %426 : vector<16x128xf32>
    %428 = math.tanh %427 : vector<16x128xf32>
    %cst_92 = arith.constant 1.000000e+00 : f32
    %429 = vector.broadcast %cst_92 : f32 to vector<16x128xf32>
    %430 = arith.subf %429, %423 : vector<16x128xf32>
    %431 = arith.mulf %430, %428 : vector<16x128xf32>
    %432 = arith.mulf %423, %365 : vector<16x128xf32>
    %433 = arith.addf %431, %432 : vector<16x128xf32>
    %c6_i32 = arith.constant 6 : i32
    %c16_i32_93 = arith.constant 16 : i32
    %434 = arith.muli %c6_i32, %c16_i32_93 : i32
    %435 = tpu.assume_multiple %434, 16 : i32
    %436 = arith.index_cast %435 : i32 to index
    %c0_94 = arith.constant 0 : index
    %437 = vector.load %arg14[%436, %c0_94] : memref<128x384xf32, #tpu.memory_space<vmem>>, vector<16x384xf32>
    %438 = arith.truncf %433 : vector<16x128xf32> to vector<16x128xbf16>
    %cst_95 = arith.constant dense<0.000000e+00> : vector<16x384xf32>
    %439 = tpu.matmul %438, %23, %cst_95 {dimension_numbers = #tpu.dot_dimension_numbers<[1], [0], [0], [1], [0, 0, 1, 1], [], []>} : vector<16x128xbf16>, vector<128x384xbf16>, vector<16x384xf32> -> vector<16x384xf32>
    %440 = arith.truncf %401 : vector<16x128xf32> to vector<16x128xbf16>
    %cst_96 = arith.constant dense<0.000000e+00> : vector<16x384xf32>
    %441 = tpu.matmul %440, %21, %cst_96 {dimension_numbers = #tpu.dot_dimension_numbers<[1], [0], [0], [1], [0, 0, 1, 1], [], []>} : vector<16x128xbf16>, vector<128x384xbf16>, vector<16x384xf32> -> vector<16x384xf32>
    %442 = vector.extract_strided_slice %437 {offsets = [0, 0], sizes = [16, 128], strides = [1, 1]} : vector<16x384xf32> to vector<16x128xf32>
    %443 = vector.extract_strided_slice %437 {offsets = [0, 128], sizes = [16, 128], strides = [1, 1]} : vector<16x384xf32> to vector<16x128xf32>
    %444 = vector.extract_strided_slice %437 {offsets = [0, 256], sizes = [16, 128], strides = [1, 1]} : vector<16x384xf32> to vector<16x128xf32>
    %445 = vector.extract_strided_slice %441 {offsets = [0, 0], sizes = [16, 128], strides = [1, 1]} : vector<16x384xf32> to vector<16x128xf32>
    %446 = vector.extract_strided_slice %441 {offsets = [0, 128], sizes = [16, 128], strides = [1, 1]} : vector<16x384xf32> to vector<16x128xf32>
    %447 = vector.extract_strided_slice %441 {offsets = [0, 256], sizes = [16, 128], strides = [1, 1]} : vector<16x384xf32> to vector<16x128xf32>
    %448 = arith.addf %442, %445 : vector<16x128xf32>
    %449 = arith.negf %448 : vector<16x128xf32>
    %450 = math.exp %449 : vector<16x128xf32>
    %cst_97 = arith.constant 1.000000e+00 : f32
    %451 = vector.broadcast %cst_97 : f32 to vector<16x128xf32>
    %452 = arith.addf %451, %450 : vector<16x128xf32>
    %453 = arith.divf %451, %452 : vector<16x128xf32>
    %454 = arith.addf %443, %446 : vector<16x128xf32>
    %455 = arith.negf %454 : vector<16x128xf32>
    %456 = math.exp %455 : vector<16x128xf32>
    %cst_98 = arith.constant 1.000000e+00 : f32
    %457 = vector.broadcast %cst_98 : f32 to vector<16x128xf32>
    %458 = arith.addf %457, %456 : vector<16x128xf32>
    %459 = arith.divf %457, %458 : vector<16x128xf32>
    %460 = vector.broadcast %18 : vector<1x128xf32> to vector<16x128xf32>
    %461 = arith.addf %447, %460 : vector<16x128xf32>
    %462 = arith.mulf %453, %461 : vector<16x128xf32>
    %463 = arith.addf %444, %462 : vector<16x128xf32>
    %464 = math.tanh %463 : vector<16x128xf32>
    %cst_99 = arith.constant 1.000000e+00 : f32
    %465 = vector.broadcast %cst_99 : f32 to vector<16x128xf32>
    %466 = arith.subf %465, %459 : vector<16x128xf32>
    %467 = arith.mulf %466, %464 : vector<16x128xf32>
    %468 = arith.mulf %459, %401 : vector<16x128xf32>
    %469 = arith.addf %467, %468 : vector<16x128xf32>
    %470 = arith.truncf %469 : vector<16x128xf32> to vector<16x128xbf16>
    %cst_100 = arith.constant dense<0.000000e+00> : vector<16x384xf32>
    %471 = tpu.matmul %470, %16, %cst_100 {dimension_numbers = #tpu.dot_dimension_numbers<[1], [0], [0], [1], [0, 0, 1, 1], [], []>} : vector<16x128xbf16>, vector<128x384xbf16>, vector<16x384xf32> -> vector<16x384xf32>
    %472 = vector.broadcast %17 : vector<1x384xf32> to vector<16x384xf32>
    %473 = arith.addf %471, %472 : vector<16x384xf32>
    %474 = vector.extract_strided_slice %473 {offsets = [0, 0], sizes = [16, 128], strides = [1, 1]} : vector<16x384xf32> to vector<16x128xf32>
    %475 = vector.extract_strided_slice %473 {offsets = [0, 128], sizes = [16, 128], strides = [1, 1]} : vector<16x384xf32> to vector<16x128xf32>
    %476 = vector.extract_strided_slice %473 {offsets = [0, 256], sizes = [16, 128], strides = [1, 1]} : vector<16x384xf32> to vector<16x128xf32>
    %477 = vector.extract_strided_slice %439 {offsets = [0, 0], sizes = [16, 128], strides = [1, 1]} : vector<16x384xf32> to vector<16x128xf32>
    %478 = vector.extract_strided_slice %439 {offsets = [0, 128], sizes = [16, 128], strides = [1, 1]} : vector<16x384xf32> to vector<16x128xf32>
    %479 = vector.extract_strided_slice %439 {offsets = [0, 256], sizes = [16, 128], strides = [1, 1]} : vector<16x384xf32> to vector<16x128xf32>
    %480 = arith.addf %474, %477 : vector<16x128xf32>
    %481 = arith.negf %480 : vector<16x128xf32>
    %482 = math.exp %481 : vector<16x128xf32>
    %cst_101 = arith.constant 1.000000e+00 : f32
    %483 = vector.broadcast %cst_101 : f32 to vector<16x128xf32>
    %484 = arith.addf %483, %482 : vector<16x128xf32>
    %485 = arith.divf %483, %484 : vector<16x128xf32>
    %486 = arith.addf %475, %478 : vector<16x128xf32>
    %487 = arith.negf %486 : vector<16x128xf32>
    %488 = math.exp %487 : vector<16x128xf32>
    %cst_102 = arith.constant 1.000000e+00 : f32
    %489 = vector.broadcast %cst_102 : f32 to vector<16x128xf32>
    %490 = arith.addf %489, %488 : vector<16x128xf32>
    %491 = arith.divf %489, %490 : vector<16x128xf32>
    %492 = vector.broadcast %19 : vector<1x128xf32> to vector<16x128xf32>
    %493 = arith.addf %479, %492 : vector<16x128xf32>
    %494 = arith.mulf %485, %493 : vector<16x128xf32>
    %495 = arith.addf %476, %494 : vector<16x128xf32>
    %496 = math.tanh %495 : vector<16x128xf32>
    %cst_103 = arith.constant 1.000000e+00 : f32
    %497 = vector.broadcast %cst_103 : f32 to vector<16x128xf32>
    %498 = arith.subf %497, %491 : vector<16x128xf32>
    %499 = arith.mulf %498, %496 : vector<16x128xf32>
    %500 = arith.mulf %491, %433 : vector<16x128xf32>
    %501 = arith.addf %499, %500 : vector<16x128xf32>
    %c7_i32 = arith.constant 7 : i32
    %c16_i32_104 = arith.constant 16 : i32
    %502 = arith.muli %c7_i32, %c16_i32_104 : i32
    %503 = tpu.assume_multiple %502, 16 : i32
    %504 = arith.index_cast %503 : i32 to index
    %c0_105 = arith.constant 0 : index
    %505 = vector.load %arg14[%504, %c0_105] : memref<128x384xf32, #tpu.memory_space<vmem>>, vector<16x384xf32>
    %506 = arith.truncf %501 : vector<16x128xf32> to vector<16x128xbf16>
    %cst_106 = arith.constant dense<0.000000e+00> : vector<16x384xf32>
    %507 = tpu.matmul %506, %23, %cst_106 {dimension_numbers = #tpu.dot_dimension_numbers<[1], [0], [0], [1], [0, 0, 1, 1], [], []>} : vector<16x128xbf16>, vector<128x384xbf16>, vector<16x384xf32> -> vector<16x384xf32>
    %508 = arith.truncf %469 : vector<16x128xf32> to vector<16x128xbf16>
    %cst_107 = arith.constant dense<0.000000e+00> : vector<16x384xf32>
    %509 = tpu.matmul %508, %21, %cst_107 {dimension_numbers = #tpu.dot_dimension_numbers<[1], [0], [0], [1], [0, 0, 1, 1], [], []>} : vector<16x128xbf16>, vector<128x384xbf16>, vector<16x384xf32> -> vector<16x384xf32>
    %510 = vector.extract_strided_slice %505 {offsets = [0, 0], sizes = [16, 128], strides = [1, 1]} : vector<16x384xf32> to vector<16x128xf32>
    %511 = vector.extract_strided_slice %505 {offsets = [0, 128], sizes = [16, 128], strides = [1, 1]} : vector<16x384xf32> to vector<16x128xf32>
    %512 = vector.extract_strided_slice %505 {offsets = [0, 256], sizes = [16, 128], strides = [1, 1]} : vector<16x384xf32> to vector<16x128xf32>
    %513 = vector.extract_strided_slice %509 {offsets = [0, 0], sizes = [16, 128], strides = [1, 1]} : vector<16x384xf32> to vector<16x128xf32>
    %514 = vector.extract_strided_slice %509 {offsets = [0, 128], sizes = [16, 128], strides = [1, 1]} : vector<16x384xf32> to vector<16x128xf32>
    %515 = vector.extract_strided_slice %509 {offsets = [0, 256], sizes = [16, 128], strides = [1, 1]} : vector<16x384xf32> to vector<16x128xf32>
    %516 = arith.addf %510, %513 : vector<16x128xf32>
    %517 = arith.negf %516 : vector<16x128xf32>
    %518 = math.exp %517 : vector<16x128xf32>
    %cst_108 = arith.constant 1.000000e+00 : f32
    %519 = vector.broadcast %cst_108 : f32 to vector<16x128xf32>
    %520 = arith.addf %519, %518 : vector<16x128xf32>
    %521 = arith.divf %519, %520 : vector<16x128xf32>
    %522 = arith.addf %511, %514 : vector<16x128xf32>
    %523 = arith.negf %522 : vector<16x128xf32>
    %524 = math.exp %523 : vector<16x128xf32>
    %cst_109 = arith.constant 1.000000e+00 : f32
    %525 = vector.broadcast %cst_109 : f32 to vector<16x128xf32>
    %526 = arith.addf %525, %524 : vector<16x128xf32>
    %527 = arith.divf %525, %526 : vector<16x128xf32>
    %528 = vector.broadcast %18 : vector<1x128xf32> to vector<16x128xf32>
    %529 = arith.addf %515, %528 : vector<16x128xf32>
    %530 = arith.mulf %521, %529 : vector<16x128xf32>
    %531 = arith.addf %512, %530 : vector<16x128xf32>
    %532 = math.tanh %531 : vector<16x128xf32>
    %cst_110 = arith.constant 1.000000e+00 : f32
    %533 = vector.broadcast %cst_110 : f32 to vector<16x128xf32>
    %534 = arith.subf %533, %527 : vector<16x128xf32>
    %535 = arith.mulf %534, %532 : vector<16x128xf32>
    %536 = arith.mulf %527, %469 : vector<16x128xf32>
    %537 = arith.addf %535, %536 : vector<16x128xf32>
    %538 = arith.truncf %537 : vector<16x128xf32> to vector<16x128xbf16>
    %cst_111 = arith.constant dense<0.000000e+00> : vector<16x384xf32>
    %539 = tpu.matmul %538, %16, %cst_111 {dimension_numbers = #tpu.dot_dimension_numbers<[1], [0], [0], [1], [0, 0, 1, 1], [], []>} : vector<16x128xbf16>, vector<128x384xbf16>, vector<16x384xf32> -> vector<16x384xf32>
    %540 = vector.broadcast %17 : vector<1x384xf32> to vector<16x384xf32>
    %541 = arith.addf %539, %540 : vector<16x384xf32>
    %542 = vector.extract_strided_slice %541 {offsets = [0, 0], sizes = [16, 128], strides = [1, 1]} : vector<16x384xf32> to vector<16x128xf32>
    %543 = vector.extract_strided_slice %541 {offsets = [0, 128], sizes = [16, 128], strides = [1, 1]} : vector<16x384xf32> to vector<16x128xf32>
    %544 = vector.extract_strided_slice %541 {offsets = [0, 256], sizes = [16, 128], strides = [1, 1]} : vector<16x384xf32> to vector<16x128xf32>
    %545 = vector.extract_strided_slice %507 {offsets = [0, 0], sizes = [16, 128], strides = [1, 1]} : vector<16x384xf32> to vector<16x128xf32>
    %546 = vector.extract_strided_slice %507 {offsets = [0, 128], sizes = [16, 128], strides = [1, 1]} : vector<16x384xf32> to vector<16x128xf32>
    %547 = vector.extract_strided_slice %507 {offsets = [0, 256], sizes = [16, 128], strides = [1, 1]} : vector<16x384xf32> to vector<16x128xf32>
    %548 = arith.addf %542, %545 : vector<16x128xf32>
    %549 = arith.negf %548 : vector<16x128xf32>
    %550 = math.exp %549 : vector<16x128xf32>
    %cst_112 = arith.constant 1.000000e+00 : f32
    %551 = vector.broadcast %cst_112 : f32 to vector<16x128xf32>
    %552 = arith.addf %551, %550 : vector<16x128xf32>
    %553 = arith.divf %551, %552 : vector<16x128xf32>
    %554 = arith.addf %543, %546 : vector<16x128xf32>
    %555 = arith.negf %554 : vector<16x128xf32>
    %556 = math.exp %555 : vector<16x128xf32>
    %cst_113 = arith.constant 1.000000e+00 : f32
    %557 = vector.broadcast %cst_113 : f32 to vector<16x128xf32>
    %558 = arith.addf %557, %556 : vector<16x128xf32>
    %559 = arith.divf %557, %558 : vector<16x128xf32>
    %560 = vector.broadcast %19 : vector<1x128xf32> to vector<16x128xf32>
    %561 = arith.addf %547, %560 : vector<16x128xf32>
    %562 = arith.mulf %553, %561 : vector<16x128xf32>
    %563 = arith.addf %544, %562 : vector<16x128xf32>
    %564 = math.tanh %563 : vector<16x128xf32>
    %cst_114 = arith.constant 1.000000e+00 : f32
    %565 = vector.broadcast %cst_114 : f32 to vector<16x128xf32>
    %566 = arith.subf %565, %559 : vector<16x128xf32>
    %567 = arith.mulf %566, %564 : vector<16x128xf32>
    %568 = arith.mulf %559, %501 : vector<16x128xf32>
    %569 = arith.addf %567, %568 : vector<16x128xf32>
    %c8_i32 = arith.constant 8 : i32
    %570 = arith.truncf %569 : vector<16x128xf32> to vector<16x128xbf16>
    %c0_115 = arith.constant 0 : index
    %c0_116 = arith.constant 0 : index
    %571 = vector.load %arg11[%c0_115, %c0_116] : memref<128x128xbf16, #tpu.memory_space<vmem>>, vector<128x128xbf16>
    %cst_117 = arith.constant dense<0.000000e+00> : vector<16x128xf32>
    %572 = tpu.matmul %570, %571, %cst_117 {dimension_numbers = #tpu.dot_dimension_numbers<[1], [0], [0], [1], [0, 0, 1, 1], [], []>} : vector<16x128xbf16>, vector<128x128xbf16>, vector<16x128xf32> -> vector<16x128xf32>
    %c0_118 = arith.constant 0 : index
    %c0_119 = arith.constant 0 : index
    %573 = vector.load %arg12[%c0_118, %c0_119] : memref<1x128xf32, #tpu.memory_space<vmem>>, vector<1x128xf32>
    %574 = vector.broadcast %573 : vector<1x128xf32> to vector<16x128xf32>
    %575 = arith.addf %572, %574 : vector<16x128xf32>
    %c0_120 = arith.constant 0 : index
    %c0_121 = arith.constant 0 : index
    %576 = vector.load %arg13[%c0_120, %c0_121] : memref<16x128xf32, #tpu.memory_space<vmem>>, vector<16x128xf32>
    tpu.vector_store %arg13[%c0_120, %c0_121], %575 {strides = array<i32>} : memref<16x128xf32, #tpu.memory_space<vmem>>, vector<16x128xf32>,
    return
  }
  func.func @transform_0(%arg0: i32) -> (i32, i32) {
    %c0_i32 = arith.constant 0 : i32
    %c0_i32_0 = arith.constant 0 : i32
    return %arg0, %c0_i32 : i32, i32
  }
  func.func @transform_1(%arg0: i32) -> (i32, i32) {
    %c0_i32 = arith.constant 0 : i32
    %c0_i32_0 = arith.constant 0 : i32
    %c0_i32_1 = arith.constant 0 : i32
    return %c0_i32, %c0_i32_0 : i32, i32
  }
  func.func @transform_2(%arg0: i32) -> (i32, i32) {
    %c0_i32 = arith.constant 0 : i32
    %c0_i32_0 = arith.constant 0 : i32
    %c0_i32_1 = arith.constant 0 : i32
    return %c0_i32, %c0_i32_0 : i32, i32
  }
  func.func @transform_3(%arg0: i32) -> (i32, i32) {
    %c0_i32 = arith.constant 0 : i32
    %c0_i32_0 = arith.constant 0 : i32
    %c0_i32_1 = arith.constant 0 : i32
    return %c0_i32, %c0_i32_0 : i32, i32
  }
  func.func @transform_4(%arg0: i32) -> (i32, i32, i32) {
    %c0_i32 = arith.constant 0 : i32
    %c0_i32_0 = arith.constant 0 : i32
    %c0_i32_1 = arith.constant 0 : i32
    %c0_i32_2 = arith.constant 0 : i32
    return %c0_i32, %c0_i32_0, %c0_i32_1 : i32, i32, i32
  }
  func.func @transform_5(%arg0: i32) -> (i32, i32) {
    %c0_i32 = arith.constant 0 : i32
    %c0_i32_0 = arith.constant 0 : i32
    %c0_i32_1 = arith.constant 0 : i32
    return %c0_i32, %c0_i32_0 : i32, i32
  }
  func.func @transform_6(%arg0: i32) -> (i32, i32) {
    %c0_i32 = arith.constant 0 : i32
    %c0_i32_0 = arith.constant 0 : i32
    %c0_i32_1 = arith.constant 0 : i32
    return %c0_i32, %c0_i32_0 : i32, i32
  }
  func.func @transform_7(%arg0: i32) -> (i32, i32) {
    %c0_i32 = arith.constant 0 : i32
    %c0_i32_0 = arith.constant 0 : i32
    %c0_i32_1 = arith.constant 0 : i32
    return %c0_i32, %c0_i32_0 : i32, i32
  }
  func.func @transform_8(%arg0: i32) -> (i32, i32) {
    %c0_i32 = arith.constant 0 : i32
    %c0_i32_0 = arith.constant 0 : i32
    %c0_i32_1 = arith.constant 0 : i32
    return %c0_i32, %c0_i32_0 : i32, i32
  }
  func.func @transform_9(%arg0: i32) -> (i32, i32) {
    %c0_i32 = arith.constant 0 : i32
    %c0_i32_0 = arith.constant 0 : i32
    %c0_i32_1 = arith.constant 0 : i32
    return %c0_i32, %c0_i32_0 : i32, i32
  }
  func.func @transform_10(%arg0: i32) -> (i32, i32) {
    %c0_i32 = arith.constant 0 : i32
    %c0_i32_0 = arith.constant 0 : i32
    %c0_i32_1 = arith.constant 0 : i32
    return %c0_i32, %c0_i32_0 : i32, i32
  }
  func.func @transform_11(%arg0: i32) -> (i32, i32) {
    %c0_i32 = arith.constant 0 : i32
    %c0_i32_0 = arith.constant 0 : i32
    %c0_i32_1 = arith.constant 0 : i32
    return %c0_i32, %c0_i32_0 : i32, i32
  }
  func.func @transform_12(%arg0: i32) -> (i32, i32) {
    %c0_i32 = arith.constant 0 : i32
    %c0_i32_0 = arith.constant 0 : i32
    return %arg0, %c0_i32 : i32, i32
  }
}

</mosaic_0001>

<llo_original>
// kernel: dqn_base_forward.1
$region0: #{dqn_base_forward.1}
  #allocation0 [shape = 'u32[]', space=smem, size = 0x4, offset = 0x4, fixed_abs, tag = 'smem constant byte address 0x4 - core index']
  #allocation1 [shape = 'u32[144,128]{1,0:T(1,128)}', space=vmem, size = 0x12000, scoped, tag = 'internal scratch']
  #allocation2 [shape = 'f32[128,384]{1,0:T(8,128)}', space=vmem, size = 0x30000, scoped, tag = 'scratch operand']
  %s0 = inlined_call_operand.vmem [shape: f32[128,4], index: 0, kind: input, shape index: {}]
  %s1 = inlined_call_operand.vmem [shape: bf16[4,32], index: 1, kind: input, shape index: {}]
  %s2 = inlined_call_operand.vmem [shape: f32[1,32], index: 2, kind: input, shape index: {}]
  %s3 = inlined_call_operand.vmem [shape: bf16[32,384], index: 3, kind: input, shape index: {}]
  %s4 = inlined_call_operand.vmem [shape: bf16[2,128,384], index: 4, kind: input, shape index: {}]
  %s5 = inlined_call_operand.vmem [shape: f32[1,384], index: 5, kind: input, shape index: {}]
  %s6 = inlined_call_operand.vmem [shape: f32[1,128], index: 6, kind: input, shape index: {}]
  %s7 = inlined_call_operand.vmem [shape: bf16[128,384], index: 7, kind: input, shape index: {}]
  %s8 = inlined_call_operand.vmem [shape: f32[1,384], index: 8, kind: input, shape index: {}]
  %s9 = inlined_call_operand.vmem [shape: f32[1,128], index: 9, kind: input, shape index: {}]
  %s10 = inlined_call_operand.vmem [shape: bf16[128,128], index: 10, kind: input, shape index: {}]
  %s11 = inlined_call_operand.vmem [shape: f32[1,128], index: 11, kind: input, shape index: {}]
  %s12 = inlined_call_operand.vmem [shape: f32[16,128], index: 12, kind: output, shape index: {}]
  %s13 = sld [smem:[#allocation0]]
  $region58: #{dqn_base_forward.1} parent=0
    _
  %s15 = ssub.s32 1, %s13
  %s16 = scalar_select 0, %s15, %s13
  // Predicated region
  $region2: #{dqn_base_forward.1} parent=0 // pred_check
    _
  $region3: #{dqn_base_forward.1} parent=0 // pred_check_branch
    %18 = sbr.rel (0) target = $region5
  $region4: #{dqn_base_forward.1} parent=0 // pred_region
    _
  $region5: #{dqn_base_forward.1} parent=0 // pred_fallthru
    _
  // Predicated region
  $region6: #{dqn_base_forward.1} parent=0 // pred_check
    _
  $region7: #{dqn_base_forward.1} parent=0 // pred_check_branch
    %20 = sbr.rel (0) target = $region9
  $region8: #{dqn_base_forward.1} parent=0 // pred_region
    _
  $region9: #{dqn_base_forward.1} parent=0 // pred_fallthru
    _
  // Predicated region
  $region10: #{dqn_base_forward.1} parent=0 // pred_check
    _
  $region11: #{dqn_base_forward.1} parent=0 // pred_check_branch
    %22 = sbr.rel (0) target = $region13
  $region12: #{dqn_base_forward.1} parent=0 // pred_region
    _
  $region13: #{dqn_base_forward.1} parent=0 // pred_fallthru
    _
  // Predicated region
  $region14: #{dqn_base_forward.1} parent=0 // pred_check
    _
  $region15: #{dqn_base_forward.1} parent=0 // pred_check_branch
    %24 = sbr.rel (0) target = $region17
  $region16: #{dqn_base_forward.1} parent=0 // pred_region
    _
  $region17: #{dqn_base_forward.1} parent=0 // pred_fallthru
    _
  // Predicated region
  $region18: #{dqn_base_forward.1} parent=0 // pred_check
    _
  $region19: #{dqn_base_forward.1} parent=0 // pred_check_branch
    %26 = sbr.rel (0) target = $region21
  $region20: #{dqn_base_forward.1} parent=0 // pred_region
    _
  $region21: #{dqn_base_forward.1} parent=0 // pred_fallthru
    _
  // Predicated region
  $region22: #{dqn_base_forward.1} parent=0 // pred_check
    _
  $region23: #{dqn_base_forward.1} parent=0 // pred_check_branch
    %28 = sbr.rel (0) target = $region25
  $region24: #{dqn_base_forward.1} parent=0 // pred_region
    _
  $region25: #{dqn_base_forward.1} parent=0 // pred_fallthru
    _
  // Predicated region
  $region26: #{dqn_base_forward.1} parent=0 // pred_check
    _
  $region27: #{dqn_base_forward.1} parent=0 // pred_check_branch
    %30 = sbr.rel (0) target = $region29
  $region28: #{dqn_base_forward.1} parent=0 // pred_region
    _
  $region29: #{dqn_base_forward.1} parent=0 // pred_fallthru
    _
  // Predicated region
  $region30: #{dqn_base_forward.1} parent=0 // pred_check
    _
  $region31: #{dqn_base_forward.1} parent=0 // pred_check_branch
    %32 = sbr.rel (0) target = $region33
  $region32: #{dqn_base_forward.1} parent=0 // pred_region
    _
  $region33: #{dqn_base_forward.1} parent=0 // pred_fallthru
    _
  // Predicated region
  $region34: #{dqn_base_forward.1} parent=0 // pred_check
    _
  $region35: #{dqn_base_forward.1} parent=0 // pred_check_branch
    %34 = sbr.rel (0) target = $region37
  $region36: #{dqn_base_forward.1} parent=0 // pred_region
    _
  $region37: #{dqn_base_forward.1} parent=0 // pred_fallthru
    _
  // Predicated region
  $region38: #{dqn_base_forward.1} parent=0 // pred_check
    _
  $region39: #{dqn_base_forward.1} parent=0 // pred_check_branch
    %36 = sbr.rel (0) target = $region41
  $region40: #{dqn_base_forward.1} parent=0 // pred_region
    _
  $region41: #{dqn_base_forward.1} parent=0 // pred_fallthru
    _
  // Predicated region
  $region42: #{dqn_base_forward.1} parent=0 // pred_check
    _
  $region43: #{dqn_base_forward.1} parent=0 // pred_check_branch
    %38 = sbr.rel (0) target = $region45
  $region44: #{dqn_base_forward.1} parent=0 // pred_region
    _
  $region45: #{dqn_base_forward.1} parent=0 // pred_fallthru
    _
  // Predicated region
  $region46: #{dqn_base_forward.1} parent=0 // pred_check
    _
  $region47: #{dqn_base_forward.1} parent=0 // pred_check_branch
    %40 = sbr.rel (0) target = $region49
  $region48: #{dqn_base_forward.1} parent=0 // pred_region
    _
  $region49: #{dqn_base_forward.1} parent=0 // pred_fallthru
    _
  %v42 = vld [vmem:[%s0] sm:$0xff]
  %v43 = vld [vmem:[%s0 + $0x8] sm:$0xff]
  %v44 = vld [vmem:[%s0 + $0x10] sm:$0xff]
  %v45 = vld [vmem:[%s0 + $0x18] sm:$0xff]
  %v46 = vld [vmem:[%s0 + $0x20] sm:$0xff]
  %v47 = vld [vmem:[%s0 + $0x28] sm:$0xff]
  %v48 = vld [vmem:[%s0 + $0x30] sm:$0xff]
  %v49 = vld [vmem:[%s0 + $0x38] sm:$0xff]
  %v50 = vld [vmem:[%s0 + $0x40] sm:$0xff]
  %v51 = vld [vmem:[%s0 + $0x48] sm:$0xff]
  %v52 = vld [vmem:[%s0 + $0x50] sm:$0xff]
  %v53 = vld [vmem:[%s0 + $0x58] sm:$0xff]
  %v54 = vld [vmem:[%s0 + $0x60] sm:$0xff]
  %v55 = vld [vmem:[%s0 + $0x68] sm:$0xff]
  %v56 = vld [vmem:[%s0 + $0x70] sm:$0xff]
  %v57 = vld [vmem:[%s0 + $0x78] sm:$0xff]
  %v58 = vpack.c.bf16 %v43, %v42
  %v59 = vpack.c.bf16 %v45, %v44
  %v60 = vpack.c.bf16 %v47, %v46
  %v61 = vpack.c.bf16 %v49, %v48
  %v62 = vpack.c.bf16 %v51, %v50
  %v63 = vpack.c.bf16 %v53, %v52
  %v64 = vpack.c.bf16 %v55, %v54
  %v65 = vpack.c.bf16 %v57, %v56
  %v66 = vld [vmem:[%s1] sm:$0x3]
  %v67 = vld [vmem:[%s2] sm:$0x1]
  %v69 = vlaneseq
  %v70 = vshrl.u32 %v69, 7
  %v71 = vsub.s32 0, %v70
  %v72 = vrot.slane %v67, %v71
  %vm74 = vcmask 31744
  %v76 = vsel %vm74, %v58, 0
  %v79 = vsel %vm74, %v59, 0
  %v82 = vsel %vm74, %v60, 0
  %v85 = vsel %vm74, %v61, 0
  %v88 = vsel %vm74, %v62, 0
  %v91 = vsel %vm74, %v63, 0
  %v94 = vsel %vm74, %v64, 0
  %v97 = vsel %vm74, %v65, 0
  %vm99 = vcmask 1041408
  %v101 = vsel %vm99, %v66, 0
  %103 = vmatprep.subr.bf16.mxu0 0
  %104 = vmatpush1.bf16.msra.mxu0 %v101
  %105 = vmatprep.subr.bf16.mxu0 0
  %106 = vmatpush1.bf16.msra.mxu0 0
  %107 = vmatprep.subr.bf16.mxu0 0
  %108 = vmatpush1.bf16.msra.mxu0 0
  %109 = vmatprep.subr.bf16.mxu0 0
  %110 = vmatpush1.bf16.msra.mxu0 0
  %111 = vmatprep.subr.bf16.mxu0 0
  %112 = vmatpush1.bf16.msra.mxu0 0
  %113 = vmatprep.subr.bf16.mxu0 0
  %114 = vmatpush1.bf16.msra.mxu0 0
  %115 = vmatprep.subr.bf16.mxu0 0
  %116 = vmatpush1.bf16.msra.mxu0 0
  %117 = vmatprep.subr.bf16.mxu0 0
  %118 = vmatpush1.bf16.msra.mxu0 0
  %119 = vmatprep.subr.bf16.mxu0 0
  %120 = vmatpush1.bf16.msra.mxu0 0
  %121 = vmatprep.subr.bf16.mxu0 0
  %122 = vmatpush1.bf16.msra.mxu0 0
  %123 = vmatprep.subr.bf16.mxu0 0
  %124 = vmatpush1.bf16.msra.mxu0 0
  %125 = vmatprep.subr.bf16.mxu0 0
  %126 = vmatpush1.bf16.msra.mxu0 0
  %127 = vmatprep.subr.bf16.mxu0 0
  %128 = vmatpush1.bf16.msra.mxu0 0
  %129 = vmatprep.subr.bf16.mxu0 0
  %130 = vmatpush1.bf16.msra.mxu0 0
  %131 = vmatprep.subr.bf16.mxu0 0
  %132 = vmatpush1.bf16.msra.mxu0 0
  %133 = vmatprep.subr.bf16.mxu0 0
  %134 = vmatpush1.bf16.msra.mxu0 0
  %135 = vmatprep.mubr.bf16.mxu0 0
  %136 = vmatmul.mubr.bf16.gmra.mrb[0].mxu0 %v76
  %v137 = vpop.f32.mrb[0].mxu0
  %v138 = vadd.f32 %v72, %v137
  %v139 = vpop.f32.mrb[0].mxu0
  %v140 = vpop.f32.mrb[0].mxu0
  %v141 = vadd.f32 %v72, %v140
  %v142 = vpop.f32.mrb[0].mxu0
  %143 = vmatprep.mubr.bf16.mxu0 0
  %144 = vmatmul.mubr.bf16.gmra.mrb[0].mxu0 %v79
  %v145 = vpop.f32.mrb[0].mxu0
  %v146 = vadd.f32 %v72, %v145
  %v147 = vpop.f32.mrb[0].mxu0
  %v148 = vpop.f32.mrb[0].mxu0
  %v149 = vadd.f32 %v72, %v148
  %v150 = vpop.f32.mrb[0].mxu0
  %151 = vmatprep.mubr.bf16.mxu0 0
  %152 = vmatmul.mubr.bf16.gmra.mrb[0].mxu0 %v82
  %v153 = vpop.f32.mrb[0].mxu0
  %v154 = vadd.f32 %v72, %v153
  %v155 = vpop.f32.mrb[0].mxu0
  %v156 = vpop.f32.mrb[0].mxu0
  %v157 = vadd.f32 %v72, %v156
  %v158 = vpop.f32.mrb[0].mxu0
  %159 = vmatprep.mubr.bf16.mxu0 0
  %160 = vmatmul.mubr.bf16.gmra.mrb[0].mxu0 %v85
  %v161 = vpop.f32.mrb[0].mxu0
  %v162 = vadd.f32 %v72, %v161
  %v163 = vpop.f32.mrb[0].mxu0
  %v164 = vpop.f32.mrb[0].mxu0
  %v165 = vadd.f32 %v72, %v164
  %v166 = vpop.f32.mrb[0].mxu0
  %167 = vmatprep.mubr.bf16.mxu0 0
  %168 = vmatmul.mubr.bf16.gmra.mrb[0].mxu0 %v88
  %v169 = vpop.f32.mrb[0].mxu0
  %v170 = vadd.f32 %v72, %v169
  %v171 = vpop.f32.mrb[0].mxu0
  %v172 = vpop.f32.mrb[0].mxu0
  %v173 = vadd.f32 %v72, %v172
  %v174 = vpop.f32.mrb[0].mxu0
  %175 = vmatprep.mubr.bf16.mxu0 0
  %176 = vmatmul.mubr.bf16.gmra.mrb[0].mxu0 %v91
  %v177 = vpop.f32.mrb[0].mxu0
  %v178 = vadd.f32 %v72, %v177
  %v179 = vpop.f32.mrb[0].mxu0
  %v180 = vpop.f32.mrb[0].mxu0
  %v181 = vadd.f32 %v72, %v180
  %v182 = vpop.f32.mrb[0].mxu0
  %183 = vmatprep.mubr.bf16.mxu0 0
  %184 = vmatmul.mubr.bf16.gmra.mrb[0].mxu0 %v94
  %v185 = vpop.f32.mrb[0].mxu0
  %v186 = vadd.f32 %v72, %v185
  %v187 = vpop.f32.mrb[0].mxu0
  %v188 = vpop.f32.mrb[0].mxu0
  %v189 = vadd.f32 %v72, %v188
  %v190 = vpop.f32.mrb[0].mxu0
  %191 = vmatprep.mubr.bf16.mxu0 0
  %192 = vmatmul.mubr.bf16.gmra.mrb[0].mxu0 %v97
  %v193 = vpop.f32.mrb[0].mxu0
  %v194 = vadd.f32 %v72, %v193
  %v195 = vpop.f32.mrb[0].mxu0
  %v196 = vpop.f32.mrb[0].mxu0
  %v197 = vadd.f32 %v72, %v196
  %v198 = vpop.f32.mrb[0].mxu0
  %199 = vdwg.mxu0
  %v200 = vmax.f32 %v138, 0.0
  %v201 = vmax.f32 %v141, 0.0
  %v202 = vmax.f32 %v146, 0.0
  %v203 = vmax.f32 %v149, 0.0
  %v204 = vmax.f32 %v154, 0.0
  %v205 = vmax.f32 %v157, 0.0
  %v206 = vmax.f32 %v162, 0.0
  %v207 = vmax.f32 %v165, 0.0
  %v208 = vmax.f32 %v170, 0.0
  %v209 = vmax.f32 %v173, 0.0
  %v210 = vmax.f32 %v178, 0.0
  %v211 = vmax.f32 %v181, 0.0
  %v212 = vmax.f32 %v186, 0.0
  %v213 = vmax.f32 %v189, 0.0
  %v214 = vmax.f32 %v194, 0.0
  %v215 = vmax.f32 %v197, 0.0
  %v216 = vpack.c.bf16 %v201, %v200
  %v217 = vpack.c.bf16 %v203, %v202
  %v218 = vpack.c.bf16 %v205, %v204
  %v219 = vpack.c.bf16 %v207, %v206
  %v220 = vpack.c.bf16 %v209, %v208
  %v221 = vpack.c.bf16 %v211, %v210
  %v222 = vpack.c.bf16 %v213, %v212
  %v223 = vpack.c.bf16 %v215, %v214
  %v224 = vld [vmem:[%s3] sm:$0xff]
  %v225 = vld [vmem:[%s3 + $0x8] sm:$0xf]
  %v226 = vld [vmem:[%s3 + $0xc] sm:$0xff]
  %v227 = vld [vmem:[%s3 + $0x14] sm:$0xf]
  %v228 = vld [vmem:[%s3 + $0x18] sm:$0xff]
  %v229 = vld [vmem:[%s3 + $0x20] sm:$0xf]
  %v230 = vld [vmem:[%s3 + $0x24] sm:$0xff]
  %v231 = vld [vmem:[%s3 + $0x2c] sm:$0xf]
  %v232 = vld [vmem:[%s5] sm:$0x7]
  %v234 = vlaneseq
  %v235 = vshrl.u32 %v234, 7
  %v236 = vsub.s32 0, %v235
  %v237 = vrot.slane %v232, %v236
  %v238 = vlaneseq
  %v239 = vshrl.u32 %v238, 7
  %v240 = vsub.s32 1, %v239
  %v241 = vrot.slane %v232, %v240
  %v242 = vlaneseq
  %v243 = vshrl.u32 %v242, 7
  %v244 = vsub.s32 2, %v243
  %v245 = vrot.slane %v232, %v244
  %v257 = vunpack.c.l.b16 %v224
  %v258 = vunpack.c.h.b16 %v224
  %v259 = vunpack.c.l.b16 %v225
  %v260 = vunpack.c.l.b16 %v226
  %v261 = vunpack.c.h.b16 %v226
  %v262 = vunpack.c.l.b16 %v227
  %v263 = vunpack.c.l.b16 %v228
  %v264 = vunpack.c.h.b16 %v228
  %v265 = vunpack.c.l.b16 %v229
  %v266 = vunpack.c.l.b16 %v230
  %v267 = vunpack.c.h.b16 %v230
  %v268 = vunpack.c.l.b16 %v231
  %v269 = vpack.c.b16 %v260, %v257
  %v270 = vpack.c.b16 %v261, %v258
  %v271 = vpack.c.b16 %v262, %v259
  %v272 = vpack.c.b16 %v266, %v263
  %v273 = vpack.c.b16 %v267, %v264
  %v274 = vpack.c.b16 %v268, %v265
  %vm281 = vcmask 261120
  %v283 = vsel %vm281, %v216, 0
  %v286 = vsel %vm281, %v217, 0
  %v289 = vsel %vm281, %v218, 0
  %v292 = vsel %vm281, %v219, 0
  %v295 = vsel %vm281, %v220, 0
  %v298 = vsel %vm281, %v221, 0
  %v301 = vsel %vm281, %v222, 0
  %v304 = vsel %vm281, %v223, 0
  %306 = vmatprep.subr.bf16.mxu0 %v270
  %307 = vmatpush1.bf16.msra.mxu0 %v269
  %308 = vmatprep.subr.bf16.mxu0 %v273
  %309 = vmatpush1.bf16.msra.mxu0 %v272
  %310 = vmatprep.subr.bf16.mxu0 0
  %311 = vmatpush1.bf16.msra.mxu0 0
  %312 = vmatprep.subr.bf16.mxu0 0
  %313 = vmatpush1.bf16.msra.mxu0 0
  %314 = vmatprep.subr.bf16.mxu0 0
  %315 = vmatpush1.bf16.msra.mxu0 0
  %316 = vmatprep.subr.bf16.mxu0 0
  %317 = vmatpush1.bf16.msra.mxu0 0
  %318 = vmatprep.subr.bf16.mxu0 0
  %319 = vmatpush1.bf16.msra.mxu0 0
  %320 = vmatprep.subr.bf16.mxu0 0
  %321 = vmatpush1.bf16.msra.mxu0 0
  %322 = vmatprep.subr.bf16.mxu0 0
  %323 = vmatpush1.bf16.msra.mxu0 0
  %324 = vmatprep.subr.bf16.mxu0 0
  %325 = vmatpush1.bf16.msra.mxu0 0
  %326 = vmatprep.subr.bf16.mxu0 0
  %327 = vmatpush1.bf16.msra.mxu0 0
  %328 = vmatprep.subr.bf16.mxu0 0
  %329 = vmatpush1.bf16.msra.mxu0 0
  %330 = vmatprep.subr.bf16.mxu0 0
  %331 = vmatpush1.bf16.msra.mxu0 0
  %332 = vmatprep.subr.bf16.mxu0 0
  %333 = vmatpush1.bf16.msra.mxu0 0
  %334 = vmatprep.subr.bf16.mxu0 0
  %335 = vmatpush1.bf16.msra.mxu0 0
  %336 = vmatprep.subr.bf16.mxu0 0
  %337 = vmatpush1.bf16.msra.mxu0 0
  %338 = vmatprep.mubr.bf16.mxu0 0
  %339 = vmatmul.mubr.bf16.gmra.mrb[0].mxu0 %v283
  %v340 = vpop.f32.mrb[0].mxu0
  %v341 = vadd.f32 %v237, %v340
  %v342 = vpop.f32.mrb[0].mxu0
  %v343 = vadd.f32 %v241, %v342
  %v344 = vpop.f32.mrb[0].mxu0
  %v345 = vadd.f32 %v237, %v344
  %v346 = vpop.f32.mrb[0].mxu0
  %v347 = vadd.f32 %v241, %v346
  %348 = vmatprep.mubr.bf16.mxu0 0
  %349 = vmatmul.mubr.bf16.gmra.mrb[0].mxu0 %v286
  %v350 = vpop.f32.mrb[0].mxu0
  %v351 = vadd.f32 %v237, %v350
  %v352 = vpop.f32.mrb[0].mxu0
  %v353 = vadd.f32 %v241, %v352
  %v354 = vpop.f32.mrb[0].mxu0
  %v355 = vadd.f32 %v237, %v354
  %v356 = vpop.f32.mrb[0].mxu0
  %v357 = vadd.f32 %v241, %v356
  %358 = vmatprep.mubr.bf16.mxu0 0
  %359 = vmatmul.mubr.bf16.gmra.mrb[0].mxu0 %v289
  %v360 = vpop.f32.mrb[0].mxu0
  %v361 = vadd.f32 %v237, %v360
  %v362 = vpop.f32.mrb[0].mxu0
  %v363 = vadd.f32 %v241, %v362
  %v364 = vpop.f32.mrb[0].mxu0
  %v365 = vadd.f32 %v237, %v364
  %v366 = vpop.f32.mrb[0].mxu0
  %v367 = vadd.f32 %v241, %v366
  %368 = vmatprep.mubr.bf16.mxu0 0
  %369 = vmatmul.mubr.bf16.gmra.mrb[0].mxu0 %v292
  %v370 = vpop.f32.mrb[0].mxu0
  %v371 = vadd.f32 %v237, %v370
  %v372 = vpop.f32.mrb[0].mxu0
  %v373 = vadd.f32 %v241, %v372
  %v374 = vpop.f32.mrb[0].mxu0
  %v375 = vadd.f32 %v237, %v374
  %v376 = vpop.f32.mrb[0].mxu0
  %v377 = vadd.f32 %v241, %v376
  %378 = vmatprep.mubr.bf16.mxu0 0
  %379 = vmatmul.mubr.bf16.gmra.mrb[0].mxu0 %v295
  %v380 = vpop.f32.mrb[0].mxu0
  %v381 = vadd.f32 %v237, %v380
  %v382 = vpop.f32.mrb[0].mxu0
  %v383 = vadd.f32 %v241, %v382
  %v384 = vpop.f32.mrb[0].mxu0
  %v385 = vadd.f32 %v237, %v384
  %v386 = vpop.f32.mrb[0].mxu0
  %v387 = vadd.f32 %v241, %v386
  %388 = vmatprep.mubr.bf16.mxu0 0
  %389 = vmatmul.mubr.bf16.gmra.mrb[0].mxu0 %v298
  %v390 = vpop.f32.mrb[0].mxu0
  %v391 = vadd.f32 %v237, %v390
  %v392 = vpop.f32.mrb[0].mxu0
  %v393 = vadd.f32 %v241, %v392
  %v394 = vpop.f32.mrb[0].mxu0
  %v395 = vadd.f32 %v237, %v394
  %v396 = vpop.f32.mrb[0].mxu0
  %v397 = vadd.f32 %v241, %v396
  %398 = vmatprep.mubr.bf16.mxu0 0
  %399 = vmatmul.mubr.bf16.gmra.mrb[0].mxu0 %v301
  %v400 = vpop.f32.mrb[0].mxu0
  %v401 = vadd.f32 %v237, %v400
  %v402 = vpop.f32.mrb[0].mxu0
  %v403 = vadd.f32 %v241, %v402
  %v404 = vpop.f32.mrb[0].mxu0
  %v405 = vadd.f32 %v237, %v404
  %v406 = vpop.f32.mrb[0].mxu0
  %v407 = vadd.f32 %v241, %v406
  %408 = vmatprep.mubr.bf16.mxu0 0
  %409 = vmatmul.mubr.bf16.gmra.mrb[0].mxu0 %v304
  %v410 = vpop.f32.mrb[0].mxu0
  %v411 = vadd.f32 %v237, %v410
  %v412 = vpop.f32.mrb[0].mxu0
  %v413 = vadd.f32 %v241, %v412
  %v414 = vpop.f32.mrb[0].mxu0
  %v415 = vadd.f32 %v237, %v414
  %v416 = vpop.f32.mrb[0].mxu0
  %v417 = vadd.f32 %v241, %v416
  %418 = vdwg.mxu0
  %419 = vmatprep.subr.bf16.mxu0 0
  %420 = vmatpush1.bf16.msra.mxu0 %v271
  %421 = vmatprep.subr.bf16.mxu0 0
  %422 = vmatpush1.bf16.msra.mxu0 %v274
  %423 = vmatprep.subr.bf16.mxu0 0
  %424 = vmatpush1.bf16.msra.mxu0 0
  %425 = vmatprep.subr.bf16.mxu0 0
  %426 = vmatpush1.bf16.msra.mxu0 0
  %427 = vmatprep.subr.bf16.mxu0 0
  %428 = vmatpush1.bf16.msra.mxu0 0
  %429 = vmatprep.subr.bf16.mxu0 0
  %430 = vmatpush1.bf16.msra.mxu0 0
  %431 = vmatprep.subr.bf16.mxu0 0
  %432 = vmatpush1.bf16.msra.mxu0 0
  %433 = vmatprep.subr.bf16.mxu0 0
  %434 = vmatpush1.bf16.msra.mxu0 0
  %435 = vmatprep.subr.bf16.mxu0 0
  %436 = vmatpush1.bf16.msra.mxu0 0
  %437 = vmatprep.subr.bf16.mxu0 0
  %438 = vmatpush1.bf16.msra.mxu0 0
  %439 = vmatprep.subr.bf16.mxu0 0
  %440 = vmatpush1.bf16.msra.mxu0 0
  %441 = vmatprep.subr.bf16.mxu0 0
  %442 = vmatpush1.bf16.msra.mxu0 0
  %443 = vmatprep.subr.bf16.mxu0 0
  %444 = vmatpush1.bf16.msra.mxu0 0
  %445 = vmatprep.subr.bf16.mxu0 0
  %446 = vmatpush1.bf16.msra.mxu0 0
  %447 = vmatprep.subr.bf16.mxu0 0
  %448 = vmatpush1.bf16.msra.mxu0 0
  %449 = vmatprep.subr.bf16.mxu0 0
  %450 = vmatpush1.bf16.msra.mxu0 0
  %451 = vmatprep.mubr.bf16.mxu0 0
  %452 = vmatmul.mubr.bf16.gmra.mrb[0].mxu0 %v283
  %v453 = vpop.f32.mrb[0].mxu0
  %v454 = vadd.f32 %v245, %v453
  %v455 = vpop.f32.mrb[0].mxu0
  %v456 = vpop.f32.mrb[0].mxu0
  %v457 = vadd.f32 %v245, %v456
  %v458 = vpop.f32.mrb[0].mxu0
  %459 = vmatprep.mubr.bf16.mxu0 0
  %460 = vmatmul.mubr.bf16.gmra.mrb[0].mxu0 %v286
  %v461 = vpop.f32.mrb[0].mxu0
  %v462 = vadd.f32 %v245, %v461
  %v463 = vpop.f32.mrb[0].mxu0
  %v464 = vpop.f32.mrb[0].mxu0
  %v465 = vadd.f32 %v245, %v464
  %v466 = vpop.f32.mrb[0].mxu0
  %467 = vmatprep.mubr.bf16.mxu0 0
  %468 = vmatmul.mubr.bf16.gmra.mrb[0].mxu0 %v289
  %v469 = vpop.f32.mrb[0].mxu0
  %v470 = vadd.f32 %v245, %v469
  %v471 = vpop.f32.mrb[0].mxu0
  %v472 = vpop.f32.mrb[0].mxu0
  %v473 = vadd.f32 %v245, %v472
  %v474 = vpop.f32.mrb[0].mxu0
  %475 = vmatprep.mubr.bf16.mxu0 0
  %476 = vmatmul.mubr.bf16.gmra.mrb[0].mxu0 %v292
  %v477 = vpop.f32.mrb[0].mxu0
  %v478 = vadd.f32 %v245, %v477
  %v479 = vpop.f32.mrb[0].mxu0
  %v480 = vpop.f32.mrb[0].mxu0
  %v481 = vadd.f32 %v245, %v480
  %v482 = vpop.f32.mrb[0].mxu0
  %483 = vmatprep.mubr.bf16.mxu0 0
  %484 = vmatmul.mubr.bf16.gmra.mrb[0].mxu0 %v295
  %v485 = vpop.f32.mrb[0].mxu0
  %v486 = vadd.f32 %v245, %v485
  %v487 = vpop.f32.mrb[0].mxu0
  %v488 = vpop.f32.mrb[0].mxu0
  %v489 = vadd.f32 %v245, %v488
  %v490 = vpop.f32.mrb[0].mxu0
  %491 = vmatprep.mubr.bf16.mxu0 0
  %492 = vmatmul.mubr.bf16.gmra.mrb[0].mxu0 %v298
  %v493 = vpop.f32.mrb[0].mxu0
  %v494 = vadd.f32 %v245, %v493
  %v495 = vpop.f32.mrb[0].mxu0
  %v496 = vpop.f32.mrb[0].mxu0
  %v497 = vadd.f32 %v245, %v496
  %v498 = vpop.f32.mrb[0].mxu0
  %499 = vmatprep.mubr.bf16.mxu0 0
  %500 = vmatmul.mubr.bf16.gmra.mrb[0].mxu0 %v301
  %v501 = vpop.f32.mrb[0].mxu0
  %v502 = vadd.f32 %v245, %v501
  %v503 = vpop.f32.mrb[0].mxu0
  %v504 = vpop.f32.mrb[0].mxu0
  %v505 = vadd.f32 %v245, %v504
  %v506 = vpop.f32.mrb[0].mxu0
  %507 = vmatprep.mubr.bf16.mxu0 0
  %508 = vmatmul.mubr.bf16.gmra.mrb[0].mxu0 %v304
  %v509 = vpop.f32.mrb[0].mxu0
  %v510 = vadd.f32 %v245, %v509
  %v511 = vpop.f32.mrb[0].mxu0
  %v512 = vpop.f32.mrb[0].mxu0
  %v513 = vadd.f32 %v245, %v512
  %v514 = vpop.f32.mrb[0].mxu0
  %515 = vdwg.mxu0
  %516 = vst [vmem:[#allocation2] sm:$0xff] %v341
  %517 = vst [vmem:[#allocation2 + $0x8] sm:$0xff] %v343
  %518 = vst [vmem:[#allocation2 + $0x10] sm:$0xff] %v454
  %519 = vst [vmem:[#allocation2 + $0x18] sm:$0xff] %v345
  %520 = vst [vmem:[#allocation2 + $0x20] sm:$0xff] %v347
  %521 = vst [vmem:[#allocation2 + $0x28] sm:$0xff] %v457
  %522 = vst [vmem:[#allocation2 + $0x30] sm:$0xff] %v351
  %523 = vst [vmem:[#allocation2 + $0x38] sm:$0xff] %v353
  %524 = vst [vmem:[#allocation2 + $0x40] sm:$0xff] %v462
  %525 = vst [vmem:[#allocation2 + $0x48] sm:$0xff] %v355
  %526 = vst [vmem:[#allocation2 + $0x50] sm:$0xff] %v357
  %527 = vst [vmem:[#allocation2 + $0x58] sm:$0xff] %v465
  %528 = vst [vmem:[#allocation2 + $0x60] sm:$0xff] %v361
  %529 = vst [vmem:[#allocation2 + $0x68] sm:$0xff] %v363
  %530 = vst [vmem:[#allocation2 + $0x70] sm:$0xff] %v470
  %531 = vst [vmem:[#allocation2 + $0x78] sm:$0xff] %v365
  %532 = vst [vmem:[#allocation2 + $0x80] sm:$0xff] %v367
  %533 = vst [vmem:[#allocation2 + $0x88] sm:$0xff] %v473
  %534 = vst [vmem:[#allocation2 + $0x90] sm:$0xff] %v371
  %535 = vst [vmem:[#allocation2 + $0x98] sm:$0xff] %v373
  %536 = vst [vmem:[#allocation2 + $0xa0] sm:$0xff] %v478
  %537 = vst [vmem:[#allocation2 + $0xa8] sm:$0xff] %v375
  %538 = vst [vmem:[#allocation2 + $0xb0] sm:$0xff] %v377
  %539 = vst [vmem:[#allocation2 + $0xb8] sm:$0xff] %v481
  %540 = vst [vmem:[#allocation2 + $0xc0] sm:$0xff] %v381
  %541 = vst [vmem:[#allocation2 + $0xc8] sm:$0xff] %v383
  %542 = vst [vmem:[#allocation2 + $0xd0] sm:$0xff] %v486
  %543 = vst [vmem:[#allocation2 + $0xd8] sm:$0xff] %v385
  %544 = vst [vmem:[#allocation2 + $0xe0] sm:$0xff] %v387
  %545 = vst [vmem:[#allocation2 + $0xe8] sm:$0xff] %v489
  %546 = vst [vmem:[#allocation2 + $0xf0] sm:$0xff] %v391
  %547 = vst [vmem:[#allocation2 + $0xf8] sm:$0xff] %v393
  %548 = vst [vmem:[#allocation2 + $0x100] sm:$0xff] %v494
  %549 = vst [vmem:[#allocation2 + $0x108] sm:$0xff] %v395
  %550 = vst [vmem:[#allocation2 + $0x110] sm:$0xff] %v397
  %551 = vst [vmem:[#allocation2 + $0x118] sm:$0xff] %v497
  %552 = vst [vmem:[#allocation2 + $0x120] sm:$0xff] %v401
  %553 = vst [vmem:[#allocation2 + $0x128] sm:$0xff] %v403
  %554 = vst [vmem:[#allocation2 + $0x130] sm:$0xff] %v502
  %555 = vst [vmem:[#allocation2 + $0x138] sm:$0xff] %v405
  %556 = vst [vmem:[#allocation2 + $0x140] sm:$0xff] %v407
  %557 = vst [vmem:[#allocation2 + $0x148] sm:$0xff] %v505
  %558 = vst [vmem:[#allocation2 + $0x150] sm:$0xff] %v411
  %559 = vst [vmem:[#allocation2 + $0x158] sm:$0xff] %v413
  %560 = vst [vmem:[#allocation2 + $0x160] sm:$0xff] %v510
  %561 = vst [vmem:[#allocation2 + $0x168] sm:$0xff] %v415
  %562 = vst [vmem:[#allocation2 + $0x170] sm:$0xff] %v417
  %563 = vst [vmem:[#allocation2 + $0x178] sm:$0xff] %v513
  %v564 = vld [vmem:[%s7] sm:$0xff]
  %v565 = vld [vmem:[%s7 + $0x8] sm:$0xf]
  %v566 = vld [vmem:[%s7 + $0xc] sm:$0xff]
  %v567 = vld [vmem:[%s7 + $0x14] sm:$0xf]
  %v568 = vld [vmem:[%s7 + $0x18] sm:$0xff]
  %v569 = vld [vmem:[%s7 + $0x20] sm:$0xf]
  %v570 = vld [vmem:[%s7 + $0x24] sm:$0xff]
  %v571 = vld [vmem:[%s7 + $0x2c] sm:$0xf]
  %v572 = vld [vmem:[%s7 + $0x30] sm:$0xff]
  %v573 = vld [vmem:[%s7 + $0x38] sm:$0xf]
  %v574 = vld [vmem:[%s7 + $0x3c] sm:$0xff]
  %v575 = vld [vmem:[%s7 + $0x44] sm:$0xf]
  %v576 = vld [vmem:[%s7 + $0x48] sm:$0xff]
  %v577 = vld [vmem:[%s7 + $0x50] sm:$0xf]
  %v578 = vld [vmem:[%s7 + $0x54] sm:$0xff]
  %v579 = vld [vmem:[%s7 + $0x5c] sm:$0xf]
  %v580 = vld [vmem:[%s7 + $0x60] sm:$0xff]
  %v581 = vld [vmem:[%s7 + $0x68] sm:$0xf]
  %v582 = vld [vmem:[%s7 + $0x6c] sm:$0xff]
  %v583 = vld [vmem:[%s7 + $0x74] sm:$0xf]
  %v584 = vld [vmem:[%s7 + $0x78] sm:$0xff]
  %v585 = vld [vmem:[%s7 + $0x80] sm:$0xf]
  %v586 = vld [vmem:[%s7 + $0x84] sm:$0xff]
  %v587 = vld [vmem:[%s7 + $0x8c] sm:$0xf]
  %v588 = vld [vmem:[%s7 + $0x90] sm:$0xff]
  %v589 = vld [vmem:[%s7 + $0x98] sm:$0xf]
  %v590 = vld [vmem:[%s7 + $0x9c] sm:$0xff]
  %v591 = vld [vmem:[%s7 + $0xa4] sm:$0xf]
  %v592 = vld [vmem:[%s7 + $0xa8] sm:$0xff]
  %v593 = vld [vmem:[%s7 + $0xb0] sm:$0xf]
  %v594 = vld [vmem:[%s7 + $0xb4] sm:$0xff]
  %v595 = vld [vmem:[%s7 + $0xbc] sm:$0xf]
  %v596 = vld [vmem:[%s8] sm:$0x7]
  %v597 = vld [vmem:[%s6] sm:$0x1]
  %v598 = vld [vmem:[%s9] sm:$0x1]
  %v599 = vld [vmem:[%s4] sm:$0xff]
  %v600 = vld [vmem:[%s4 + $0x8] sm:$0xf]
  %v601 = vld [vmem:[%s4 + $0xc] sm:$0xff]
  %v602 = vld [vmem:[%s4 + $0x14] sm:$0xf]
  %v603 = vld [vmem:[%s4 + $0x18] sm:$0xff]
  %v604 = vld [vmem:[%s4 + $0x20] sm:$0xf]
  %v605 = vld [vmem:[%s4 + $0x24] sm:$0xff]
  %v606 = vld [vmem:[%s4 + $0x2c] sm:$0xf]
  %v607 = vld [vmem:[%s4 + $0x30] sm:$0xff]
  %v608 = vld [vmem:[%s4 + $0x38] sm:$0xf]
  %v609 = vld [vmem:[%s4 + $0x3c] sm:$0xff]
  %v610 = vld [vmem:[%s4 + $0x44] sm:$0xf]
  %v611 = vld [vmem:[%s4 + $0x48] sm:$0xff]
  %v612 = vld [vmem:[%s4 + $0x50] sm:$0xf]
  %v613 = vld [vmem:[%s4 + $0x54] sm:$0xff]
  %v614 = vld [vmem:[%s4 + $0x5c] sm:$0xf]
  %v615 = vld [vmem:[%s4 + $0x60] sm:$0xff]
  %v616 = vld [vmem:[%s4 + $0x68] sm:$0xf]
  %v617 = vld [vmem:[%s4 + $0x6c] sm:$0xff]
  %v618 = vld [vmem:[%s4 + $0x74] sm:$0xf]
  %v619 = vld [vmem:[%s4 + $0x78] sm:$0xff]
  %v620 = vld [vmem:[%s4 + $0x80] sm:$0xf]
  %v621 = vld [vmem:[%s4 + $0x84] sm:$0xff]
  %v622 = vld [vmem:[%s4 + $0x8c] sm:$0xf]
  %v623 = vld [vmem:[%s4 + $0x90] sm:$0xff]
  %v624 = vld [vmem:[%s4 + $0x98] sm:$0xf]
  %v625 = vld [vmem:[%s4 + $0x9c] sm:$0xff]
  %v626 = vld [vmem:[%s4 + $0xa4] sm:$0xf]
  %v627 = vld [vmem:[%s4 + $0xa8] sm:$0xff]
  %v628 = vld [vmem:[%s4 + $0xb0] sm:$0xf]
  %v629 = vld [vmem:[%s4 + $0xb4] sm:$0xff]
  %v630 = vld [vmem:[%s4 + $0xbc] sm:$0xf]
  %s631 = scalar_lea.vmem %s4, 192
  %v632 = vld [vmem:[%s631] sm:$0xff]
  %v633 = vld [vmem:[%s631 + $0x8] sm:$0xf]
  %v634 = vld [vmem:[%s631 + $0xc] sm:$0xff]
  %v635 = vld [vmem:[%s631 + $0x14] sm:$0xf]
  %v636 = vld [vmem:[%s631 + $0x18] sm:$0xff]
  %v637 = vld [vmem:[%s631 + $0x20] sm:$0xf]
  %v638 = vld [vmem:[%s631 + $0x24] sm:$0xff]
  %v639 = vld [vmem:[%s631 + $0x2c] sm:$0xf]
  %v640 = vld [vmem:[%s631 + $0x30] sm:$0xff]
  %v641 = vld [vmem:[%s631 + $0x38] sm:$0xf]
  %v642 = vld [vmem:[%s631 + $0x3c] sm:$0xff]
  %v643 = vld [vmem:[%s631 + $0x44] sm:$0xf]
  %v644 = vld [vmem:[%s631 + $0x48] sm:$0xff]
  %v645 = vld [vmem:[%s631 + $0x50] sm:$0xf]
  %v646 = vld [vmem:[%s631 + $0x54] sm:$0xff]
  %v647 = vld [vmem:[%s631 + $0x5c] sm:$0xf]
  %v648 = vld [vmem:[%s631 + $0x60] sm:$0xff]
  %v649 = vld [vmem:[%s631 + $0x68] sm:$0xf]
  %v650 = vld [vmem:[%s631 + $0x6c] sm:$0xff]
  %v651 = vld [vmem:[%s631 + $0x74] sm:$0xf]
  %v652 = vld [vmem:[%s631 + $0x78] sm:$0xff]
  %v653 = vld [vmem:[%s631 + $0x80] sm:$0xf]
  %v654 = vld [vmem:[%s631 + $0x84] sm:$0xff]
  %v655 = vld [vmem:[%s631 + $0x8c] sm:$0xf]
  %v656 = vld [vmem:[%s631 + $0x90] sm:$0xff]
  %v657 = vld [vmem:[%s631 + $0x98] sm:$0xf]
  %v658 = vld [vmem:[%s631 + $0x9c] sm:$0xff]
  %v659 = vld [vmem:[%s631 + $0xa4] sm:$0xf]
  %v660 = vld [vmem:[%s631 + $0xa8] sm:$0xff]
  %v661 = vld [vmem:[%s631 + $0xb0] sm:$0xf]
  %v662 = vld [vmem:[%s631 + $0xb4] sm:$0xff]
  %v663 = vld [vmem:[%s631 + $0xbc] sm:$0xf]
  %s664 = smul.u32 0, 3
  %s665 = smul.addr %s664, 8
  %s666 = scalar_lea.vmem [#allocation2], %s665
  %v667 = vld [vmem:[%s666] sm:$0xff]
  %v668 = vld [vmem:[%s666 + $0x8] sm:$0xff]
  %v669 = vld [vmem:[%s666 + $0x10] sm:$0xff]
  %v670 = vld [vmem:[%s666 + $0x18] sm:$0xff]
  %v671 = vld [vmem:[%s666 + $0x20] sm:$0xff]
  %v672 = vld [vmem:[%s666 + $0x28] sm:$0xff]
  %v705 = vunpack.c.l.b16 %v632
  %v706 = vunpack.c.h.b16 %v632
  %v707 = vunpack.c.l.b16 %v633
  %v708 = vunpack.c.l.b16 %v634
  %v709 = vunpack.c.h.b16 %v634
  %v710 = vunpack.c.l.b16 %v635
  %v711 = vunpack.c.l.b16 %v636
  %v712 = vunpack.c.h.b16 %v636
  %v713 = vunpack.c.l.b16 %v637
  %v714 = vunpack.c.l.b16 %v638
  %v715 = vunpack.c.h.b16 %v638
  %v716 = vunpack.c.l.b16 %v639
  %v717 = vunpack.c.l.b16 %v640
  %v718 = vunpack.c.h.b16 %v640
  %v719 = vunpack.c.l.b16 %v641
  %v720 = vunpack.c.l.b16 %v642
  %v721 = vunpack.c.h.b16 %v642
  %v722 = vunpack.c.l.b16 %v643
  %v723 = vunpack.c.l.b16 %v644
  %v724 = vunpack.c.h.b16 %v644
  %v725 = vunpack.c.l.b16 %v645
  %v726 = vunpack.c.l.b16 %v646
  %v727 = vunpack.c.h.b16 %v646
  %v728 = vunpack.c.l.b16 %v647
  %v729 = vunpack.c.l.b16 %v648
  %v730 = vunpack.c.h.b16 %v648
  %v731 = vunpack.c.l.b16 %v649
  %v732 = vunpack.c.l.b16 %v650
  %v733 = vunpack.c.h.b16 %v650
  %v734 = vunpack.c.l.b16 %v651
  %v735 = vunpack.c.l.b16 %v652
  %v736 = vunpack.c.h.b16 %v652
  %v737 = vunpack.c.l.b16 %v653
  %v738 = vunpack.c.l.b16 %v654
  %v739 = vunpack.c.h.b16 %v654
  %v740 = vunpack.c.l.b16 %v655
  %v741 = vunpack.c.l.b16 %v656
  %v742 = vunpack.c.h.b16 %v656
  %v743 = vunpack.c.l.b16 %v657
  %v744 = vunpack.c.l.b16 %v658
  %v745 = vunpack.c.h.b16 %v658
  %v746 = vunpack.c.l.b16 %v659
  %v747 = vunpack.c.l.b16 %v660
  %v748 = vunpack.c.h.b16 %v660
  %v749 = vunpack.c.l.b16 %v661
  %v750 = vunpack.c.l.b16 %v662
  %v751 = vunpack.c.h.b16 %v662
  %v752 = vunpack.c.l.b16 %v663
  %v753 = vpack.c.b16 %v708, %v705
  %v754 = vpack.c.b16 %v709, %v706
  %v755 = vpack.c.b16 %v710, %v707
  %v756 = vpack.c.b16 %v714, %v711
  %v757 = vpack.c.b16 %v715, %v712
  %v758 = vpack.c.b16 %v716, %v713
  %v759 = vpack.c.b16 %v720, %v717
  %v760 = vpack.c.b16 %v721, %v718
  %v761 = vpack.c.b16 %v722, %v719
  %v762 = vpack.c.b16 %v726, %v723
  %v763 = vpack.c.b16 %v727, %v724
  %v764 = vpack.c.b16 %v728, %v725
  %v765 = vpack.c.b16 %v732, %v729
  %v766 = vpack.c.b16 %v733, %v730
  %v767 = vpack.c.b16 %v734, %v731
  %v768 = vpack.c.b16 %v738, %v735
  %v769 = vpack.c.b16 %v739, %v736
  %v770 = vpack.c.b16 %v740, %v737
  %v771 = vpack.c.b16 %v744, %v741
  %v772 = vpack.c.b16 %v745, %v742
  %v773 = vpack.c.b16 %v746, %v743
  %v774 = vpack.c.b16 %v750, %v747
  %v775 = vpack.c.b16 %v751, %v748
  %v776 = vpack.c.b16 %v752, %v749
  %801 = vmatprep.subr.bf16.mxu0 %v754
  %802 = vmatpush1.bf16.msra.mxu0 %v753
  %803 = vmatprep.subr.bf16.mxu0 %v757
  %804 = vmatpush1.bf16.msra.mxu0 %v756
  %805 = vmatprep.subr.bf16.mxu0 %v760
  %806 = vmatpush1.bf16.msra.mxu0 %v759
  %807 = vmatprep.subr.bf16.mxu0 %v763
  %808 = vmatpush1.bf16.msra.mxu0 %v762
  %809 = vmatprep.subr.bf16.mxu0 %v766
  %810 = vmatpush1.bf16.msra.mxu0 %v765
  %811 = vmatprep.subr.bf16.mxu0 %v769
  %812 = vmatpush1.bf16.msra.mxu0 %v768
  %813 = vmatprep.subr.bf16.mxu0 %v772
  %814 = vmatpush1.bf16.msra.mxu0 %v771
  %815 = vmatprep.subr.bf16.mxu0 %v775
  %816 = vmatpush1.bf16.msra.mxu0 %v774
  %817 = vmatprep.subr.bf16.mxu0 0
  %818 = vmatpush1.bf16.msra.mxu0 0
  %819 = vmatprep.subr.bf16.mxu0 0
  %820 = vmatpush1.bf16.msra.mxu0 0
  %821 = vmatprep.subr.bf16.mxu0 0
  %822 = vmatpush1.bf16.msra.mxu0 0
  %823 = vmatprep.subr.bf16.mxu0 0
  %824 = vmatpush1.bf16.msra.mxu0 0
  %825 = vmatprep.subr.bf16.mxu0 0
  %826 = vmatpush1.bf16.msra.mxu0 0
  %827 = vmatprep.subr.bf16.mxu0 0
  %828 = vmatpush1.bf16.msra.mxu0 0
  %829 = vmatprep.subr.bf16.mxu0 0
  %830 = vmatpush1.bf16.msra.mxu0 0
  %831 = vmatprep.subr.bf16.mxu0 0
  %832 = vmatpush1.bf16.msra.mxu0 0
  %833 = vmatprep.mubr.bf16.mxu0 0
  %834 = vmatmul.mubr.bf16.gmra.mrb[0].mxu0 0
  %v835 = vpop.f32.mrb[0].mxu0
  %v836 = vadd.f32 0.0, %v835
  %v837 = vpop.f32.mrb[0].mxu0
  %v838 = vadd.f32 0.0, %v837
  %v839 = vpop.f32.mrb[0].mxu0
  %v840 = vadd.f32 0.0, %v839
  %v841 = vpop.f32.mrb[0].mxu0
  %v842 = vadd.f32 0.0, %v841
  %843 = vdwg.mxu0
  %844 = vmatprep.subr.bf16.mxu0 0
  %845 = vmatpush1.bf16.msra.mxu0 %v755
  %846 = vmatprep.subr.bf16.mxu0 0
  %847 = vmatpush1.bf16.msra.mxu0 %v758
  %848 = vmatprep.subr.bf16.mxu0 0
  %849 = vmatpush1.bf16.msra.mxu0 %v761
  %850 = vmatprep.subr.bf16.mxu0 0
  %851 = vmatpush1.bf16.msra.mxu0 %v764
  %852 = vmatprep.subr.bf16.mxu0 0
  %853 = vmatpush1.bf16.msra.mxu0 %v767
  %854 = vmatprep.subr.bf16.mxu0 0
  %855 = vmatpush1.bf16.msra.mxu0 %v770
  %856 = vmatprep.subr.bf16.mxu0 0
  %857 = vmatpush1.bf16.msra.mxu0 %v773
  %858 = vmatprep.subr.bf16.mxu0 0
  %859 = vmatpush1.bf16.msra.mxu0 %v776
  %860 = vmatprep.subr.bf16.mxu0 0
  %861 = vmatpush1.bf16.msra.mxu0 0
  %862 = vmatprep.subr.bf16.mxu0 0
  %863 = vmatpush1.bf16.msra.mxu0 0
  %864 = vmatprep.subr.bf16.mxu0 0
  %865 = vmatpush1.bf16.msra.mxu0 0
  %866 = vmatprep.subr.bf16.mxu0 0
  %867 = vmatpush1.bf16.msra.mxu0 0
  %868 = vmatprep.subr.bf16.mxu0 0
  %869 = vmatpush1.bf16.msra.mxu0 0
  %870 = vmatprep.subr.bf16.mxu0 0
  %871 = vmatpush1.bf16.msra.mxu0 0
  %872 = vmatprep.subr.bf16.mxu0 0
  %873 = vmatpush1.bf16.msra.mxu0 0
  %874 = vmatprep.subr.bf16.mxu0 0
  %875 = vmatpush1.bf16.msra.mxu0 0
  %876 = vmatprep.mubr.bf16.mxu0 0
  %877 = vmatmul.mubr.bf16.gmra.mrb[0].mxu0 0
  %v878 = vpop.f32.mrb[0].mxu0
  %v879 = vadd.f32 0.0, %v878
  %v880 = vpop.f32.mrb[0].mxu0
  %v881 = vpop.f32.mrb[0].mxu0
  %v882 = vadd.f32 0.0, %v881
  %v883 = vpop.f32.mrb[0].mxu0
  %884 = vdwg.mxu0
  %v917 = vunpack.c.l.b16 %v599
  %v918 = vunpack.c.h.b16 %v599
  %v919 = vunpack.c.l.b16 %v600
  %v920 = vunpack.c.l.b16 %v601
  %v921 = vunpack.c.h.b16 %v601
  %v922 = vunpack.c.l.b16 %v602
  %v923 = vunpack.c.l.b16 %v603
  %v924 = vunpack.c.h.b16 %v603
  %v925 = vunpack.c.l.b16 %v604
  %v926 = vunpack.c.l.b16 %v605
  %v927 = vunpack.c.h.b16 %v605
  %v928 = vunpack.c.l.b16 %v606
  %v929 = vunpack.c.l.b16 %v607
  %v930 = vunpack.c.h.b16 %v607
  %v931 = vunpack.c.l.b16 %v608
  %v932 = vunpack.c.l.b16 %v609
  %v933 = vunpack.c.h.b16 %v609
  %v934 = vunpack.c.l.b16 %v610
  %v935 = vunpack.c.l.b16 %v611
  %v936 = vunpack.c.h.b16 %v611
  %v937 = vunpack.c.l.b16 %v612
  %v938 = vunpack.c.l.b16 %v613
  %v939 = vunpack.c.h.b16 %v613
  %v940 = vunpack.c.l.b16 %v614
  %v941 = vunpack.c.l.b16 %v615
  %v942 = vunpack.c.h.b16 %v615
  %v943 = vunpack.c.l.b16 %v616
  %v944 = vunpack.c.l.b16 %v617
  %v945 = vunpack.c.h.b16 %v617
  %v946 = vunpack.c.l.b16 %v618
  %v947 = vunpack.c.l.b16 %v619
  %v948 = vunpack.c.h.b16 %v619
  %v949 = vunpack.c.l.b16 %v620
  %v950 = vunpack.c.l.b16 %v621
  %v951 = vunpack.c.h.b16 %v621
  %v952 = vunpack.c.l.b16 %v622
  %v953 = vunpack.c.l.b16 %v623
  %v954 = vunpack.c.h.b16 %v623
  %v955 = vunpack.c.l.b16 %v624
  %v956 = vunpack.c.l.b16 %v625
  %v957 = vunpack.c.h.b16 %v625
  %v958 = vunpack.c.l.b16 %v626
  %v959 = vunpack.c.l.b16 %v627
  %v960 = vunpack.c.h.b16 %v627
  %v961 = vunpack.c.l.b16 %v628
  %v962 = vunpack.c.l.b16 %v629
  %v963 = vunpack.c.h.b16 %v629
  %v964 = vunpack.c.l.b16 %v630
  %v965 = vpack.c.b16 %v920, %v917
  %v966 = vpack.c.b16 %v921, %v918
  %v967 = vpack.c.b16 %v922, %v919
  %v968 = vpack.c.b16 %v926, %v923
  %v969 = vpack.c.b16 %v927, %v924
  %v970 = vpack.c.b16 %v928, %v925
  %v971 = vpack.c.b16 %v932, %v929
  %v972 = vpack.c.b16 %v933, %v930
  %v973 = vpack.c.b16 %v934, %v931
  %v974 = vpack.c.b16 %v938, %v935
  %v975 = vpack.c.b16 %v939, %v936
  %v976 = vpack.c.b16 %v940, %v937
  %v977 = vpack.c.b16 %v944, %v941
  %v978 = vpack.c.b16 %v945, %v942
  %v979 = vpack.c.b16 %v946, %v943
  %v980 = vpack.c.b16 %v950, %v947
  %v981 = vpack.c.b16 %v951, %v948
  %v982 = vpack.c.b16 %v952, %v949
  %v983 = vpack.c.b16 %v956, %v953
  %v984 = vpack.c.b16 %v957, %v954
  %v985 = vpack.c.b16 %v958, %v955
  %v986 = vpack.c.b16 %v962, %v959
  %v987 = vpack.c.b16 %v963, %v960
  %v988 = vpack.c.b16 %v964, %v961
  %1013 = vmatprep.subr.bf16.mxu0 %v966
  %1014 = vmatpush1.bf16.msra.mxu0 %v965
  %1015 = vmatprep.subr.bf16.mxu0 %v969
  %1016 = vmatpush1.bf16.msra.mxu0 %v968
  %1017 = vmatprep.subr.bf16.mxu0 %v972
  %1018 = vmatpush1.bf16.msra.mxu0 %v971
  %1019 = vmatprep.subr.bf16.mxu0 %v975
  %1020 = vmatpush1.bf16.msra.mxu0 %v974
  %1021 = vmatprep.subr.bf16.mxu0 %v978
  %1022 = vmatpush1.bf16.msra.mxu0 %v977
  %1023 = vmatprep.subr.bf16.mxu0 %v981
  %1024 = vmatpush1.bf16.msra.mxu0 %v980
  %1025 = vmatprep.subr.bf16.mxu0 %v984
  %1026 = vmatpush1.bf16.msra.mxu0 %v983
  %1027 = vmatprep.subr.bf16.mxu0 %v987
  %1028 = vmatpush1.bf16.msra.mxu0 %v986
  %1029 = vmatprep.subr.bf16.mxu0 0
  %1030 = vmatpush1.bf16.msra.mxu0 0
  %1031 = vmatprep.subr.bf16.mxu0 0
  %1032 = vmatpush1.bf16.msra.mxu0 0
  %1033 = vmatprep.subr.bf16.mxu0 0
  %1034 = vmatpush1.bf16.msra.mxu0 0
  %1035 = vmatprep.subr.bf16.mxu0 0
  %1036 = vmatpush1.bf16.msra.mxu0 0
  %1037 = vmatprep.subr.bf16.mxu0 0
  %1038 = vmatpush1.bf16.msra.mxu0 0
  %1039 = vmatprep.subr.bf16.mxu0 0
  %1040 = vmatpush1.bf16.msra.mxu0 0
  %1041 = vmatprep.subr.bf16.mxu0 0
  %1042 = vmatpush1.bf16.msra.mxu0 0
  %1043 = vmatprep.subr.bf16.mxu0 0
  %1044 = vmatpush1.bf16.msra.mxu0 0
  %1045 = vmatprep.mubr.bf16.mxu0 0
  %1046 = vmatmul.mubr.bf16.gmra.mrb[0].mxu0 0
  %v1047 = vpop.f32.mrb[0].mxu0
  %v1048 = vadd.f32 0.0, %v1047
  %v1049 = vpop.f32.mrb[0].mxu0
  %v1050 = vadd.f32 0.0, %v1049
  %v1051 = vpop.f32.mrb[0].mxu0
  %v1052 = vadd.f32 0.0, %v1051
  %v1053 = vpop.f32.mrb[0].mxu0
  %v1054 = vadd.f32 0.0, %v1053
  %1055 = vdwg.mxu0
  %1056 = vmatprep.subr.bf16.mxu0 0
  %1057 = vmatpush1.bf16.msra.mxu0 %v967
  %1058 = vmatprep.subr.bf16.mxu0 0
  %1059 = vmatpush1.bf16.msra.mxu0 %v970
  %1060 = vmatprep.subr.bf16.mxu0 0
  %1061 = vmatpush1.bf16.msra.mxu0 %v973
  %1062 = vmatprep.subr.bf16.mxu0 0
  %1063 = vmatpush1.bf16.msra.mxu0 %v976
  %1064 = vmatprep.subr.bf16.mxu0 0
  %1065 = vmatpush1.bf16.msra.mxu0 %v979
  %1066 = vmatprep.subr.bf16.mxu0 0
  %1067 = vmatpush1.bf16.msra.mxu0 %v982
  %1068 = vmatprep.subr.bf16.mxu0 0
  %1069 = vmatpush1.bf16.msra.mxu0 %v985
  %1070 = vmatprep.subr.bf16.mxu0 0
  %1071 = vmatpush1.bf16.msra.mxu0 %v988
  %1072 = vmatprep.subr.bf16.mxu0 0
  %1073 = vmatpush1.bf16.msra.mxu0 0
  %1074 = vmatprep.subr.bf16.mxu0 0
  %1075 = vmatpush1.bf16.msra.mxu0 0
  %1076 = vmatprep.subr.bf16.mxu0 0
  %1077 = vmatpush1.bf16.msra.mxu0 0
  %1078 = vmatprep.subr.bf16.mxu0 0
  %1079 = vmatpush1.bf16.msra.mxu0 0
  %1080 = vmatprep.subr.bf16.mxu0 0
  %1081 = vmatpush1.bf16.msra.mxu0 0
  %1082 = vmatprep.subr.bf16.mxu0 0
  %1083 = vmatpush1.bf16.msra.mxu0 0
  %1084 = vmatprep.subr.bf16.mxu0 0
  %1085 = vmatpush1.bf16.msra.mxu0 0
  %1086 = vmatprep.subr.bf16.mxu0 0
  %1087 = vmatpush1.bf16.msra.mxu0 0
  %1088 = vmatprep.mubr.bf16.mxu0 0
  %1089 = vmatmul.mubr.bf16.gmra.mrb[0].mxu0 0
  %v1090 = vpop.f32.mrb[0].mxu0
  %v1091 = vadd.f32 0.0, %v1090
  %v1092 = vpop.f32.mrb[0].mxu0
  %v1093 = vpop.f32.mrb[0].mxu0
  %v1094 = vadd.f32 0.0, %v1093
  %v1095 = vpop.f32.mrb[0].mxu0
  %1096 = vdwg.mxu0
  %v1097 = vadd.f32 %v667, %v1048
  %v1098 = vadd.f32 %v670, %v1052
  %v1099 = vxor.u32 %v1097, 2147483648
  %v1100 = vxor.u32 %v1098, 2147483648
  %v1101 = vmul.f32 %v1099, 1.442695
  %v1102 = vpow.pop %v1101
  %v1103 = vmul.f32 %v1100, 1.442695
  %v1104 = vpow.pop %v1103
  %v1105 = vadd.f32 %v1102, 1.0
  %v1106 = vadd.f32 %v1104, 1.0
  %v1107 = vrcp.pop %v1105
  %v1108 = vmul.f32 1.0, %v1107
  %v1109 = vrcp.pop %v1106
  %v1110 = vmul.f32 1.0, %v1109
  %v1111 = vadd.f32 %v668, %v1050
  %v1112 = vadd.f32 %v671, %v1054
  %v1113 = vxor.u32 %v1111, 2147483648
  %v1114 = vxor.u32 %v1112, 2147483648
  %v1115 = vmul.f32 %v1113, 1.442695
  %v1116 = vpow.pop %v1115
  %v1117 = vmul.f32 %v1114, 1.442695
  %v1118 = vpow.pop %v1117
  %v1119 = vadd.f32 %v1116, 1.0
  %v1120 = vadd.f32 %v1118, 1.0
  %v1121 = vrcp.pop %v1119
  %v1122 = vmul.f32 1.0, %v1121
  %v1123 = vrcp.pop %v1120
  %v1124 = vmul.f32 1.0, %v1123
  %v1126 = vlaneseq
  %v1127 = vshrl.u32 %v1126, 7
  %v1128 = vsub.s32 0, %v1127
  %v1129 = vrot.slane %v597, %v1128
  %v1131 = vadd.f32 %v1091, %v1129
  %v1132 = vadd.f32 %v1094, %v1129
  %v1133 = vmul.f32 %v1108, %v1131
  %v1134 = vmul.f32 %v1110, %v1132
  %v1135 = vadd.f32 %v669, %v1133
  %v1136 = vadd.f32 %v672, %v1134
  %v1137 = vtanh.pop %v1135
  %v1138 = vtanh.pop %v1136
  %v1139 = vsub.f32 1.0, %v1122
  %v1140 = vsub.f32 1.0, %v1124
  %v1141 = vmul.f32 %v1139, %v1137
  %v1142 = vmul.f32 %v1140, %v1138
  %v1143 = vmul.f32 %v1122, 0.0
  %v1144 = vmul.f32 %v1124, 0.0
  %v1145 = vadd.f32 %v1141, %v1143
  %v1146 = vadd.f32 %v1142, %v1144
  %v1147 = vpack.c.bf16 %v1146, %v1145
  %v1149 = vlaneseq
  %v1150 = vshrl.u32 %v1149, 7
  %v1151 = vsub.s32 0, %v1150
  %v1152 = vrot.slane %v596, %v1151
  %v1153 = vlaneseq
  %v1154 = vshrl.u32 %v1153, 7
  %v1155 = vsub.s32 1, %v1154
  %v1156 = vrot.slane %v596, %v1155
  %v1157 = vlaneseq
  %v1158 = vshrl.u32 %v1157, 7
  %v1159 = vsub.s32 2, %v1158
  %v1160 = vrot.slane %v596, %v1159
  %v1196 = vunpack.c.l.b16 %v564
  %v1197 = vunpack.c.h.b16 %v564
  %v1198 = vunpack.c.l.b16 %v565
  %v1199 = vunpack.c.l.b16 %v566
  %v1200 = vunpack.c.h.b16 %v566
  %v1201 = vunpack.c.l.b16 %v567
  %v1202 = vunpack.c.l.b16 %v568
  %v1203 = vunpack.c.h.b16 %v568
  %v1204 = vunpack.c.l.b16 %v569
  %v1205 = vunpack.c.l.b16 %v570
  %v1206 = vunpack.c.h.b16 %v570
  %v1207 = vunpack.c.l.b16 %v571
  %v1208 = vunpack.c.l.b16 %v572
  %v1209 = vunpack.c.h.b16 %v572
  %v1210 = vunpack.c.l.b16 %v573
  %v1211 = vunpack.c.l.b16 %v574
  %v1212 = vunpack.c.h.b16 %v574
  %v1213 = vunpack.c.l.b16 %v575
  %v1214 = vunpack.c.l.b16 %v576
  %v1215 = vunpack.c.h.b16 %v576
  %v1216 = vunpack.c.l.b16 %v577
  %v1217 = vunpack.c.l.b16 %v578
  %v1218 = vunpack.c.h.b16 %v578
  %v1219 = vunpack.c.l.b16 %v579
  %v1220 = vunpack.c.l.b16 %v580
  %v1221 = vunpack.c.h.b16 %v580
  %v1222 = vunpack.c.l.b16 %v581
  %v1223 = vunpack.c.l.b16 %v582
  %v1224 = vunpack.c.h.b16 %v582
  %v1225 = vunpack.c.l.b16 %v583
  %v1226 = vunpack.c.l.b16 %v584
  %v1227 = vunpack.c.h.b16 %v584
  %v1228 = vunpack.c.l.b16 %v585
  %v1229 = vunpack.c.l.b16 %v586
  %v1230 = vunpack.c.h.b16 %v586
  %v1231 = vunpack.c.l.b16 %v587
  %v1232 = vunpack.c.l.b16 %v588
  %v1233 = vunpack.c.h.b16 %v588
  %v1234 = vunpack.c.l.b16 %v589
  %v1235 = vunpack.c.l.b16 %v590
  %v1236 = vunpack.c.h.b16 %v590
  %v1237 = vunpack.c.l.b16 %v591
  %v1238 = vunpack.c.l.b16 %v592
  %v1239 = vunpack.c.h.b16 %v592
  %v1240 = vunpack.c.l.b16 %v593
  %v1241 = vunpack.c.l.b16 %v594
  %v1242 = vunpack.c.h.b16 %v594
  %v1243 = vunpack.c.l.b16 %v595
  %v1244 = vpack.c.b16 %v1199, %v1196
  %v1245 = vpack.c.b16 %v1200, %v1197
  %v1246 = vpack.c.b16 %v1201, %v1198
  %v1247 = vpack.c.b16 %v1205, %v1202
  %v1248 = vpack.c.b16 %v1206, %v1203
  %v1249 = vpack.c.b16 %v1207, %v1204
  %v1250 = vpack.c.b16 %v1211, %v1208
  %v1251 = vpack.c.b16 %v1212, %v1209
  %v1252 = vpack.c.b16 %v1213, %v1210
  %v1253 = vpack.c.b16 %v1217, %v1214
  %v1254 = vpack.c.b16 %v1218, %v1215
  %v1255 = vpack.c.b16 %v1219, %v1216
  %v1256 = vpack.c.b16 %v1223, %v1220
  %v1257 = vpack.c.b16 %v1224, %v1221
  %v1258 = vpack.c.b16 %v1225, %v1222
  %v1259 = vpack.c.b16 %v1229, %v1226
  %v1260 = vpack.c.b16 %v1230, %v1227
  %v1261 = vpack.c.b16 %v1231, %v1228
  %v1262 = vpack.c.b16 %v1235, %v1232
  %v1263 = vpack.c.b16 %v1236, %v1233
  %v1264 = vpack.c.b16 %v1237, %v1234
  %v1265 = vpack.c.b16 %v1241, %v1238
  %v1266 = vpack.c.b16 %v1242, %v1239
  %v1267 = vpack.c.b16 %v1243, %v1240
  %1292 = vmatprep.subr.bf16.mxu0 %v1245
  %1293 = vmatpush1.bf16.msra.mxu0 %v1244
  %1294 = vmatprep.subr.bf16.mxu0 %v1248
  %1295 = vmatpush1.bf16.msra.mxu0 %v1247
  %1296 = vmatprep.subr.bf16.mxu0 %v1251
  %1297 = vmatpush1.bf16.msra.mxu0 %v1250
  %1298 = vmatprep.subr.bf16.mxu0 %v1254
  %1299 = vmatpush1.bf16.msra.mxu0 %v1253
  %1300 = vmatprep.subr.bf16.mxu0 %v1257
  %1301 = vmatpush1.bf16.msra.mxu0 %v1256
  %1302 = vmatprep.subr.bf16.mxu0 %v1260
  %1303 = vmatpush1.bf16.msra.mxu0 %v1259
  %1304 = vmatprep.subr.bf16.mxu0 %v1263
  %1305 = vmatpush1.bf16.msra.mxu0 %v1262
  %1306 = vmatprep.subr.bf16.mxu0 %v1266
  %1307 = vmatpush1.bf16.msra.mxu0 %v1265
  %1308 = vmatprep.subr.bf16.mxu0 0
  %1309 = vmatpush1.bf16.msra.mxu0 0
  %1310 = vmatprep.subr.bf16.mxu0 0
  %1311 = vmatpush1.bf16.msra.mxu0 0
  %1312 = vmatprep.subr.bf16.mxu0 0
  %1313 = vmatpush1.bf16.msra.mxu0 0
  %1314 = vmatprep.subr.bf16.mxu0 0
  %1315 = vmatpush1.bf16.msra.mxu0 0
  %1316 = vmatprep.subr.bf16.mxu0 0
  %1317 = vmatpush1.bf16.msra.mxu0 0
  %1318 = vmatprep.subr.bf16.mxu0 0
  %1319 = vmatpush1.bf16.msra.mxu0 0
  %1320 = vmatprep.subr.bf16.mxu0 0
  %1321 = vmatpush1.bf16.msra.mxu0 0
  %1322 = vmatprep.subr.bf16.mxu0 0
  %1323 = vmatpush1.bf16.msra.mxu0 0
  %1324 = vmatprep.mubr.bf16.mxu0 0
  %1325 = vmatmul.mubr.bf16.gmra.mrb[0].mxu0 %v1147
  %v1326 = vpop.f32.mrb[0].mxu0
  %v1327 = vadd.f32 %v1152, %v1326
  %v1328 = vpop.f32.mrb[0].mxu0
  %v1329 = vadd.f32 %v1156, %v1328
  %v1330 = vpop.f32.mrb[0].mxu0
  %v1331 = vadd.f32 %v1152, %v1330
  %v1332 = vpop.f32.mrb[0].mxu0
  %v1333 = vadd.f32 %v1156, %v1332
  %1334 = vdwg.mxu0
  %1335 = vmatprep.subr.bf16.mxu0 0
  %1336 = vmatpush1.bf16.msra.mxu0 %v1246
  %1337 = vmatprep.subr.bf16.mxu0 0
  %1338 = vmatpush1.bf16.msra.mxu0 %v1249
  %1339 = vmatprep.subr.bf16.mxu0 0
  %1340 = vmatpush1.bf16.msra.mxu0 %v1252
  %1341 = vmatprep.subr.bf16.mxu0 0
  %1342 = vmatpush1.bf16.msra.mxu0 %v1255
  %1343 = vmatprep.subr.bf16.mxu0 0
  %1344 = vmatpush1.bf16.msra.mxu0 %v1258
  %1345 = vmatprep.subr.bf16.mxu0 0
  %1346 = vmatpush1.bf16.msra.mxu0 %v1261
  %1347 = vmatprep.subr.bf16.mxu0 0
  %1348 = vmatpush1.bf16.msra.mxu0 %v1264
  %1349 = vmatprep.subr.bf16.mxu0 0
  %1350 = vmatpush1.bf16.msra.mxu0 %v1267
  %1351 = vmatprep.subr.bf16.mxu0 0
  %1352 = vmatpush1.bf16.msra.mxu0 0
  %1353 = vmatprep.subr.bf16.mxu0 0
  %1354 = vmatpush1.bf16.msra.mxu0 0
  %1355 = vmatprep.subr.bf16.mxu0 0
  %1356 = vmatpush1.bf16.msra.mxu0 0
  %1357 = vmatprep.subr.bf16.mxu0 0
  %1358 = vmatpush1.bf16.msra.mxu0 0
  %1359 = vmatprep.subr.bf16.mxu0 0
  %1360 = vmatpush1.bf16.msra.mxu0 0
  %1361 = vmatprep.subr.bf16.mxu0 0
  %1362 = vmatpush1.bf16.msra.mxu0 0
  %1363 = vmatprep.subr.bf16.mxu0 0
  %1364 = vmatpush1.bf16.msra.mxu0 0
  %1365 = vmatprep.subr.bf16.mxu0 0
  %1366 = vmatpush1.bf16.msra.mxu0 0
  %1367 = vmatprep.mubr.bf16.mxu0 0
  %1368 = vmatmul.mubr.bf16.gmra.mrb[0].mxu0 %v1147
  %v1369 = vpop.f32.mrb[0].mxu0
  %v1370 = vadd.f32 %v1160, %v1369
  %v1371 = vpop.f32.mrb[0].mxu0
  %v1372 = vpop.f32.mrb[0].mxu0
  %v1373 = vadd.f32 %v1160, %v1372
  %v1374 = vpop.f32.mrb[0].mxu0
  %1375 = vdwg.mxu0
  %v1376 = vadd.f32 %v1327, %v836
  %v1377 = vadd.f32 %v1331, %v840
  %v1378 = vxor.u32 %v1376, 2147483648
  %v1379 = vxor.u32 %v1377, 2147483648
  %v1380 = vmul.f32 %v1378, 1.442695
  %v1381 = vpow.pop %v1380
  %v1382 = vmul.f32 %v1379, 1.442695
  %v1383 = vpow.pop %v1382
  %v1384 = vadd.f32 %v1381, 1.0
  %v1385 = vadd.f32 %v1383, 1.0
  %v1386 = vrcp.pop %v1384
  %v1387 = vmul.f32 1.0, %v1386
  %v1388 = vrcp.pop %v1385
  %v1389 = vmul.f32 1.0, %v1388
  %v1390 = vadd.f32 %v1329, %v838
  %v1391 = vadd.f32 %v1333, %v842
  %v1392 = vxor.u32 %v1390, 2147483648
  %v1393 = vxor.u32 %v1391, 2147483648
  %v1394 = vmul.f32 %v1392, 1.442695
  %v1395 = vpow.pop %v1394
  %v1396 = vmul.f32 %v1393, 1.442695
  %v1397 = vpow.pop %v1396
  %v1398 = vadd.f32 %v1395, 1.0
  %v1399 = vadd.f32 %v1397, 1.0
  %v1400 = vrcp.pop %v1398
  %v1401 = vmul.f32 1.0, %v1400
  %v1402 = vrcp.pop %v1399
  %v1403 = vmul.f32 1.0, %v1402
  %v1405 = vlaneseq
  %v1406 = vshrl.u32 %v1405, 7
  %v1407 = vsub.s32 0, %v1406
  %v1408 = vrot.slane %v598, %v1407
  %v1410 = vadd.f32 %v879, %v1408
  %v1411 = vadd.f32 %v882, %v1408
  %v1412 = vmul.f32 %v1387, %v1410
  %v1413 = vmul.f32 %v1389, %v1411
  %v1414 = vadd.f32 %v1370, %v1412
  %v1415 = vadd.f32 %v1373, %v1413
  %v1416 = vtanh.pop %v1414
  %v1417 = vtanh.pop %v1415
  %v1418 = vsub.f32 1.0, %v1401
  %v1419 = vsub.f32 1.0, %v1403
  %v1420 = vmul.f32 %v1418, %v1416
  %v1421 = vmul.f32 %v1419, %v1417
  %v1422 = vmul.f32 %v1401, 0.0
  %v1423 = vmul.f32 %v1403, 0.0
  %v1424 = vadd.f32 %v1420, %v1422
  %v1425 = vadd.f32 %v1421, %v1423
  %s1426 = smul.u32 2, 3
  %s1427 = smul.addr %s1426, 8
  %s1428 = scalar_lea.vmem [#allocation2], %s1427
  %v1429 = vld [vmem:[%s1428] sm:$0xff]
  %v1430 = vld [vmem:[%s1428 + $0x8] sm:$0xff]
  %v1431 = vld [vmem:[%s1428 + $0x10] sm:$0xff]
  %v1432 = vld [vmem:[%s1428 + $0x18] sm:$0xff]
  %v1433 = vld [vmem:[%s1428 + $0x20] sm:$0xff]
  %v1434 = vld [vmem:[%s1428 + $0x28] sm:$0xff]
  %v1435 = vpack.c.bf16 %v1425, %v1424
  %1436 = vmatprep.subr.bf16.mxu0 %v754
  %1437 = vmatpush1.bf16.msra.mxu0 %v753
  %1438 = vmatprep.subr.bf16.mxu0 %v757
  %1439 = vmatpush1.bf16.msra.mxu0 %v756
  %1440 = vmatprep.subr.bf16.mxu0 %v760
  %1441 = vmatpush1.bf16.msra.mxu0 %v759
  %1442 = vmatprep.subr.bf16.mxu0 %v763
  %1443 = vmatpush1.bf16.msra.mxu0 %v762
  %1444 = vmatprep.subr.bf16.mxu0 %v766
  %1445 = vmatpush1.bf16.msra.mxu0 %v765
  %1446 = vmatprep.subr.bf16.mxu0 %v769
  %1447 = vmatpush1.bf16.msra.mxu0 %v768
  %1448 = vmatprep.subr.bf16.mxu0 %v772
  %1449 = vmatpush1.bf16.msra.mxu0 %v771
  %1450 = vmatprep.subr.bf16.mxu0 %v775
  %1451 = vmatpush1.bf16.msra.mxu0 %v774
  %1452 = vmatprep.subr.bf16.mxu0 0
  %1453 = vmatpush1.bf16.msra.mxu0 0
  %1454 = vmatprep.subr.bf16.mxu0 0
  %1455 = vmatpush1.bf16.msra.mxu0 0
  %1456 = vmatprep.subr.bf16.mxu0 0
  %1457 = vmatpush1.bf16.msra.mxu0 0
  %1458 = vmatprep.subr.bf16.mxu0 0
  %1459 = vmatpush1.bf16.msra.mxu0 0
  %1460 = vmatprep.subr.bf16.mxu0 0
  %1461 = vmatpush1.bf16.msra.mxu0 0
  %1462 = vmatprep.subr.bf16.mxu0 0
  %1463 = vmatpush1.bf16.msra.mxu0 0
  %1464 = vmatprep.subr.bf16.mxu0 0
  %1465 = vmatpush1.bf16.msra.mxu0 0
  %1466 = vmatprep.subr.bf16.mxu0 0
  %1467 = vmatpush1.bf16.msra.mxu0 0
  %1468 = vmatprep.mubr.bf16.mxu0 0
  %1469 = vmatmul.mubr.bf16.gmra.mrb[0].mxu0 %v1435
  %v1470 = vpop.f32.mrb[0].mxu0
  %v1471 = vadd.f32 0.0, %v1470
  %v1472 = vpop.f32.mrb[0].mxu0
  %v1473 = vadd.f32 0.0, %v1472
  %v1474 = vpop.f32.mrb[0].mxu0
  %v1475 = vadd.f32 0.0, %v1474
  %v1476 = vpop.f32.mrb[0].mxu0
  %v1477 = vadd.f32 0.0, %v1476
  %1478 = vdwg.mxu0
  %1479 = vmatprep.subr.bf16.mxu0 0
  %1480 = vmatpush1.bf16.msra.mxu0 %v755
  %1481 = vmatprep.subr.bf16.mxu0 0
  %1482 = vmatpush1.bf16.msra.mxu0 %v758
  %1483 = vmatprep.subr.bf16.mxu0 0
  %1484 = vmatpush1.bf16.msra.mxu0 %v761
  %1485 = vmatprep.subr.bf16.mxu0 0
  %1486 = vmatpush1.bf16.msra.mxu0 %v764
  %1487 = vmatprep.subr.bf16.mxu0 0
  %1488 = vmatpush1.bf16.msra.mxu0 %v767
  %1489 = vmatprep.subr.bf16.mxu0 0
  %1490 = vmatpush1.bf16.msra.mxu0 %v770
  %1491 = vmatprep.subr.bf16.mxu0 0
  %1492 = vmatpush1.bf16.msra.mxu0 %v773
  %1493 = vmatprep.subr.bf16.mxu0 0
  %1494 = vmatpush1.bf16.msra.mxu0 %v776
  %1495 = vmatprep.subr.bf16.mxu0 0
  %1496 = vmatpush1.bf16.msra.mxu0 0
  %1497 = vmatprep.subr.bf16.mxu0 0
  %1498 = vmatpush1.bf16.msra.mxu0 0
  %1499 = vmatprep.subr.bf16.mxu0 0
  %1500 = vmatpush1.bf16.msra.mxu0 0
  %1501 = vmatprep.subr.bf16.mxu0 0
  %1502 = vmatpush1.bf16.msra.mxu0 0
  %1503 = vmatprep.subr.bf16.mxu0 0
  %1504 = vmatpush1.bf16.msra.mxu0 0
  %1505 = vmatprep.subr.bf16.mxu0 0
  %1506 = vmatpush1.bf16.msra.mxu0 0
  %1507 = vmatprep.subr.bf16.mxu0 0
  %1508 = vmatpush1.bf16.msra.mxu0 0
  %1509 = vmatprep.subr.bf16.mxu0 0
  %1510 = vmatpush1.bf16.msra.mxu0 0
  %1511 = vmatprep.mubr.bf16.mxu0 0
  %1512 = vmatmul.mubr.bf16.gmra.mrb[0].mxu0 %v1435
  %v1513 = vpop.f32.mrb[0].mxu0
  %v1514 = vadd.f32 0.0, %v1513
  %v1515 = vpop.f32.mrb[0].mxu0
  %v1516 = vpop.f32.mrb[0].mxu0
  %v1517 = vadd.f32 0.0, %v1516
  %v1518 = vpop.f32.mrb[0].mxu0
  %1519 = vdwg.mxu0
  %1520 = vmatprep.subr.bf16.mxu0 %v966
  %1521 = vmatpush1.bf16.msra.mxu0 %v965
  %1522 = vmatprep.subr.bf16.mxu0 %v969
  %1523 = vmatpush1.bf16.msra.mxu0 %v968
  %1524 = vmatprep.subr.bf16.mxu0 %v972
  %1525 = vmatpush1.bf16.msra.mxu0 %v971
  %1526 = vmatprep.subr.bf16.mxu0 %v975
  %1527 = vmatpush1.bf16.msra.mxu0 %v974
  %1528 = vmatprep.subr.bf16.mxu0 %v978
  %1529 = vmatpush1.bf16.msra.mxu0 %v977
  %1530 = vmatprep.subr.bf16.mxu0 %v981
  %1531 = vmatpush1.bf16.msra.mxu0 %v980
  %1532 = vmatprep.subr.bf16.mxu0 %v984
  %1533 = vmatpush1.bf16.msra.mxu0 %v983
  %1534 = vmatprep.subr.bf16.mxu0 %v987
  %1535 = vmatpush1.bf16.msra.mxu0 %v986
  %1536 = vmatprep.subr.bf16.mxu0 0
  %1537 = vmatpush1.bf16.msra.mxu0 0
  %1538 = vmatprep.subr.bf16.mxu0 0
  %1539 = vmatpush1.bf16.msra.mxu0 0
  %1540 = vmatprep.subr.bf16.mxu0 0
  %1541 = vmatpush1.bf16.msra.mxu0 0
  %1542 = vmatprep.subr.bf16.mxu0 0
  %1543 = vmatpush1.bf16.msra.mxu0 0
  %1544 = vmatprep.subr.bf16.mxu0 0
  %1545 = vmatpush1.bf16.msra.mxu0 0
  %1546 = vmatprep.subr.bf16.mxu0 0
  %1547 = vmatpush1.bf16.msra.mxu0 0
  %1548 = vmatprep.subr.bf16.mxu0 0
  %1549 = vmatpush1.bf16.msra.mxu0 0
  %1550 = vmatprep.subr.bf16.mxu0 0
  %1551 = vmatpush1.bf16.msra.mxu0 0
  %1552 = vmatprep.mubr.bf16.mxu0 0
  %1553 = vmatmul.mubr.bf16.gmra.mrb[0].mxu0 %v1147
  %v1554 = vpop.f32.mrb[0].mxu0
  %v1555 = vadd.f32 0.0, %v1554
  %v1556 = vpop.f32.mrb[0].mxu0
  %v1557 = vadd.f32 0.0, %v1556
  %v1558 = vpop.f32.mrb[0].mxu0
  %v1559 = vadd.f32 0.0, %v1558
  %v1560 = vpop.f32.mrb[0].mxu0
  %v1561 = vadd.f32 0.0, %v1560
  %1562 = vdwg.mxu0
  %1563 = vmatprep.subr.bf16.mxu0 0
  %1564 = vmatpush1.bf16.msra.mxu0 %v967
  %1565 = vmatprep.subr.bf16.mxu0 0
  %1566 = vmatpush1.bf16.msra.mxu0 %v970
  %1567 = vmatprep.subr.bf16.mxu0 0
  %1568 = vmatpush1.bf16.msra.mxu0 %v973
  %1569 = vmatprep.subr.bf16.mxu0 0
  %1570 = vmatpush1.bf16.msra.mxu0 %v976
  %1571 = vmatprep.subr.bf16.mxu0 0
  %1572 = vmatpush1.bf16.msra.mxu0 %v979
  %1573 = vmatprep.subr.bf16.mxu0 0
  %1574 = vmatpush1.bf16.msra.mxu0 %v982
  %1575 = vmatprep.subr.bf16.mxu0 0
  %1576 = vmatpush1.bf16.msra.mxu0 %v985
  %1577 = vmatprep.subr.bf16.mxu0 0
  %1578 = vmatpush1.bf16.msra.mxu0 %v988
  %1579 = vmatprep.subr.bf16.mxu0 0
  %1580 = vmatpush1.bf16.msra.mxu0 0
  %1581 = vmatprep.subr.bf16.mxu0 0
  %1582 = vmatpush1.bf16.msra.mxu0 0
  %1583 = vmatprep.subr.bf16.mxu0 0
  %1584 = vmatpush1.bf16.msra.mxu0 0
  %1585 = vmatprep.subr.bf16.mxu0 0
  %1586 = vmatpush1.bf16.msra.mxu0 0
  %1587 = vmatprep.subr.bf16.mxu0 0
  %1588 = vmatpush1.bf16.msra.mxu0 0
  %1589 = vmatprep.subr.bf16.mxu0 0
  %1590 = vmatpush1.bf16.msra.mxu0 0
  %1591 = vmatprep.subr.bf16.mxu0 0
  %1592 = vmatpush1.bf16.msra.mxu0 0
  %1593 = vmatprep.subr.bf16.mxu0 0
  %1594 = vmatpush1.bf16.msra.mxu0 0
  %1595 = vmatprep.mubr.bf16.mxu0 0
  %1596 = vmatmul.mubr.bf16.gmra.mrb[0].mxu0 %v1147
  %v1597 = vpop.f32.mrb[0].mxu0
  %v1598 = vadd.f32 0.0, %v1597
  %v1599 = vpop.f32.mrb[0].mxu0
  %v1600 = vpop.f32.mrb[0].mxu0
  %v1601 = vadd.f32 0.0, %v1600
  %v1602 = vpop.f32.mrb[0].mxu0
  %1603 = vdwg.mxu0
  %v1604 = vadd.f32 %v1429, %v1555
  %v1605 = vadd.f32 %v1432, %v1559
  %v1606 = vxor.u32 %v1604, 2147483648
  %v1607 = vxor.u32 %v1605, 2147483648
  %v1608 = vmul.f32 %v1606, 1.442695
  %v1609 = vpow.pop %v1608
  %v1610 = vmul.f32 %v1607, 1.442695
  %v1611 = vpow.pop %v1610
  %v1612 = vadd.f32 %v1609, 1.0
  %v1613 = vadd.f32 %v1611, 1.0
  %v1614 = vrcp.pop %v1612
  %v1615 = vmul.f32 1.0, %v1614
  %v1616 = vrcp.pop %v1613
  %v1617 = vmul.f32 1.0, %v1616
  %v1618 = vadd.f32 %v1430, %v1557
  %v1619 = vadd.f32 %v1433, %v1561
  %v1620 = vxor.u32 %v1618, 2147483648
  %v1621 = vxor.u32 %v1619, 2147483648
  %v1622 = vmul.f32 %v1620, 1.442695
  %v1623 = vpow.pop %v1622
  %v1624 = vmul.f32 %v1621, 1.442695
  %v1625 = vpow.pop %v1624
  %v1626 = vadd.f32 %v1623, 1.0
  %v1627 = vadd.f32 %v1625, 1.0
  %v1628 = vrcp.pop %v1626
  %v1629 = vmul.f32 1.0, %v1628
  %v1630 = vrcp.pop %v1627
  %v1631 = vmul.f32 1.0, %v1630
  %v1632 = vadd.f32 %v1598, %v1129
  %v1633 = vadd.f32 %v1601, %v1129
  %v1634 = vmul.f32 %v1615, %v1632
  %v1635 = vmul.f32 %v1617, %v1633
  %v1636 = vadd.f32 %v1431, %v1634
  %v1637 = vadd.f32 %v1434, %v1635
  %v1638 = vtanh.pop %v1636
  %v1639 = vtanh.pop %v1637
  %v1640 = vsub.f32 1.0, %v1629
  %v1641 = vsub.f32 1.0, %v1631
  %v1642 = vmul.f32 %v1640, %v1638
  %v1643 = vmul.f32 %v1641, %v1639
  %v1644 = vmul.f32 %v1629, %v1145
  %v1645 = vmul.f32 %v1631, %v1146
  %v1646 = vadd.f32 %v1642, %v1644
  %v1647 = vadd.f32 %v1643, %v1645
  %v1648 = vpack.c.bf16 %v1647, %v1646
  %1649 = vmatprep.subr.bf16.mxu0 %v1245
  %1650 = vmatpush1.bf16.msra.mxu0 %v1244
  %1651 = vmatprep.subr.bf16.mxu0 %v1248
  %1652 = vmatpush1.bf16.msra.mxu0 %v1247
  %1653 = vmatprep.subr.bf16.mxu0 %v1251
  %1654 = vmatpush1.bf16.msra.mxu0 %v1250
  %1655 = vmatprep.subr.bf16.mxu0 %v1254
  %1656 = vmatpush1.bf16.msra.mxu0 %v1253
  %1657 = vmatprep.subr.bf16.mxu0 %v1257
  %1658 = vmatpush1.bf16.msra.mxu0 %v1256
  %1659 = vmatprep.subr.bf16.mxu0 %v1260
  %1660 = vmatpush1.bf16.msra.mxu0 %v1259
  %1661 = vmatprep.subr.bf16.mxu0 %v1263
  %1662 = vmatpush1.bf16.msra.mxu0 %v1262
  %1663 = vmatprep.subr.bf16.mxu0 %v1266
  %1664 = vmatpush1.bf16.msra.mxu0 %v1265
  %1665 = vmatprep.subr.bf16.mxu0 0
  %1666 = vmatpush1.bf16.msra.mxu0 0
  %1667 = vmatprep.subr.bf16.mxu0 0
  %1668 = vmatpush1.bf16.msra.mxu0 0
  %1669 = vmatprep.subr.bf16.mxu0 0
  %1670 = vmatpush1.bf16.msra.mxu0 0
  %1671 = vmatprep.subr.bf16.mxu0 0
  %1672 = vmatpush1.bf16.msra.mxu0 0
  %1673 = vmatprep.subr.bf16.mxu0 0
  %1674 = vmatpush1.bf16.msra.mxu0 0
  %1675 = vmatprep.subr.bf16.mxu0 0
  %1676 = vmatpush1.bf16.msra.mxu0 0
  %1677 = vmatprep.subr.bf16.mxu0 0
  %1678 = vmatpush1.bf16.msra.mxu0 0
  %1679 = vmatprep.subr.bf16.mxu0 0
  %1680 = vmatpush1.bf16.msra.mxu0 0
  %1681 = vmatprep.mubr.bf16.mxu0 0
  %1682 = vmatmul.mubr.bf16.gmra.mrb[0].mxu0 %v1648
  %v1683 = vpop.f32.mrb[0].mxu0
  %v1684 = vadd.f32 %v1152, %v1683
  %v1685 = vpop.f32.mrb[0].mxu0
  %v1686 = vadd.f32 %v1156, %v1685
  %v1687 = vpop.f32.mrb[0].mxu0
  %v1688 = vadd.f32 %v1152, %v1687
  %v1689 = vpop.f32.mrb[0].mxu0
  %v1690 = vadd.f32 %v1156, %v1689
  %1691 = vdwg.mxu0
  %1692 = vmatprep.subr.bf16.mxu0 0
  %1693 = vmatpush1.bf16.msra.mxu0 %v1246
  %1694 = vmatprep.subr.bf16.mxu0 0
  %1695 = vmatpush1.bf16.msra.mxu0 %v1249
  %1696 = vmatprep.subr.bf16.mxu0 0
  %1697 = vmatpush1.bf16.msra.mxu0 %v1252
  %1698 = vmatprep.subr.bf16.mxu0 0
  %1699 = vmatpush1.bf16.msra.mxu0 %v1255
  %1700 = vmatprep.subr.bf16.mxu0 0
  %1701 = vmatpush1.bf16.msra.mxu0 %v1258
  %1702 = vmatprep.subr.bf16.mxu0 0
  %1703 = vmatpush1.bf16.msra.mxu0 %v1261
  %1704 = vmatprep.subr.bf16.mxu0 0
  %1705 = vmatpush1.bf16.msra.mxu0 %v1264
  %1706 = vmatprep.subr.bf16.mxu0 0
  %1707 = vmatpush1.bf16.msra.mxu0 %v1267
  %1708 = vmatprep.subr.bf16.mxu0 0
  %1709 = vmatpush1.bf16.msra.mxu0 0
  %1710 = vmatprep.subr.bf16.mxu0 0
  %1711 = vmatpush1.bf16.msra.mxu0 0
  %1712 = vmatprep.subr.bf16.mxu0 0
  %1713 = vmatpush1.bf16.msra.mxu0 0
  %1714 = vmatprep.subr.bf16.mxu0 0
  %1715 = vmatpush1.bf16.msra.mxu0 0
  %1716 = vmatprep.subr.bf16.mxu0 0
  %1717 = vmatpush1.bf16.msra.mxu0 0
  %1718 = vmatprep.subr.bf16.mxu0 0
  %1719 = vmatpush1.bf16.msra.mxu0 0
  %1720 = vmatprep.subr.bf16.mxu0 0
  %1721 = vmatpush1.bf16.msra.mxu0 0
  %1722 = vmatprep.subr.bf16.mxu0 0
  %1723 = vmatpush1.bf16.msra.mxu0 0
  %1724 = vmatprep.mubr.bf16.mxu0 0
  %1725 = vmatmul.mubr.bf16.gmra.mrb[0].mxu0 %v1648
  %v1726 = vpop.f32.mrb[0].mxu0
  %v1727 = vadd.f32 %v1160, %v1726
  %v1728 = vpop.f32.mrb[0].mxu0
  %v1729 = vpop.f32.mrb[0].mxu0
  %v1730 = vadd.f32 %v1160, %v1729
  %v1731 = vpop.f32.mrb[0].mxu0
  %1732 = vdwg.mxu0
  %v1733 = vadd.f32 %v1684, %v1471
  %v1734 = vadd.f32 %v1688, %v1475
  %v1735 = vxor.u32 %v1733, 2147483648
  %v1736 = vxor.u32 %v1734, 2147483648
  %v1737 = vmul.f32 %v1735, 1.442695
  %v1738 = vpow.pop %v1737
  %v1739 = vmul.f32 %v1736, 1.442695
  %v1740 = vpow.pop %v1739
  %v1741 = vadd.f32 %v1738, 1.0
  %v1742 = vadd.f32 %v1740, 1.0
  %v1743 = vrcp.pop %v1741
  %v1744 = vmul.f32 1.0, %v1743
  %v1745 = vrcp.pop %v1742
  %v1746 = vmul.f32 1.0, %v1745
  %v1747 = vadd.f32 %v1686, %v1473
  %v1748 = vadd.f32 %v1690, %v1477
  %v1749 = vxor.u32 %v1747, 2147483648
  %v1750 = vxor.u32 %v1748, 2147483648
  %v1751 = vmul.f32 %v1749, 1.442695
  %v1752 = vpow.pop %v1751
  %v1753 = vmul.f32 %v1750, 1.442695
  %v1754 = vpow.pop %v1753
  %v1755 = vadd.f32 %v1752, 1.0
  %v1756 = vadd.f32 %v1754, 1.0
  %v1757 = vrcp.pop %v1755
  %v1758 = vmul.f32 1.0, %v1757
  %v1759 = vrcp.pop %v1756
  %v1760 = vmul.f32 1.0, %v1759
  %v1761 = vadd.f32 %v1514, %v1408
  %v1762 = vadd.f32 %v1517, %v1408
  %v1763 = vmul.f32 %v1744, %v1761
  %v1764 = vmul.f32 %v1746, %v1762
  %v1765 = vadd.f32 %v1727, %v1763
  %v1766 = vadd.f32 %v1730, %v1764
  %v1767 = vtanh.pop %v1765
  %v1768 = vtanh.pop %v1766
  %v1769 = vsub.f32 1.0, %v1758
  %v1770 = vsub.f32 1.0, %v1760
  %v1771 = vmul.f32 %v1769, %v1767
  %v1772 = vmul.f32 %v1770, %v1768
  %v1773 = vmul.f32 %v1758, %v1424
  %v1774 = vmul.f32 %v1760, %v1425
  %v1775 = vadd.f32 %v1771, %v1773
  %v1776 = vadd.f32 %v1772, %v1774
  %s1777 = smul.u32 4, 3
  %s1778 = smul.addr %s1777, 8
  %s1779 = scalar_lea.vmem [#allocation2], %s1778
  %v1780 = vld [vmem:[%s1779] sm:$0xff]
  %v1781 = vld [vmem:[%s1779 + $0x8] sm:$0xff]
  %v1782 = vld [vmem:[%s1779 + $0x10] sm:$0xff]
  %v1783 = vld [vmem:[%s1779 + $0x18] sm:$0xff]
  %v1784 = vld [vmem:[%s1779 + $0x20] sm:$0xff]
  %v1785 = vld [vmem:[%s1779 + $0x28] sm:$0xff]
  %v1786 = vpack.c.bf16 %v1776, %v1775
  %1787 = vmatprep.subr.bf16.mxu0 %v754
  %1788 = vmatpush1.bf16.msra.mxu0 %v753
  %1789 = vmatprep.subr.bf16.mxu0 %v757
  %1790 = vmatpush1.bf16.msra.mxu0 %v756
  %1791 = vmatprep.subr.bf16.mxu0 %v760
  %1792 = vmatpush1.bf16.msra.mxu0 %v759
  %1793 = vmatprep.subr.bf16.mxu0 %v763
  %1794 = vmatpush1.bf16.msra.mxu0 %v762
  %1795 = vmatprep.subr.bf16.mxu0 %v766
  %1796 = vmatpush1.bf16.msra.mxu0 %v765
  %1797 = vmatprep.subr.bf16.mxu0 %v769
  %1798 = vmatpush1.bf16.msra.mxu0 %v768
  %1799 = vmatprep.subr.bf16.mxu0 %v772
  %1800 = vmatpush1.bf16.msra.mxu0 %v771
  %1801 = vmatprep.subr.bf16.mxu0 %v775
  %1802 = vmatpush1.bf16.msra.mxu0 %v774
  %1803 = vmatprep.subr.bf16.mxu0 0
  %1804 = vmatpush1.bf16.msra.mxu0 0
  %1805 = vmatprep.subr.bf16.mxu0 0
  %1806 = vmatpush1.bf16.msra.mxu0 0
  %1807 = vmatprep.subr.bf16.mxu0 0
  %1808 = vmatpush1.bf16.msra.mxu0 0
  %1809 = vmatprep.subr.bf16.mxu0 0
  %1810 = vmatpush1.bf16.msra.mxu0 0
  %1811 = vmatprep.subr.bf16.mxu0 0
  %1812 = vmatpush1.bf16.msra.mxu0 0
  %1813 = vmatprep.subr.bf16.mxu0 0
  %1814 = vmatpush1.bf16.msra.mxu0 0
  %1815 = vmatprep.subr.bf16.mxu0 0
  %1816 = vmatpush1.bf16.msra.mxu0 0
  %1817 = vmatprep.subr.bf16.mxu0 0
  %1818 = vmatpush1.bf16.msra.mxu0 0
  %1819 = vmatprep.mubr.bf16.mxu0 0
  %1820 = vmatmul.mubr.bf16.gmra.mrb[0].mxu0 %v1786
  %v1821 = vpop.f32.mrb[0].mxu0
  %v1822 = vadd.f32 0.0, %v1821
  %v1823 = vpop.f32.mrb[0].mxu0
  %v1824 = vadd.f32 0.0, %v1823
  %v1825 = vpop.f32.mrb[0].mxu0
  %v1826 = vadd.f32 0.0, %v1825
  %v1827 = vpop.f32.mrb[0].mxu0
  %v1828 = vadd.f32 0.0, %v1827
  %1829 = vdwg.mxu0
  %1830 = vmatprep.subr.bf16.mxu0 0
  %1831 = vmatpush1.bf16.msra.mxu0 %v755
  %1832 = vmatprep.subr.bf16.mxu0 0
  %1833 = vmatpush1.bf16.msra.mxu0 %v758
  %1834 = vmatprep.subr.bf16.mxu0 0
  %1835 = vmatpush1.bf16.msra.mxu0 %v761
  %1836 = vmatprep.subr.bf16.mxu0 0
  %1837 = vmatpush1.bf16.msra.mxu0 %v764
  %1838 = vmatprep.subr.bf16.mxu0 0
  %1839 = vmatpush1.bf16.msra.mxu0 %v767
  %1840 = vmatprep.subr.bf16.mxu0 0
  %1841 = vmatpush1.bf16.msra.mxu0 %v770
  %1842 = vmatprep.subr.bf16.mxu0 0
  %1843 = vmatpush1.bf16.msra.mxu0 %v773
  %1844 = vmatprep.subr.bf16.mxu0 0
  %1845 = vmatpush1.bf16.msra.mxu0 %v776
  %1846 = vmatprep.subr.bf16.mxu0 0
  %1847 = vmatpush1.bf16.msra.mxu0 0
  %1848 = vmatprep.subr.bf16.mxu0 0
  %1849 = vmatpush1.bf16.msra.mxu0 0
  %1850 = vmatprep.subr.bf16.mxu0 0
  %1851 = vmatpush1.bf16.msra.mxu0 0
  %1852 = vmatprep.subr.bf16.mxu0 0
  %1853 = vmatpush1.bf16.msra.mxu0 0
  %1854 = vmatprep.subr.bf16.mxu0 0
  %1855 = vmatpush1.bf16.msra.mxu0 0
  %1856 = vmatprep.subr.bf16.mxu0 0
  %1857 = vmatpush1.bf16.msra.mxu0 0
  %1858 = vmatprep.subr.bf16.mxu0 0
  %1859 = vmatpush1.bf16.msra.mxu0 0
  %1860 = vmatprep.subr.bf16.mxu0 0
  %1861 = vmatpush1.bf16.msra.mxu0 0
  %1862 = vmatprep.mubr.bf16.mxu0 0
  %1863 = vmatmul.mubr.bf16.gmra.mrb[0].mxu0 %v1786
  %v1864 = vpop.f32.mrb[0].mxu0
  %v1865 = vadd.f32 0.0, %v1864
  %v1866 = vpop.f32.mrb[0].mxu0
  %v1867 = vpop.f32.mrb[0].mxu0
  %v1868 = vadd.f32 0.0, %v1867
  %v1869 = vpop.f32.mrb[0].mxu0
  %1870 = vdwg.mxu0
  %1871 = vmatprep.subr.bf16.mxu0 %v966
  %1872 = vmatpush1.bf16.msra.mxu0 %v965
  %1873 = vmatprep.subr.bf16.mxu0 %v969
  %1874 = vmatpush1.bf16.msra.mxu0 %v968
  %1875 = vmatprep.subr.bf16.mxu0 %v972
  %1876 = vmatpush1.bf16.msra.mxu0 %v971
  %1877 = vmatprep.subr.bf16.mxu0 %v975
  %1878 = vmatpush1.bf16.msra.mxu0 %v974
  %1879 = vmatprep.subr.bf16.mxu0 %v978
  %1880 = vmatpush1.bf16.msra.mxu0 %v977
  %1881 = vmatprep.subr.bf16.mxu0 %v981
  %1882 = vmatpush1.bf16.msra.mxu0 %v980
  %1883 = vmatprep.subr.bf16.mxu0 %v984
  %1884 = vmatpush1.bf16.msra.mxu0 %v983
  %1885 = vmatprep.subr.bf16.mxu0 %v987
  %1886 = vmatpush1.bf16.msra.mxu0 %v986
  %1887 = vmatprep.subr.bf16.mxu0 0
  %1888 = vmatpush1.bf16.msra.mxu0 0
  %1889 = vmatprep.subr.bf16.mxu0 0
  %1890 = vmatpush1.bf16.msra.mxu0 0
  %1891 = vmatprep.subr.bf16.mxu0 0
  %1892 = vmatpush1.bf16.msra.mxu0 0
  %1893 = vmatprep.subr.bf16.mxu0 0
  %1894 = vmatpush1.bf16.msra.mxu0 0
  %1895 = vmatprep.subr.bf16.mxu0 0
  %1896 = vmatpush1.bf16.msra.mxu0 0
  %1897 = vmatprep.subr.bf16.mxu0 0
  %1898 = vmatpush1.bf16.msra.mxu0 0
  %1899 = vmatprep.subr.bf16.mxu0 0
  %1900 = vmatpush1.bf16.msra.mxu0 0
  %1901 = vmatprep.subr.bf16.mxu0 0
  %1902 = vmatpush1.bf16.msra.mxu0 0
  %1903 = vmatprep.mubr.bf16.mxu0 0
  %1904 = vmatmul.mubr.bf16.gmra.mrb[0].mxu0 %v1648
  %v1905 = vpop.f32.mrb[0].mxu0
  %v1906 = vadd.f32 0.0, %v1905
  %v1907 = vpop.f32.mrb[0].mxu0
  %v1908 = vadd.f32 0.0, %v1907
  %v1909 = vpop.f32.mrb[0].mxu0
  %v1910 = vadd.f32 0.0, %v1909
  %v1911 = vpop.f32.mrb[0].mxu0
  %v1912 = vadd.f32 0.0, %v1911
  %1913 = vdwg.mxu0
  %1914 = vmatprep.subr.bf16.mxu0 0
  %1915 = vmatpush1.bf16.msra.mxu0 %v967
  %1916 = vmatprep.subr.bf16.mxu0 0
  %1917 = vmatpush1.bf16.msra.mxu0 %v970
  %1918 = vmatprep.subr.bf16.mxu0 0
  %1919 = vmatpush1.bf16.msra.mxu0 %v973
  %1920 = vmatprep.subr.bf16.mxu0 0
  %1921 = vmatpush1.bf16.msra.mxu0 %v976
  %1922 = vmatprep.subr.bf16.mxu0 0
  %1923 = vmatpush1.bf16.msra.mxu0 %v979
  %1924 = vmatprep.subr.bf16.mxu0 0
  %1925 = vmatpush1.bf16.msra.mxu0 %v982
  %1926 = vmatprep.subr.bf16.mxu0 0
  %1927 = vmatpush1.bf16.msra.mxu0 %v985
  %1928 = vmatprep.subr.bf16.mxu0 0
  %1929 = vmatpush1.bf16.msra.mxu0 %v988
  %1930 = vmatprep.subr.bf16.mxu0 0
  %1931 = vmatpush1.bf16.msra.mxu0 0
  %1932 = vmatprep.subr.bf16.mxu0 0
  %1933 = vmatpush1.bf16.msra.mxu0 0
  %1934 = vmatprep.subr.bf16.mxu0 0
  %1935 = vmatpush1.bf16.msra.mxu0 0
  %1936 = vmatprep.subr.bf16.mxu0 0
  %1937 = vmatpush1.bf16.msra.mxu0 0
  %1938 = vmatprep.subr.bf16.mxu0 0
  %1939 = vmatpush1.bf16.msra.mxu0 0
  %1940 = vmatprep.subr.bf16.mxu0 0
  %1941 = vmatpush1.bf16.msra.mxu0 0
  %1942 = vmatprep.subr.bf16.mxu0 0
  %1943 = vmatpush1.bf16.msra.mxu0 0
  %1944 = vmatprep.subr.bf16.mxu0 0
  %1945 = vmatpush1.bf16.msra.mxu0 0
  %1946 = vmatprep.mubr.bf16.mxu0 0
  %1947 = vmatmul.mubr.bf16.gmra.mrb[0].mxu0 %v1648
  %v1948 = vpop.f32.mrb[0].mxu0
  %v1949 = vadd.f32 0.0, %v1948
  %v1950 = vpop.f32.mrb[0].mxu0
  %v1951 = vpop.f32.mrb[0].mxu0
  %v1952 = vadd.f32 0.0, %v1951
  %v1953 = vpop.f32.mrb[0].mxu0
  %1954 = vdwg.mxu0
  %v1955 = vadd.f32 %v1780, %v1906
  %v1956 = vadd.f32 %v1783, %v1910
  %v1957 = vxor.u32 %v1955, 2147483648
  %v1958 = vxor.u32 %v1956, 2147483648
  %v1959 = vmul.f32 %v1957, 1.442695
  %v1960 = vpow.pop %v1959
  %v1961 = vmul.f32 %v1958, 1.442695
  %v1962 = vpow.pop %v1961
  %v1963 = vadd.f32 %v1960, 1.0
  %v1964 = vadd.f32 %v1962, 1.0
  %v1965 = vrcp.pop %v1963
  %v1966 = vmul.f32 1.0, %v1965
  %v1967 = vrcp.pop %v1964
  %v1968 = vmul.f32 1.0, %v1967
  %v1969 = vadd.f32 %v1781, %v1908
  %v1970 = vadd.f32 %v1784, %v1912
  %v1971 = vxor.u32 %v1969, 2147483648
  %v1972 = vxor.u32 %v1970, 2147483648
  %v1973 = vmul.f32 %v1971, 1.442695
  %v1974 = vpow.pop %v1973
  %v1975 = vmul.f32 %v1972, 1.442695
  %v1976 = vpow.pop %v1975
  %v1977 = vadd.f32 %v1974, 1.0
  %v1978 = vadd.f32 %v1976, 1.0
  %v1979 = vrcp.pop %v1977
  %v1980 = vmul.f32 1.0, %v1979
  %v1981 = vrcp.pop %v1978
  %v1982 = vmul.f32 1.0, %v1981
  %v1983 = vadd.f32 %v1949, %v1129
  %v1984 = vadd.f32 %v1952, %v1129
  %v1985 = vmul.f32 %v1966, %v1983
  %v1986 = vmul.f32 %v1968, %v1984
  %v1987 = vadd.f32 %v1782, %v1985
  %v1988 = vadd.f32 %v1785, %v1986
  %v1989 = vtanh.pop %v1987
  %v1990 = vtanh.pop %v1988
  %v1991 = vsub.f32 1.0, %v1980
  %v1992 = vsub.f32 1.0, %v1982
  %v1993 = vmul.f32 %v1991, %v1989
  %v1994 = vmul.f32 %v1992, %v1990
  %v1995 = vmul.f32 %v1980, %v1646
  %v1996 = vmul.f32 %v1982, %v1647
  %v1997 = vadd.f32 %v1993, %v1995
  %v1998 = vadd.f32 %v1994, %v1996
  %v1999 = vpack.c.bf16 %v1998, %v1997
  %2000 = vmatprep.subr.bf16.mxu0 %v1245
  %2001 = vmatpush1.bf16.msra.mxu0 %v1244
  %2002 = vmatprep.subr.bf16.mxu0 %v1248
  %2003 = vmatpush1.bf16.msra.mxu0 %v1247
  %2004 = vmatprep.subr.bf16.mxu0 %v1251
  %2005 = vmatpush1.bf16.msra.mxu0 %v1250
  %2006 = vmatprep.subr.bf16.mxu0 %v1254
  %2007 = vmatpush1.bf16.msra.mxu0 %v1253
  %2008 = vmatprep.subr.bf16.mxu0 %v1257
  %2009 = vmatpush1.bf16.msra.mxu0 %v1256
  %2010 = vmatprep.subr.bf16.mxu0 %v1260
  %2011 = vmatpush1.bf16.msra.mxu0 %v1259
  %2012 = vmatprep.subr.bf16.mxu0 %v1263
  %2013 = vmatpush1.bf16.msra.mxu0 %v1262
  %2014 = vmatprep.subr.bf16.mxu0 %v1266
  %2015 = vmatpush1.bf16.msra.mxu0 %v1265
  %2016 = vmatprep.subr.bf16.mxu0 0
  %2017 = vmatpush1.bf16.msra.mxu0 0
  %2018 = vmatprep.subr.bf16.mxu0 0
  %2019 = vmatpush1.bf16.msra.mxu0 0
  %2020 = vmatprep.subr.bf16.mxu0 0
  %2021 = vmatpush1.bf16.msra.mxu0 0
  %2022 = vmatprep.subr.bf16.mxu0 0
  %2023 = vmatpush1.bf16.msra.mxu0 0
  %2024 = vmatprep.subr.bf16.mxu0 0
  %2025 = vmatpush1.bf16.msra.mxu0 0
  %2026 = vmatprep.subr.bf16.mxu0 0
  %2027 = vmatpush1.bf16.msra.mxu0 0
  %2028 = vmatprep.subr.bf16.mxu0 0
  %2029 = vmatpush1.bf16.msra.mxu0 0
  %2030 = vmatprep.subr.bf16.mxu0 0
  %2031 = vmatpush1.bf16.msra.mxu0 0
  %2032 = vmatprep.mubr.bf16.mxu0 0
  %2033 = vmatmul.mubr.bf16.gmra.mrb[0].mxu0 %v1999
  %v2034 = vpop.f32.mrb[0].mxu0
  %v2035 = vadd.f32 %v1152, %v2034
  %v2036 = vpop.f32.mrb[0].mxu0
  %v2037 = vadd.f32 %v1156, %v2036
  %v2038 = vpop.f32.mrb[0].mxu0
  %v2039 = vadd.f32 %v1152, %v2038
  %v2040 = vpop.f32.mrb[0].mxu0
  %v2041 = vadd.f32 %v1156, %v2040
  %2042 = vdwg.mxu0
  %2043 = vmatprep.subr.bf16.mxu0 0
  %2044 = vmatpush1.bf16.msra.mxu0 %v1246
  %2045 = vmatprep.subr.bf16.mxu0 0
  %2046 = vmatpush1.bf16.msra.mxu0 %v1249
  %2047 = vmatprep.subr.bf16.mxu0 0
  %2048 = vmatpush1.bf16.msra.mxu0 %v1252
  %2049 = vmatprep.subr.bf16.mxu0 0
  %2050 = vmatpush1.bf16.msra.mxu0 %v1255
  %2051 = vmatprep.subr.bf16.mxu0 0
  %2052 = vmatpush1.bf16.msra.mxu0 %v1258
  %2053 = vmatprep.subr.bf16.mxu0 0
  %2054 = vmatpush1.bf16.msra.mxu0 %v1261
  %2055 = vmatprep.subr.bf16.mxu0 0
  %2056 = vmatpush1.bf16.msra.mxu0 %v1264
  %2057 = vmatprep.subr.bf16.mxu0 0
  %2058 = vmatpush1.bf16.msra.mxu0 %v1267
  %2059 = vmatprep.subr.bf16.mxu0 0
  %2060 = vmatpush1.bf16.msra.mxu0 0
  %2061 = vmatprep.subr.bf16.mxu0 0
  %2062 = vmatpush1.bf16.msra.mxu0 0
  %2063 = vmatprep.subr.bf16.mxu0 0
  %2064 = vmatpush1.bf16.msra.mxu0 0
  %2065 = vmatprep.subr.bf16.mxu0 0
  %2066 = vmatpush1.bf16.msra.mxu0 0
  %2067 = vmatprep.subr.bf16.mxu0 0
  %2068 = vmatpush1.bf16.msra.mxu0 0
  %2069 = vmatprep.subr.bf16.mxu0 0
  %2070 = vmatpush1.bf16.msra.mxu0 0
  %2071 = vmatprep.subr.bf16.mxu0 0
  %2072 = vmatpush1.bf16.msra.mxu0 0
  %2073 = vmatprep.subr.bf16.mxu0 0
  %2074 = vmatpush1.bf16.msra.mxu0 0
  %2075 = vmatprep.mubr.bf16.mxu0 0
  %2076 = vmatmul.mubr.bf16.gmra.mrb[0].mxu0 %v1999
  %v2077 = vpop.f32.mrb[0].mxu0
  %v2078 = vadd.f32 %v1160, %v2077
  %v2079 = vpop.f32.mrb[0].mxu0
  %v2080 = vpop.f32.mrb[0].mxu0
  %v2081 = vadd.f32 %v1160, %v2080
  %v2082 = vpop.f32.mrb[0].mxu0
  %2083 = vdwg.mxu0
  %v2084 = vadd.f32 %v2035, %v1822
  %v2085 = vadd.f32 %v2039, %v1826
  %v2086 = vxor.u32 %v2084, 2147483648
  %v2087 = vxor.u32 %v2085, 2147483648
  %v2088 = vmul.f32 %v2086, 1.442695
  %v2089 = vpow.pop %v2088
  %v2090 = vmul.f32 %v2087, 1.442695
  %v2091 = vpow.pop %v2090
  %v2092 = vadd.f32 %v2089, 1.0
  %v2093 = vadd.f32 %v2091, 1.0
  %v2094 = vrcp.pop %v2092
  %v2095 = vmul.f32 1.0, %v2094
  %v2096 = vrcp.pop %v2093
  %v2097 = vmul.f32 1.0, %v2096
  %v2098 = vadd.f32 %v2037, %v1824
  %v2099 = vadd.f32 %v2041, %v1828
  %v2100 = vxor.u32 %v2098, 2147483648
  %v2101 = vxor.u32 %v2099, 2147483648
  %v2102 = vmul.f32 %v2100, 1.442695
  %v2103 = vpow.pop %v2102
  %v2104 = vmul.f32 %v2101, 1.442695
  %v2105 = vpow.pop %v2104
  %v2106 = vadd.f32 %v2103, 1.0
  %v2107 = vadd.f32 %v2105, 1.0
  %v2108 = vrcp.pop %v2106
  %v2109 = vmul.f32 1.0, %v2108
  %v2110 = vrcp.pop %v2107
  %v2111 = vmul.f32 1.0, %v2110
  %v2112 = vadd.f32 %v1865, %v1408
  %v2113 = vadd.f32 %v1868, %v1408
  %v2114 = vmul.f32 %v2095, %v2112
  %v2115 = vmul.f32 %v2097, %v2113
  %v2116 = vadd.f32 %v2078, %v2114
  %v2117 = vadd.f32 %v2081, %v2115
  %v2118 = vtanh.pop %v2116
  %v2119 = vtanh.pop %v2117
  %v2120 = vsub.f32 1.0, %v2109
  %v2121 = vsub.f32 1.0, %v2111
  %v2122 = vmul.f32 %v2120, %v2118
  %v2123 = vmul.f32 %v2121, %v2119
  %v2124 = vmul.f32 %v2109, %v1775
  %v2125 = vmul.f32 %v2111, %v1776
  %v2126 = vadd.f32 %v2122, %v2124
  %v2127 = vadd.f32 %v2123, %v2125
  %s2128 = smul.u32 6, 3
  %s2129 = smul.addr %s2128, 8
  %s2130 = scalar_lea.vmem [#allocation2], %s2129
  %v2131 = vld [vmem:[%s2130] sm:$0xff]
  %v2132 = vld [vmem:[%s2130 + $0x8] sm:$0xff]
  %v2133 = vld [vmem:[%s2130 + $0x10] sm:$0xff]
  %v2134 = vld [vmem:[%s2130 + $0x18] sm:$0xff]
  %v2135 = vld [vmem:[%s2130 + $0x20] sm:$0xff]
  %v2136 = vld [vmem:[%s2130 + $0x28] sm:$0xff]
  %v2137 = vpack.c.bf16 %v2127, %v2126
  %2138 = vmatprep.subr.bf16.mxu0 %v754
  %2139 = vmatpush1.bf16.msra.mxu0 %v753
  %2140 = vmatprep.subr.bf16.mxu0 %v757
  %2141 = vmatpush1.bf16.msra.mxu0 %v756
  %2142 = vmatprep.subr.bf16.mxu0 %v760
  %2143 = vmatpush1.bf16.msra.mxu0 %v759
  %2144 = vmatprep.subr.bf16.mxu0 %v763
  %2145 = vmatpush1.bf16.msra.mxu0 %v762
  %2146 = vmatprep.subr.bf16.mxu0 %v766
  %2147 = vmatpush1.bf16.msra.mxu0 %v765
  %2148 = vmatprep.subr.bf16.mxu0 %v769
  %2149 = vmatpush1.bf16.msra.mxu0 %v768
  %2150 = vmatprep.subr.bf16.mxu0 %v772
  %2151 = vmatpush1.bf16.msra.mxu0 %v771
  %2152 = vmatprep.subr.bf16.mxu0 %v775
  %2153 = vmatpush1.bf16.msra.mxu0 %v774
  %2154 = vmatprep.subr.bf16.mxu0 0
  %2155 = vmatpush1.bf16.msra.mxu0 0
  %2156 = vmatprep.subr.bf16.mxu0 0
  %2157 = vmatpush1.bf16.msra.mxu0 0
  %2158 = vmatprep.subr.bf16.mxu0 0
  %2159 = vmatpush1.bf16.msra.mxu0 0
  %2160 = vmatprep.subr.bf16.mxu0 0
  %2161 = vmatpush1.bf16.msra.mxu0 0
  %2162 = vmatprep.subr.bf16.mxu0 0
  %2163 = vmatpush1.bf16.msra.mxu0 0
  %2164 = vmatprep.subr.bf16.mxu0 0
  %2165 = vmatpush1.bf16.msra.mxu0 0
  %2166 = vmatprep.subr.bf16.mxu0 0
  %2167 = vmatpush1.bf16.msra.mxu0 0
  %2168 = vmatprep.subr.bf16.mxu0 0
  %2169 = vmatpush1.bf16.msra.mxu0 0
  %2170 = vmatprep.mubr.bf16.mxu0 0
  %2171 = vmatmul.mubr.bf16.gmra.mrb[0].mxu0 %v2137
  %v2172 = vpop.f32.mrb[0].mxu0
  %v2173 = vadd.f32 0.0, %v2172
  %v2174 = vpop.f32.mrb[0].mxu0
  %v2175 = vadd.f32 0.0, %v2174
  %v2176 = vpop.f32.mrb[0].mxu0
  %v2177 = vadd.f32 0.0, %v2176
  %v2178 = vpop.f32.mrb[0].mxu0
  %v2179 = vadd.f32 0.0, %v2178
  %2180 = vdwg.mxu0
  %2181 = vmatprep.subr.bf16.mxu0 0
  %2182 = vmatpush1.bf16.msra.mxu0 %v755
  %2183 = vmatprep.subr.bf16.mxu0 0
  %2184 = vmatpush1.bf16.msra.mxu0 %v758
  %2185 = vmatprep.subr.bf16.mxu0 0
  %2186 = vmatpush1.bf16.msra.mxu0 %v761
  %2187 = vmatprep.subr.bf16.mxu0 0
  %2188 = vmatpush1.bf16.msra.mxu0 %v764
  %2189 = vmatprep.subr.bf16.mxu0 0
  %2190 = vmatpush1.bf16.msra.mxu0 %v767
  %2191 = vmatprep.subr.bf16.mxu0 0
  %2192 = vmatpush1.bf16.msra.mxu0 %v770
  %2193 = vmatprep.subr.bf16.mxu0 0
  %2194 = vmatpush1.bf16.msra.mxu0 %v773
  %2195 = vmatprep.subr.bf16.mxu0 0
  %2196 = vmatpush1.bf16.msra.mxu0 %v776
  %2197 = vmatprep.subr.bf16.mxu0 0
  %2198 = vmatpush1.bf16.msra.mxu0 0
  %2199 = vmatprep.subr.bf16.mxu0 0
  %2200 = vmatpush1.bf16.msra.mxu0 0
  %2201 = vmatprep.subr.bf16.mxu0 0
  %2202 = vmatpush1.bf16.msra.mxu0 0
  %2203 = vmatprep.subr.bf16.mxu0 0
  %2204 = vmatpush1.bf16.msra.mxu0 0
  %2205 = vmatprep.subr.bf16.mxu0 0
  %2206 = vmatpush1.bf16.msra.mxu0 0
  %2207 = vmatprep.subr.bf16.mxu0 0
  %2208 = vmatpush1.bf16.msra.mxu0 0
  %2209 = vmatprep.subr.bf16.mxu0 0
  %2210 = vmatpush1.bf16.msra.mxu0 0
  %2211 = vmatprep.subr.bf16.mxu0 0
  %2212 = vmatpush1.bf16.msra.mxu0 0
  %2213 = vmatprep.mubr.bf16.mxu0 0
  %2214 = vmatmul.mubr.bf16.gmra.mrb[0].mxu0 %v2137
  %v2215 = vpop.f32.mrb[0].mxu0
  %v2216 = vadd.f32 0.0, %v2215
  %v2217 = vpop.f32.mrb[0].mxu0
  %v2218 = vpop.f32.mrb[0].mxu0
  %v2219 = vadd.f32 0.0, %v2218
  %v2220 = vpop.f32.mrb[0].mxu0
  %2221 = vdwg.mxu0
  %2222 = vmatprep.subr.bf16.mxu0 %v966
  %2223 = vmatpush1.bf16.msra.mxu0 %v965
  %2224 = vmatprep.subr.bf16.mxu0 %v969
  %2225 = vmatpush1.bf16.msra.mxu0 %v968
  %2226 = vmatprep.subr.bf16.mxu0 %v972
  %2227 = vmatpush1.bf16.msra.mxu0 %v971
  %2228 = vmatprep.subr.bf16.mxu0 %v975
  %2229 = vmatpush1.bf16.msra.mxu0 %v974
  %2230 = vmatprep.subr.bf16.mxu0 %v978
  %2231 = vmatpush1.bf16.msra.mxu0 %v977
  %2232 = vmatprep.subr.bf16.mxu0 %v981
  %2233 = vmatpush1.bf16.msra.mxu0 %v980
  %2234 = vmatprep.subr.bf16.mxu0 %v984
  %2235 = vmatpush1.bf16.msra.mxu0 %v983
  %2236 = vmatprep.subr.bf16.mxu0 %v987
  %2237 = vmatpush1.bf16.msra.mxu0 %v986
  %2238 = vmatprep.subr.bf16.mxu0 0
  %2239 = vmatpush1.bf16.msra.mxu0 0
  %2240 = vmatprep.subr.bf16.mxu0 0
  %2241 = vmatpush1.bf16.msra.mxu0 0
  %2242 = vmatprep.subr.bf16.mxu0 0
  %2243 = vmatpush1.bf16.msra.mxu0 0
  %2244 = vmatprep.subr.bf16.mxu0 0
  %2245 = vmatpush1.bf16.msra.mxu0 0
  %2246 = vmatprep.subr.bf16.mxu0 0
  %2247 = vmatpush1.bf16.msra.mxu0 0
  %2248 = vmatprep.subr.bf16.mxu0 0
  %2249 = vmatpush1.bf16.msra.mxu0 0
  %2250 = vmatprep.subr.bf16.mxu0 0
  %2251 = vmatpush1.bf16.msra.mxu0 0
  %2252 = vmatprep.subr.bf16.mxu0 0
  %2253 = vmatpush1.bf16.msra.mxu0 0
  %2254 = vmatprep.mubr.bf16.mxu0 0
  %2255 = vmatmul.mubr.bf16.gmra.mrb[0].mxu0 %v1999
  %v2256 = vpop.f32.mrb[0].mxu0
  %v2257 = vadd.f32 0.0, %v2256
  %v2258 = vpop.f32.mrb[0].mxu0
  %v2259 = vadd.f32 0.0, %v2258
  %v2260 = vpop.f32.mrb[0].mxu0
  %v2261 = vadd.f32 0.0, %v2260
  %v2262 = vpop.f32.mrb[0].mxu0
  %v2263 = vadd.f32 0.0, %v2262
  %2264 = vdwg.mxu0
  %2265 = vmatprep.subr.bf16.mxu0 0
  %2266 = vmatpush1.bf16.msra.mxu0 %v967
  %2267 = vmatprep.subr.bf16.mxu0 0
  %2268 = vmatpush1.bf16.msra.mxu0 %v970
  %2269 = vmatprep.subr.bf16.mxu0 0
  %2270 = vmatpush1.bf16.msra.mxu0 %v973
  %2271 = vmatprep.subr.bf16.mxu0 0
  %2272 = vmatpush1.bf16.msra.mxu0 %v976
  %2273 = vmatprep.subr.bf16.mxu0 0
  %2274 = vmatpush1.bf16.msra.mxu0 %v979
  %2275 = vmatprep.subr.bf16.mxu0 0
  %2276 = vmatpush1.bf16.msra.mxu0 %v982
  %2277 = vmatprep.subr.bf16.mxu0 0
  %2278 = vmatpush1.bf16.msra.mxu0 %v985
  %2279 = vmatprep.subr.bf16.mxu0 0
  %2280 = vmatpush1.bf16.msra.mxu0 %v988
  %2281 = vmatprep.subr.bf16.mxu0 0
  %2282 = vmatpush1.bf16.msra.mxu0 0
  %2283 = vmatprep.subr.bf16.mxu0 0
  %2284 = vmatpush1.bf16.msra.mxu0 0
  %2285 = vmatprep.subr.bf16.mxu0 0
  %2286 = vmatpush1.bf16.msra.mxu0 0
  %2287 = vmatprep.subr.bf16.mxu0 0
  %2288 = vmatpush1.bf16.msra.mxu0 0
  %2289 = vmatprep.subr.bf16.mxu0 0
  %2290 = vmatpush1.bf16.msra.mxu0 0
  %2291 = vmatprep.subr.bf16.mxu0 0
  %2292 = vmatpush1.bf16.msra.mxu0 0
  %2293 = vmatprep.subr.bf16.mxu0 0
  %2294 = vmatpush1.bf16.msra.mxu0 0
  %2295 = vmatprep.subr.bf16.mxu0 0
  %2296 = vmatpush1.bf16.msra.mxu0 0
  %2297 = vmatprep.mubr.bf16.mxu0 0
  %2298 = vmatmul.mubr.bf16.gmra.mrb[0].mxu0 %v1999
  %v2299 = vpop.f32.mrb[0].mxu0
  %v2300 = vadd.f32 0.0, %v2299
  %v2301 = vpop.f32.mrb[0].mxu0
  %v2302 = vpop.f32.mrb[0].mxu0
  %v2303 = vadd.f32 0.0, %v2302
  %v2304 = vpop.f32.mrb[0].mxu0
  %2305 = vdwg.mxu0
  %v2306 = vadd.f32 %v2131, %v2257
  %v2307 = vadd.f32 %v2134, %v2261
  %v2308 = vxor.u32 %v2306, 2147483648
  %v2309 = vxor.u32 %v2307, 2147483648
  %v2310 = vmul.f32 %v2308, 1.442695
  %v2311 = vpow.pop %v2310
  %v2312 = vmul.f32 %v2309, 1.442695
  %v2313 = vpow.pop %v2312
  %v2314 = vadd.f32 %v2311, 1.0
  %v2315 = vadd.f32 %v2313, 1.0
  %v2316 = vrcp.pop %v2314
  %v2317 = vmul.f32 1.0, %v2316
  %v2318 = vrcp.pop %v2315
  %v2319 = vmul.f32 1.0, %v2318
  %v2320 = vadd.f32 %v2132, %v2259
  %v2321 = vadd.f32 %v2135, %v2263
  %v2322 = vxor.u32 %v2320, 2147483648
  %v2323 = vxor.u32 %v2321, 2147483648
  %v2324 = vmul.f32 %v2322, 1.442695
  %v2325 = vpow.pop %v2324
  %v2326 = vmul.f32 %v2323, 1.442695
  %v2327 = vpow.pop %v2326
  %v2328 = vadd.f32 %v2325, 1.0
  %v2329 = vadd.f32 %v2327, 1.0
  %v2330 = vrcp.pop %v2328
  %v2331 = vmul.f32 1.0, %v2330
  %v2332 = vrcp.pop %v2329
  %v2333 = vmul.f32 1.0, %v2332
  %v2334 = vadd.f32 %v2300, %v1129
  %v2335 = vadd.f32 %v2303, %v1129
  %v2336 = vmul.f32 %v2317, %v2334
  %v2337 = vmul.f32 %v2319, %v2335
  %v2338 = vadd.f32 %v2133, %v2336
  %v2339 = vadd.f32 %v2136, %v2337
  %v2340 = vtanh.pop %v2338
  %v2341 = vtanh.pop %v2339
  %v2342 = vsub.f32 1.0, %v2331
  %v2343 = vsub.f32 1.0, %v2333
  %v2344 = vmul.f32 %v2342, %v2340
  %v2345 = vmul.f32 %v2343, %v2341
  %v2346 = vmul.f32 %v2331, %v1997
  %v2347 = vmul.f32 %v2333, %v1998
  %v2348 = vadd.f32 %v2344, %v2346
  %v2349 = vadd.f32 %v2345, %v2347
  %v2350 = vpack.c.bf16 %v2349, %v2348
  %2351 = vmatprep.subr.bf16.mxu0 %v1245
  %2352 = vmatpush1.bf16.msra.mxu0 %v1244
  %2353 = vmatprep.subr.bf16.mxu0 %v1248
  %2354 = vmatpush1.bf16.msra.mxu0 %v1247
  %2355 = vmatprep.subr.bf16.mxu0 %v1251
  %2356 = vmatpush1.bf16.msra.mxu0 %v1250
  %2357 = vmatprep.subr.bf16.mxu0 %v1254
  %2358 = vmatpush1.bf16.msra.mxu0 %v1253
  %2359 = vmatprep.subr.bf16.mxu0 %v1257
  %2360 = vmatpush1.bf16.msra.mxu0 %v1256
  %2361 = vmatprep.subr.bf16.mxu0 %v1260
  %2362 = vmatpush1.bf16.msra.mxu0 %v1259
  %2363 = vmatprep.subr.bf16.mxu0 %v1263
  %2364 = vmatpush1.bf16.msra.mxu0 %v1262
  %2365 = vmatprep.subr.bf16.mxu0 %v1266
  %2366 = vmatpush1.bf16.msra.mxu0 %v1265
  %2367 = vmatprep.subr.bf16.mxu0 0
  %2368 = vmatpush1.bf16.msra.mxu0 0
  %2369 = vmatprep.subr.bf16.mxu0 0
  %2370 = vmatpush1.bf16.msra.mxu0 0
  %2371 = vmatprep.subr.bf16.mxu0 0
  %2372 = vmatpush1.bf16.msra.mxu0 0
  %2373 = vmatprep.subr.bf16.mxu0 0
  %2374 = vmatpush1.bf16.msra.mxu0 0
  %2375 = vmatprep.subr.bf16.mxu0 0
  %2376 = vmatpush1.bf16.msra.mxu0 0
  %2377 = vmatprep.subr.bf16.mxu0 0
  %2378 = vmatpush1.bf16.msra.mxu0 0
  %2379 = vmatprep.subr.bf16.mxu0 0
  %2380 = vmatpush1.bf16.msra.mxu0 0
  %2381 = vmatprep.subr.bf16.mxu0 0
  %2382 = vmatpush1.bf16.msra.mxu0 0
  %2383 = vmatprep.mubr.bf16.mxu0 0
  %2384 = vmatmul.mubr.bf16.gmra.mrb[0].mxu0 %v2350
  %v2385 = vpop.f32.mrb[0].mxu0
  %v2386 = vadd.f32 %v1152, %v2385
  %v2387 = vpop.f32.mrb[0].mxu0
  %v2388 = vadd.f32 %v1156, %v2387
  %v2389 = vpop.f32.mrb[0].mxu0
  %v2390 = vadd.f32 %v1152, %v2389
  %v2391 = vpop.f32.mrb[0].mxu0
  %v2392 = vadd.f32 %v1156, %v2391
  %2393 = vdwg.mxu0
  %2394 = vmatprep.subr.bf16.mxu0 0
  %2395 = vmatpush1.bf16.msra.mxu0 %v1246
  %2396 = vmatprep.subr.bf16.mxu0 0
  %2397 = vmatpush1.bf16.msra.mxu0 %v1249
  %2398 = vmatprep.subr.bf16.mxu0 0
  %2399 = vmatpush1.bf16.msra.mxu0 %v1252
  %2400 = vmatprep.subr.bf16.mxu0 0
  %2401 = vmatpush1.bf16.msra.mxu0 %v1255
  %2402 = vmatprep.subr.bf16.mxu0 0
  %2403 = vmatpush1.bf16.msra.mxu0 %v1258
  %2404 = vmatprep.subr.bf16.mxu0 0
  %2405 = vmatpush1.bf16.msra.mxu0 %v1261
  %2406 = vmatprep.subr.bf16.mxu0 0
  %2407 = vmatpush1.bf16.msra.mxu0 %v1264
  %2408 = vmatprep.subr.bf16.mxu0 0
  %2409 = vmatpush1.bf16.msra.mxu0 %v1267
  %2410 = vmatprep.subr.bf16.mxu0 0
  %2411 = vmatpush1.bf16.msra.mxu0 0
  %2412 = vmatprep.subr.bf16.mxu0 0
  %2413 = vmatpush1.bf16.msra.mxu0 0
  %2414 = vmatprep.subr.bf16.mxu0 0
  %2415 = vmatpush1.bf16.msra.mxu0 0
  %2416 = vmatprep.subr.bf16.mxu0 0
  %2417 = vmatpush1.bf16.msra.mxu0 0
  %2418 = vmatprep.subr.bf16.mxu0 0
  %2419 = vmatpush1.bf16.msra.mxu0 0
  %2420 = vmatprep.subr.bf16.mxu0 0
  %2421 = vmatpush1.bf16.msra.mxu0 0
  %2422 = vmatprep.subr.bf16.mxu0 0
  %2423 = vmatpush1.bf16.msra.mxu0 0
  %2424 = vmatprep.subr.bf16.mxu0 0
  %2425 = vmatpush1.bf16.msra.mxu0 0
  %2426 = vmatprep.mubr.bf16.mxu0 0
  %2427 = vmatmul.mubr.bf16.gmra.mrb[0].mxu0 %v2350
  %v2428 = vpop.f32.mrb[0].mxu0
  %v2429 = vadd.f32 %v1160, %v2428
  %v2430 = vpop.f32.mrb[0].mxu0
  %v2431 = vpop.f32.mrb[0].mxu0
  %v2432 = vadd.f32 %v1160, %v2431
  %v2433 = vpop.f32.mrb[0].mxu0
  %2434 = vdwg.mxu0
  %v2435 = vadd.f32 %v2386, %v2173
  %v2436 = vadd.f32 %v2390, %v2177
  %v2437 = vxor.u32 %v2435, 2147483648
  %v2438 = vxor.u32 %v2436, 2147483648
  %v2439 = vmul.f32 %v2437, 1.442695
  %v2440 = vpow.pop %v2439
  %v2441 = vmul.f32 %v2438, 1.442695
  %v2442 = vpow.pop %v2441
  %v2443 = vadd.f32 %v2440, 1.0
  %v2444 = vadd.f32 %v2442, 1.0
  %v2445 = vrcp.pop %v2443
  %v2446 = vmul.f32 1.0, %v2445
  %v2447 = vrcp.pop %v2444
  %v2448 = vmul.f32 1.0, %v2447
  %v2449 = vadd.f32 %v2388, %v2175
  %v2450 = vadd.f32 %v2392, %v2179
  %v2451 = vxor.u32 %v2449, 2147483648
  %v2452 = vxor.u32 %v2450, 2147483648
  %v2453 = vmul.f32 %v2451, 1.442695
  %v2454 = vpow.pop %v2453
  %v2455 = vmul.f32 %v2452, 1.442695
  %v2456 = vpow.pop %v2455
  %v2457 = vadd.f32 %v2454, 1.0
  %v2458 = vadd.f32 %v2456, 1.0
  %v2459 = vrcp.pop %v2457
  %v2460 = vmul.f32 1.0, %v2459
  %v2461 = vrcp.pop %v2458
  %v2462 = vmul.f32 1.0, %v2461
  %v2463 = vadd.f32 %v2216, %v1408
  %v2464 = vadd.f32 %v2219, %v1408
  %v2465 = vmul.f32 %v2446, %v2463
  %v2466 = vmul.f32 %v2448, %v2464
  %v2467 = vadd.f32 %v2429, %v2465
  %v2468 = vadd.f32 %v2432, %v2466
  %v2469 = vtanh.pop %v2467
  %v2470 = vtanh.pop %v2468
  %v2471 = vsub.f32 1.0, %v2460
  %v2472 = vsub.f32 1.0, %v2462
  %v2473 = vmul.f32 %v2471, %v2469
  %v2474 = vmul.f32 %v2472, %v2470
  %v2475 = vmul.f32 %v2460, %v2126
  %v2476 = vmul.f32 %v2462, %v2127
  %v2477 = vadd.f32 %v2473, %v2475
  %v2478 = vadd.f32 %v2474, %v2476
  %s2479 = smul.u32 8, 3
  %s2480 = smul.addr %s2479, 8
  %s2481 = scalar_lea.vmem [#allocation2], %s2480
  %v2482 = vld [vmem:[%s2481] sm:$0xff]
  %v2483 = vld [vmem:[%s2481 + $0x8] sm:$0xff]
  %v2484 = vld [vmem:[%s2481 + $0x10] sm:$0xff]
  %v2485 = vld [vmem:[%s2481 + $0x18] sm:$0xff]
  %v2486 = vld [vmem:[%s2481 + $0x20] sm:$0xff]
  %v2487 = vld [vmem:[%s2481 + $0x28] sm:$0xff]
  %v2488 = vpack.c.bf16 %v2478, %v2477
  %2489 = vmatprep.subr.bf16.mxu0 %v754
  %2490 = vmatpush1.bf16.msra.mxu0 %v753
  %2491 = vmatprep.subr.bf16.mxu0 %v757
  %2492 = vmatpush1.bf16.msra.mxu0 %v756
  %2493 = vmatprep.subr.bf16.mxu0 %v760
  %2494 = vmatpush1.bf16.msra.mxu0 %v759
  %2495 = vmatprep.subr.bf16.mxu0 %v763
  %2496 = vmatpush1.bf16.msra.mxu0 %v762
  %2497 = vmatprep.subr.bf16.mxu0 %v766
  %2498 = vmatpush1.bf16.msra.mxu0 %v765
  %2499 = vmatprep.subr.bf16.mxu0 %v769
  %2500 = vmatpush1.bf16.msra.mxu0 %v768
  %2501 = vmatprep.subr.bf16.mxu0 %v772
  %2502 = vmatpush1.bf16.msra.mxu0 %v771
  %2503 = vmatprep.subr.bf16.mxu0 %v775
  %2504 = vmatpush1.bf16.msra.mxu0 %v774
  %2505 = vmatprep.subr.bf16.mxu0 0
  %2506 = vmatpush1.bf16.msra.mxu0 0
  %2507 = vmatprep.subr.bf16.mxu0 0
  %2508 = vmatpush1.bf16.msra.mxu0 0
  %2509 = vmatprep.subr.bf16.mxu0 0
  %2510 = vmatpush1.bf16.msra.mxu0 0
  %2511 = vmatprep.subr.bf16.mxu0 0
  %2512 = vmatpush1.bf16.msra.mxu0 0
  %2513 = vmatprep.subr.bf16.mxu0 0
  %2514 = vmatpush1.bf16.msra.mxu0 0
  %2515 = vmatprep.subr.bf16.mxu0 0
  %2516 = vmatpush1.bf16.msra.mxu0 0
  %2517 = vmatprep.subr.bf16.mxu0 0
  %2518 = vmatpush1.bf16.msra.mxu0 0
  %2519 = vmatprep.subr.bf16.mxu0 0
  %2520 = vmatpush1.bf16.msra.mxu0 0
  %2521 = vmatprep.mubr.bf16.mxu0 0
  %2522 = vmatmul.mubr.bf16.gmra.mrb[0].mxu0 %v2488
  %v2523 = vpop.f32.mrb[0].mxu0
  %v2524 = vadd.f32 0.0, %v2523
  %v2525 = vpop.f32.mrb[0].mxu0
  %v2526 = vadd.f32 0.0, %v2525
  %v2527 = vpop.f32.mrb[0].mxu0
  %v2528 = vadd.f32 0.0, %v2527
  %v2529 = vpop.f32.mrb[0].mxu0
  %v2530 = vadd.f32 0.0, %v2529
  %2531 = vdwg.mxu0
  %2532 = vmatprep.subr.bf16.mxu0 0
  %2533 = vmatpush1.bf16.msra.mxu0 %v755
  %2534 = vmatprep.subr.bf16.mxu0 0
  %2535 = vmatpush1.bf16.msra.mxu0 %v758
  %2536 = vmatprep.subr.bf16.mxu0 0
  %2537 = vmatpush1.bf16.msra.mxu0 %v761
  %2538 = vmatprep.subr.bf16.mxu0 0
  %2539 = vmatpush1.bf16.msra.mxu0 %v764
  %2540 = vmatprep.subr.bf16.mxu0 0
  %2541 = vmatpush1.bf16.msra.mxu0 %v767
  %2542 = vmatprep.subr.bf16.mxu0 0
  %2543 = vmatpush1.bf16.msra.mxu0 %v770
  %2544 = vmatprep.subr.bf16.mxu0 0
  %2545 = vmatpush1.bf16.msra.mxu0 %v773
  %2546 = vmatprep.subr.bf16.mxu0 0
  %2547 = vmatpush1.bf16.msra.mxu0 %v776
  %2548 = vmatprep.subr.bf16.mxu0 0
  %2549 = vmatpush1.bf16.msra.mxu0 0
  %2550 = vmatprep.subr.bf16.mxu0 0
  %2551 = vmatpush1.bf16.msra.mxu0 0
  %2552 = vmatprep.subr.bf16.mxu0 0
  %2553 = vmatpush1.bf16.msra.mxu0 0
  %2554 = vmatprep.subr.bf16.mxu0 0
  %2555 = vmatpush1.bf16.msra.mxu0 0
  %2556 = vmatprep.subr.bf16.mxu0 0
  %2557 = vmatpush1.bf16.msra.mxu0 0
  %2558 = vmatprep.subr.bf16.mxu0 0
  %2559 = vmatpush1.bf16.msra.mxu0 0
  %2560 = vmatprep.subr.bf16.mxu0 0
  %2561 = vmatpush1.bf16.msra.mxu0 0
  %2562 = vmatprep.subr.bf16.mxu0 0
  %2563 = vmatpush1.bf16.msra.mxu0 0
  %2564 = vmatprep.mubr.bf16.mxu0 0
  %2565 = vmatmul.mubr.bf16.gmra.mrb[0].mxu0 %v2488
  %v2566 = vpop.f32.mrb[0].mxu0
  %v2567 = vadd.f32 0.0, %v2566
  %v2568 = vpop.f32.mrb[0].mxu0
  %v2569 = vpop.f32.mrb[0].mxu0
  %v2570 = vadd.f32 0.0, %v2569
  %v2571 = vpop.f32.mrb[0].mxu0
  %2572 = vdwg.mxu0
  %2573 = vmatprep.subr.bf16.mxu0 %v966
  %2574 = vmatpush1.bf16.msra.mxu0 %v965
  %2575 = vmatprep.subr.bf16.mxu0 %v969
  %2576 = vmatpush1.bf16.msra.mxu0 %v968
  %2577 = vmatprep.subr.bf16.mxu0 %v972
  %2578 = vmatpush1.bf16.msra.mxu0 %v971
  %2579 = vmatprep.subr.bf16.mxu0 %v975
  %2580 = vmatpush1.bf16.msra.mxu0 %v974
  %2581 = vmatprep.subr.bf16.mxu0 %v978
  %2582 = vmatpush1.bf16.msra.mxu0 %v977
  %2583 = vmatprep.subr.bf16.mxu0 %v981
  %2584 = vmatpush1.bf16.msra.mxu0 %v980
  %2585 = vmatprep.subr.bf16.mxu0 %v984
  %2586 = vmatpush1.bf16.msra.mxu0 %v983
  %2587 = vmatprep.subr.bf16.mxu0 %v987
  %2588 = vmatpush1.bf16.msra.mxu0 %v986
  %2589 = vmatprep.subr.bf16.mxu0 0
  %2590 = vmatpush1.bf16.msra.mxu0 0
  %2591 = vmatprep.subr.bf16.mxu0 0
  %2592 = vmatpush1.bf16.msra.mxu0 0
  %2593 = vmatprep.subr.bf16.mxu0 0
  %2594 = vmatpush1.bf16.msra.mxu0 0
  %2595 = vmatprep.subr.bf16.mxu0 0
  %2596 = vmatpush1.bf16.msra.mxu0 0
  %2597 = vmatprep.subr.bf16.mxu0 0
  %2598 = vmatpush1.bf16.msra.mxu0 0
  %2599 = vmatprep.subr.bf16.mxu0 0
  %2600 = vmatpush1.bf16.msra.mxu0 0
  %2601 = vmatprep.subr.bf16.mxu0 0
  %2602 = vmatpush1.bf16.msra.mxu0 0
  %2603 = vmatprep.subr.bf16.mxu0 0
  %2604 = vmatpush1.bf16.msra.mxu0 0
  %2605 = vmatprep.mubr.bf16.mxu0 0
  %2606 = vmatmul.mubr.bf16.gmra.mrb[0].mxu0 %v2350
  %v2607 = vpop.f32.mrb[0].mxu0
  %v2608 = vadd.f32 0.0, %v2607
  %v2609 = vpop.f32.mrb[0].mxu0
  %v2610 = vadd.f32 0.0, %v2609
  %v2611 = vpop.f32.mrb[0].mxu0
  %v2612 = vadd.f32 0.0, %v2611
  %v2613 = vpop.f32.mrb[0].mxu0
  %v2614 = vadd.f32 0.0, %v2613
  %2615 = vdwg.mxu0
  %2616 = vmatprep.subr.bf16.mxu0 0
  %2617 = vmatpush1.bf16.msra.mxu0 %v967
  %2618 = vmatprep.subr.bf16.mxu0 0
  %2619 = vmatpush1.bf16.msra.mxu0 %v970
  %2620 = vmatprep.subr.bf16.mxu0 0
  %2621 = vmatpush1.bf16.msra.mxu0 %v973
  %2622 = vmatprep.subr.bf16.mxu0 0
  %2623 = vmatpush1.bf16.msra.mxu0 %v976
  %2624 = vmatprep.subr.bf16.mxu0 0
  %2625 = vmatpush1.bf16.msra.mxu0 %v979
  %2626 = vmatprep.subr.bf16.mxu0 0
  %2627 = vmatpush1.bf16.msra.mxu0 %v982
  %2628 = vmatprep.subr.bf16.mxu0 0
  %2629 = vmatpush1.bf16.msra.mxu0 %v985
  %2630 = vmatprep.subr.bf16.mxu0 0
  %2631 = vmatpush1.bf16.msra.mxu0 %v988
  %2632 = vmatprep.subr.bf16.mxu0 0
  %2633 = vmatpush1.bf16.msra.mxu0 0
  %2634 = vmatprep.subr.bf16.mxu0 0
  %2635 = vmatpush1.bf16.msra.mxu0 0
  %2636 = vmatprep.subr.bf16.mxu0 0
  %2637 = vmatpush1.bf16.msra.mxu0 0
  %2638 = vmatprep.subr.bf16.mxu0 0
  %2639 = vmatpush1.bf16.msra.mxu0 0
  %2640 = vmatprep.subr.bf16.mxu0 0
  %2641 = vmatpush1.bf16.msra.mxu0 0
  %2642 = vmatprep.subr.bf16.mxu0 0
  %2643 = vmatpush1.bf16.msra.mxu0 0
  %2644 = vmatprep.subr.bf16.mxu0 0
  %2645 = vmatpush1.bf16.msra.mxu0 0
  %2646 = vmatprep.subr.bf16.mxu0 0
  %2647 = vmatpush1.bf16.msra.mxu0 0
  %2648 = vmatprep.mubr.bf16.mxu0 0
  %2649 = vmatmul.mubr.bf16.gmra.mrb[0].mxu0 %v2350
  %v2650 = vpop.f32.mrb[0].mxu0
  %v2651 = vadd.f32 0.0, %v2650
  %v2652 = vpop.f32.mrb[0].mxu0
  %v2653 = vpop.f32.mrb[0].mxu0
  %v2654 = vadd.f32 0.0, %v2653
  %v2655 = vpop.f32.mrb[0].mxu0
  %2656 = vdwg.mxu0
  %v2657 = vadd.f32 %v2482, %v2608
  %v2658 = vadd.f32 %v2485, %v2612
  %v2659 = vxor.u32 %v2657, 2147483648
  %v2660 = vxor.u32 %v2658, 2147483648
  %v2661 = vmul.f32 %v2659, 1.442695
  %v2662 = vpow.pop %v2661
  %v2663 = vmul.f32 %v2660, 1.442695
  %v2664 = vpow.pop %v2663
  %v2665 = vadd.f32 %v2662, 1.0
  %v2666 = vadd.f32 %v2664, 1.0
  %v2667 = vrcp.pop %v2665
  %v2668 = vmul.f32 1.0, %v2667
  %v2669 = vrcp.pop %v2666
  %v2670 = vmul.f32 1.0, %v2669
  %v2671 = vadd.f32 %v2483, %v2610
  %v2672 = vadd.f32 %v2486, %v2614
  %v2673 = vxor.u32 %v2671, 2147483648
  %v2674 = vxor.u32 %v2672, 2147483648
  %v2675 = vmul.f32 %v2673, 1.442695
  %v2676 = vpow.pop %v2675
  %v2677 = vmul.f32 %v2674, 1.442695
  %v2678 = vpow.pop %v2677
  %v2679 = vadd.f32 %v2676, 1.0
  %v2680 = vadd.f32 %v2678, 1.0
  %v2681 = vrcp.pop %v2679
  %v2682 = vmul.f32 1.0, %v2681
  %v2683 = vrcp.pop %v2680
  %v2684 = vmul.f32 1.0, %v2683
  %v2685 = vadd.f32 %v2651, %v1129
  %v2686 = vadd.f32 %v2654, %v1129
  %v2687 = vmul.f32 %v2668, %v2685
  %v2688 = vmul.f32 %v2670, %v2686
  %v2689 = vadd.f32 %v2484, %v2687
  %v2690 = vadd.f32 %v2487, %v2688
  %v2691 = vtanh.pop %v2689
  %v2692 = vtanh.pop %v2690
  %v2693 = vsub.f32 1.0, %v2682
  %v2694 = vsub.f32 1.0, %v2684
  %v2695 = vmul.f32 %v2693, %v2691
  %v2696 = vmul.f32 %v2694, %v2692
  %v2697 = vmul.f32 %v2682, %v2348
  %v2698 = vmul.f32 %v2684, %v2349
  %v2699 = vadd.f32 %v2695, %v2697
  %v2700 = vadd.f32 %v2696, %v2698
  %v2701 = vpack.c.bf16 %v2700, %v2699
  %2702 = vmatprep.subr.bf16.mxu0 %v1245
  %2703 = vmatpush1.bf16.msra.mxu0 %v1244
  %2704 = vmatprep.subr.bf16.mxu0 %v1248
  %2705 = vmatpush1.bf16.msra.mxu0 %v1247
  %2706 = vmatprep.subr.bf16.mxu0 %v1251
  %2707 = vmatpush1.bf16.msra.mxu0 %v1250
  %2708 = vmatprep.subr.bf16.mxu0 %v1254
  %2709 = vmatpush1.bf16.msra.mxu0 %v1253
  %2710 = vmatprep.subr.bf16.mxu0 %v1257
  %2711 = vmatpush1.bf16.msra.mxu0 %v1256
  %2712 = vmatprep.subr.bf16.mxu0 %v1260
  %2713 = vmatpush1.bf16.msra.mxu0 %v1259
  %2714 = vmatprep.subr.bf16.mxu0 %v1263
  %2715 = vmatpush1.bf16.msra.mxu0 %v1262
  %2716 = vmatprep.subr.bf16.mxu0 %v1266
  %2717 = vmatpush1.bf16.msra.mxu0 %v1265
  %2718 = vmatprep.subr.bf16.mxu0 0
  %2719 = vmatpush1.bf16.msra.mxu0 0
  %2720 = vmatprep.subr.bf16.mxu0 0
  %2721 = vmatpush1.bf16.msra.mxu0 0
  %2722 = vmatprep.subr.bf16.mxu0 0
  %2723 = vmatpush1.bf16.msra.mxu0 0
  %2724 = vmatprep.subr.bf16.mxu0 0
  %2725 = vmatpush1.bf16.msra.mxu0 0
  %2726 = vmatprep.subr.bf16.mxu0 0
  %2727 = vmatpush1.bf16.msra.mxu0 0
  %2728 = vmatprep.subr.bf16.mxu0 0
  %2729 = vmatpush1.bf16.msra.mxu0 0
  %2730 = vmatprep.subr.bf16.mxu0 0
  %2731 = vmatpush1.bf16.msra.mxu0 0
  %2732 = vmatprep.subr.bf16.mxu0 0
  %2733 = vmatpush1.bf16.msra.mxu0 0
  %2734 = vmatprep.mubr.bf16.mxu0 0
  %2735 = vmatmul.mubr.bf16.gmra.mrb[0].mxu0 %v2701
  %v2736 = vpop.f32.mrb[0].mxu0
  %v2737 = vadd.f32 %v1152, %v2736
  %v2738 = vpop.f32.mrb[0].mxu0
  %v2739 = vadd.f32 %v1156, %v2738
  %v2740 = vpop.f32.mrb[0].mxu0
  %v2741 = vadd.f32 %v1152, %v2740
  %v2742 = vpop.f32.mrb[0].mxu0
  %v2743 = vadd.f32 %v1156, %v2742
  %2744 = vdwg.mxu0
  %2745 = vmatprep.subr.bf16.mxu0 0
  %2746 = vmatpush1.bf16.msra.mxu0 %v1246
  %2747 = vmatprep.subr.bf16.mxu0 0
  %2748 = vmatpush1.bf16.msra.mxu0 %v1249
  %2749 = vmatprep.subr.bf16.mxu0 0
  %2750 = vmatpush1.bf16.msra.mxu0 %v1252
  %2751 = vmatprep.subr.bf16.mxu0 0
  %2752 = vmatpush1.bf16.msra.mxu0 %v1255
  %2753 = vmatprep.subr.bf16.mxu0 0
  %2754 = vmatpush1.bf16.msra.mxu0 %v1258
  %2755 = vmatprep.subr.bf16.mxu0 0
  %2756 = vmatpush1.bf16.msra.mxu0 %v1261
  %2757 = vmatprep.subr.bf16.mxu0 0
  %2758 = vmatpush1.bf16.msra.mxu0 %v1264
  %2759 = vmatprep.subr.bf16.mxu0 0
  %2760 = vmatpush1.bf16.msra.mxu0 %v1267
  %2761 = vmatprep.subr.bf16.mxu0 0
  %2762 = vmatpush1.bf16.msra.mxu0 0
  %2763 = vmatprep.subr.bf16.mxu0 0
  %2764 = vmatpush1.bf16.msra.mxu0 0
  %2765 = vmatprep.subr.bf16.mxu0 0
  %2766 = vmatpush1.bf16.msra.mxu0 0
  %2767 = vmatprep.subr.bf16.mxu0 0
  %2768 = vmatpush1.bf16.msra.mxu0 0
  %2769 = vmatprep.subr.bf16.mxu0 0
  %2770 = vmatpush1.bf16.msra.mxu0 0
  %2771 = vmatprep.subr.bf16.mxu0 0
  %2772 = vmatpush1.bf16.msra.mxu0 0
  %2773 = vmatprep.subr.bf16.mxu0 0
  %2774 = vmatpush1.bf16.msra.mxu0 0
  %2775 = vmatprep.subr.bf16.mxu0 0
  %2776 = vmatpush1.bf16.msra.mxu0 0
  %2777 = vmatprep.mubr.bf16.mxu0 0
  %2778 = vmatmul.mubr.bf16.gmra.mrb[0].mxu0 %v2701
  %v2779 = vpop.f32.mrb[0].mxu0
  %v2780 = vadd.f32 %v1160, %v2779
  %v2781 = vpop.f32.mrb[0].mxu0
  %v2782 = vpop.f32.mrb[0].mxu0
  %v2783 = vadd.f32 %v1160, %v2782
  %v2784 = vpop.f32.mrb[0].mxu0
  %2785 = vdwg.mxu0
  %v2786 = vadd.f32 %v2737, %v2524
  %v2787 = vadd.f32 %v2741, %v2528
  %v2788 = vxor.u32 %v2786, 2147483648
  %v2789 = vxor.u32 %v2787, 2147483648
  %v2790 = vmul.f32 %v2788, 1.442695
  %v2791 = vpow.pop %v2790
  %v2792 = vmul.f32 %v2789, 1.442695
  %v2793 = vpow.pop %v2792
  %v2794 = vadd.f32 %v2791, 1.0
  %v2795 = vadd.f32 %v2793, 1.0
  %v2796 = vrcp.pop %v2794
  %v2797 = vmul.f32 1.0, %v2796
  %v2798 = vrcp.pop %v2795
  %v2799 = vmul.f32 1.0, %v2798
  %v2800 = vadd.f32 %v2739, %v2526
  %v2801 = vadd.f32 %v2743, %v2530
  %v2802 = vxor.u32 %v2800, 2147483648
  %v2803 = vxor.u32 %v2801, 2147483648
  %v2804 = vmul.f32 %v2802, 1.442695
  %v2805 = vpow.pop %v2804
  %v2806 = vmul.f32 %v2803, 1.442695
  %v2807 = vpow.pop %v2806
  %v2808 = vadd.f32 %v2805, 1.0
  %v2809 = vadd.f32 %v2807, 1.0
  %v2810 = vrcp.pop %v2808
  %v2811 = vmul.f32 1.0, %v2810
  %v2812 = vrcp.pop %v2809
  %v2813 = vmul.f32 1.0, %v2812
  %v2814 = vadd.f32 %v2567, %v1408
  %v2815 = vadd.f32 %v2570, %v1408
  %v2816 = vmul.f32 %v2797, %v2814
  %v2817 = vmul.f32 %v2799, %v2815
  %v2818 = vadd.f32 %v2780, %v2816
  %v2819 = vadd.f32 %v2783, %v2817
  %v2820 = vtanh.pop %v2818
  %v2821 = vtanh.pop %v2819
  %v2822 = vsub.f32 1.0, %v2811
  %v2823 = vsub.f32 1.0, %v2813
  %v2824 = vmul.f32 %v2822, %v2820
  %v2825 = vmul.f32 %v2823, %v2821
  %v2826 = vmul.f32 %v2811, %v2477
  %v2827 = vmul.f32 %v2813, %v2478
  %v2828 = vadd.f32 %v2824, %v2826
  %v2829 = vadd.f32 %v2825, %v2827
  %s2830 = smul.u32 10, 3
  %s2831 = smul.addr %s2830, 8
  %s2832 = scalar_lea.vmem [#allocation2], %s2831
  %v2833 = vld [vmem:[%s2832] sm:$0xff]
  %v2834 = vld [vmem:[%s2832 + $0x8] sm:$0xff]
  %v2835 = vld [vmem:[%s2832 + $0x10] sm:$0xff]
  %v2836 = vld [vmem:[%s2832 + $0x18] sm:$0xff]
  %v2837 = vld [vmem:[%s2832 + $0x20] sm:$0xff]
  %v2838 = vld [vmem:[%s2832 + $0x28] sm:$0xff]
  %v2839 = vpack.c.bf16 %v2829, %v2828
  %2840 = vmatprep.subr.bf16.mxu0 %v754
  %2841 = vmatpush1.bf16.msra.mxu0 %v753
  %2842 = vmatprep.subr.bf16.mxu0 %v757
  %2843 = vmatpush1.bf16.msra.mxu0 %v756
  %2844 = vmatprep.subr.bf16.mxu0 %v760
  %2845 = vmatpush1.bf16.msra.mxu0 %v759
  %2846 = vmatprep.subr.bf16.mxu0 %v763
  %2847 = vmatpush1.bf16.msra.mxu0 %v762
  %2848 = vmatprep.subr.bf16.mxu0 %v766
  %2849 = vmatpush1.bf16.msra.mxu0 %v765
  %2850 = vmatprep.subr.bf16.mxu0 %v769
  %2851 = vmatpush1.bf16.msra.mxu0 %v768
  %2852 = vmatprep.subr.bf16.mxu0 %v772
  %2853 = vmatpush1.bf16.msra.mxu0 %v771
  %2854 = vmatprep.subr.bf16.mxu0 %v775
  %2855 = vmatpush1.bf16.msra.mxu0 %v774
  %2856 = vmatprep.subr.bf16.mxu0 0
  %2857 = vmatpush1.bf16.msra.mxu0 0
  %2858 = vmatprep.subr.bf16.mxu0 0
  %2859 = vmatpush1.bf16.msra.mxu0 0
  %2860 = vmatprep.subr.bf16.mxu0 0
  %2861 = vmatpush1.bf16.msra.mxu0 0
  %2862 = vmatprep.subr.bf16.mxu0 0
  %2863 = vmatpush1.bf16.msra.mxu0 0
  %2864 = vmatprep.subr.bf16.mxu0 0
  %2865 = vmatpush1.bf16.msra.mxu0 0
  %2866 = vmatprep.subr.bf16.mxu0 0
  %2867 = vmatpush1.bf16.msra.mxu0 0
  %2868 = vmatprep.subr.bf16.mxu0 0
  %2869 = vmatpush1.bf16.msra.mxu0 0
  %2870 = vmatprep.subr.bf16.mxu0 0
  %2871 = vmatpush1.bf16.msra.mxu0 0
  %2872 = vmatprep.mubr.bf16.mxu0 0
  %2873 = vmatmul.mubr.bf16.gmra.mrb[0].mxu0 %v2839
  %v2874 = vpop.f32.mrb[0].mxu0
  %v2875 = vadd.f32 0.0, %v2874
  %v2876 = vpop.f32.mrb[0].mxu0
  %v2877 = vadd.f32 0.0, %v2876
  %v2878 = vpop.f32.mrb[0].mxu0
  %v2879 = vadd.f32 0.0, %v2878
  %v2880 = vpop.f32.mrb[0].mxu0
  %v2881 = vadd.f32 0.0, %v2880
  %2882 = vdwg.mxu0
  %2883 = vmatprep.subr.bf16.mxu0 0
  %2884 = vmatpush1.bf16.msra.mxu0 %v755
  %2885 = vmatprep.subr.bf16.mxu0 0
  %2886 = vmatpush1.bf16.msra.mxu0 %v758
  %2887 = vmatprep.subr.bf16.mxu0 0
  %2888 = vmatpush1.bf16.msra.mxu0 %v761
  %2889 = vmatprep.subr.bf16.mxu0 0
  %2890 = vmatpush1.bf16.msra.mxu0 %v764
  %2891 = vmatprep.subr.bf16.mxu0 0
  %2892 = vmatpush1.bf16.msra.mxu0 %v767
  %2893 = vmatprep.subr.bf16.mxu0 0
  %2894 = vmatpush1.bf16.msra.mxu0 %v770
  %2895 = vmatprep.subr.bf16.mxu0 0
  %2896 = vmatpush1.bf16.msra.mxu0 %v773
  %2897 = vmatprep.subr.bf16.mxu0 0
  %2898 = vmatpush1.bf16.msra.mxu0 %v776
  %2899 = vmatprep.subr.bf16.mxu0 0
  %2900 = vmatpush1.bf16.msra.mxu0 0
  %2901 = vmatprep.subr.bf16.mxu0 0
  %2902 = vmatpush1.bf16.msra.mxu0 0
  %2903 = vmatprep.subr.bf16.mxu0 0
  %2904 = vmatpush1.bf16.msra.mxu0 0
  %2905 = vmatprep.subr.bf16.mxu0 0
  %2906 = vmatpush1.bf16.msra.mxu0 0
  %2907 = vmatprep.subr.bf16.mxu0 0
  %2908 = vmatpush1.bf16.msra.mxu0 0
  %2909 = vmatprep.subr.bf16.mxu0 0
  %2910 = vmatpush1.bf16.msra.mxu0 0
  %2911 = vmatprep.subr.bf16.mxu0 0
  %2912 = vmatpush1.bf16.msra.mxu0 0
  %2913 = vmatprep.subr.bf16.mxu0 0
  %2914 = vmatpush1.bf16.msra.mxu0 0
  %2915 = vmatprep.mubr.bf16.mxu0 0
  %2916 = vmatmul.mubr.bf16.gmra.mrb[0].mxu0 %v2839
  %v2917 = vpop.f32.mrb[0].mxu0
  %v2918 = vadd.f32 0.0, %v2917
  %v2919 = vpop.f32.mrb[0].mxu0
  %v2920 = vpop.f32.mrb[0].mxu0
  %v2921 = vadd.f32 0.0, %v2920
  %v2922 = vpop.f32.mrb[0].mxu0
  %2923 = vdwg.mxu0
  %2924 = vmatprep.subr.bf16.mxu0 %v966
  %2925 = vmatpush1.bf16.msra.mxu0 %v965
  %2926 = vmatprep.subr.bf16.mxu0 %v969
  %2927 = vmatpush1.bf16.msra.mxu0 %v968
  %2928 = vmatprep.subr.bf16.mxu0 %v972
  %2929 = vmatpush1.bf16.msra.mxu0 %v971
  %2930 = vmatprep.subr.bf16.mxu0 %v975
  %2931 = vmatpush1.bf16.msra.mxu0 %v974
  %2932 = vmatprep.subr.bf16.mxu0 %v978
  %2933 = vmatpush1.bf16.msra.mxu0 %v977
  %2934 = vmatprep.subr.bf16.mxu0 %v981
  %2935 = vmatpush1.bf16.msra.mxu0 %v980
  %2936 = vmatprep.subr.bf16.mxu0 %v984
  %2937 = vmatpush1.bf16.msra.mxu0 %v983
  %2938 = vmatprep.subr.bf16.mxu0 %v987
  %2939 = vmatpush1.bf16.msra.mxu0 %v986
  %2940 = vmatprep.subr.bf16.mxu0 0
  %2941 = vmatpush1.bf16.msra.mxu0 0
  %2942 = vmatprep.subr.bf16.mxu0 0
  %2943 = vmatpush1.bf16.msra.mxu0 0
  %2944 = vmatprep.subr.bf16.mxu0 0
  %2945 = vmatpush1.bf16.msra.mxu0 0
  %2946 = vmatprep.subr.bf16.mxu0 0
  %2947 = vmatpush1.bf16.msra.mxu0 0
  %2948 = vmatprep.subr.bf16.mxu0 0
  %2949 = vmatpush1.bf16.msra.mxu0 0
  %2950 = vmatprep.subr.bf16.mxu0 0
  %2951 = vmatpush1.bf16.msra.mxu0 0
  %2952 = vmatprep.subr.bf16.mxu0 0
  %2953 = vmatpush1.bf16.msra.mxu0 0
  %2954 = vmatprep.subr.bf16.mxu0 0
  %2955 = vmatpush1.bf16.msra.mxu0 0
  %2956 = vmatprep.mubr.bf16.mxu0 0
  %2957 = vmatmul.mubr.bf16.gmra.mrb[0].mxu0 %v2701
  %v2958 = vpop.f32.mrb[0].mxu0
  %v2959 = vadd.f32 0.0, %v2958
  %v2960 = vpop.f32.mrb[0].mxu0
  %v2961 = vadd.f32 0.0, %v2960
  %v2962 = vpop.f32.mrb[0].mxu0
  %v2963 = vadd.f32 0.0, %v2962
  %v2964 = vpop.f32.mrb[0].mxu0
  %v2965 = vadd.f32 0.0, %v2964
  %2966 = vdwg.mxu0
  %2967 = vmatprep.subr.bf16.mxu0 0
  %2968 = vmatpush1.bf16.msra.mxu0 %v967
  %2969 = vmatprep.subr.bf16.mxu0 0
  %2970 = vmatpush1.bf16.msra.mxu0 %v970
  %2971 = vmatprep.subr.bf16.mxu0 0
  %2972 = vmatpush1.bf16.msra.mxu0 %v973
  %2973 = vmatprep.subr.bf16.mxu0 0
  %2974 = vmatpush1.bf16.msra.mxu0 %v976
  %2975 = vmatprep.subr.bf16.mxu0 0
  %2976 = vmatpush1.bf16.msra.mxu0 %v979
  %2977 = vmatprep.subr.bf16.mxu0 0
  %2978 = vmatpush1.bf16.msra.mxu0 %v982
  %2979 = vmatprep.subr.bf16.mxu0 0
  %2980 = vmatpush1.bf16.msra.mxu0 %v985
  %2981 = vmatprep.subr.bf16.mxu0 0
  %2982 = vmatpush1.bf16.msra.mxu0 %v988
  %2983 = vmatprep.subr.bf16.mxu0 0
  %2984 = vmatpush1.bf16.msra.mxu0 0
  %2985 = vmatprep.subr.bf16.mxu0 0
  %2986 = vmatpush1.bf16.msra.mxu0 0
  %2987 = vmatprep.subr.bf16.mxu0 0
  %2988 = vmatpush1.bf16.msra.mxu0 0
  %2989 = vmatprep.subr.bf16.mxu0 0
  %2990 = vmatpush1.bf16.msra.mxu0 0
  %2991 = vmatprep.subr.bf16.mxu0 0
  %2992 = vmatpush1.bf16.msra.mxu0 0
  %2993 = vmatprep.subr.bf16.mxu0 0
  %2994 = vmatpush1.bf16.msra.mxu0 0
  %2995 = vmatprep.subr.bf16.mxu0 0
  %2996 = vmatpush1.bf16.msra.mxu0 0
  %2997 = vmatprep.subr.bf16.mxu0 0
  %2998 = vmatpush1.bf16.msra.mxu0 0
  %2999 = vmatprep.mubr.bf16.mxu0 0
  %3000 = vmatmul.mubr.bf16.gmra.mrb[0].mxu0 %v2701
  %v3001 = vpop.f32.mrb[0].mxu0
  %v3002 = vadd.f32 0.0, %v3001
  %v3003 = vpop.f32.mrb[0].mxu0
  %v3004 = vpop.f32.mrb[0].mxu0
  %v3005 = vadd.f32 0.0, %v3004
  %v3006 = vpop.f32.mrb[0].mxu0
  %3007 = vdwg.mxu0
  %v3008 = vadd.f32 %v2833, %v2959
  %v3009 = vadd.f32 %v2836, %v2963
  %v3010 = vxor.u32 %v3008, 2147483648
  %v3011 = vxor.u32 %v3009, 2147483648
  %v3012 = vmul.f32 %v3010, 1.442695
  %v3013 = vpow.pop %v3012
  %v3014 = vmul.f32 %v3011, 1.442695
  %v3015 = vpow.pop %v3014
  %v3016 = vadd.f32 %v3013, 1.0
  %v3017 = vadd.f32 %v3015, 1.0
  %v3018 = vrcp.pop %v3016
  %v3019 = vmul.f32 1.0, %v3018
  %v3020 = vrcp.pop %v3017
  %v3021 = vmul.f32 1.0, %v3020
  %v3022 = vadd.f32 %v2834, %v2961
  %v3023 = vadd.f32 %v2837, %v2965
  %v3024 = vxor.u32 %v3022, 2147483648
  %v3025 = vxor.u32 %v3023, 2147483648
  %v3026 = vmul.f32 %v3024, 1.442695
  %v3027 = vpow.pop %v3026
  %v3028 = vmul.f32 %v3025, 1.442695
  %v3029 = vpow.pop %v3028
  %v3030 = vadd.f32 %v3027, 1.0
  %v3031 = vadd.f32 %v3029, 1.0
  %v3032 = vrcp.pop %v3030
  %v3033 = vmul.f32 1.0, %v3032
  %v3034 = vrcp.pop %v3031
  %v3035 = vmul.f32 1.0, %v3034
  %v3036 = vadd.f32 %v3002, %v1129
  %v3037 = vadd.f32 %v3005, %v1129
  %v3038 = vmul.f32 %v3019, %v3036
  %v3039 = vmul.f32 %v3021, %v3037
  %v3040 = vadd.f32 %v2835, %v3038
  %v3041 = vadd.f32 %v2838, %v3039
  %v3042 = vtanh.pop %v3040
  %v3043 = vtanh.pop %v3041
  %v3044 = vsub.f32 1.0, %v3033
  %v3045 = vsub.f32 1.0, %v3035
  %v3046 = vmul.f32 %v3044, %v3042
  %v3047 = vmul.f32 %v3045, %v3043
  %v3048 = vmul.f32 %v3033, %v2699
  %v3049 = vmul.f32 %v3035, %v2700
  %v3050 = vadd.f32 %v3046, %v3048
  %v3051 = vadd.f32 %v3047, %v3049
  %v3052 = vpack.c.bf16 %v3051, %v3050
  %3053 = vmatprep.subr.bf16.mxu0 %v1245
  %3054 = vmatpush1.bf16.msra.mxu0 %v1244
  %3055 = vmatprep.subr.bf16.mxu0 %v1248
  %3056 = vmatpush1.bf16.msra.mxu0 %v1247
  %3057 = vmatprep.subr.bf16.mxu0 %v1251
  %3058 = vmatpush1.bf16.msra.mxu0 %v1250
  %3059 = vmatprep.subr.bf16.mxu0 %v1254
  %3060 = vmatpush1.bf16.msra.mxu0 %v1253
  %3061 = vmatprep.subr.bf16.mxu0 %v1257
  %3062 = vmatpush1.bf16.msra.mxu0 %v1256
  %3063 = vmatprep.subr.bf16.mxu0 %v1260
  %3064 = vmatpush1.bf16.msra.mxu0 %v1259
  %3065 = vmatprep.subr.bf16.mxu0 %v1263
  %3066 = vmatpush1.bf16.msra.mxu0 %v1262
  %3067 = vmatprep.subr.bf16.mxu0 %v1266
  %3068 = vmatpush1.bf16.msra.mxu0 %v1265
  %3069 = vmatprep.subr.bf16.mxu0 0
  %3070 = vmatpush1.bf16.msra.mxu0 0
  %3071 = vmatprep.subr.bf16.mxu0 0
  %3072 = vmatpush1.bf16.msra.mxu0 0
  %3073 = vmatprep.subr.bf16.mxu0 0
  %3074 = vmatpush1.bf16.msra.mxu0 0
  %3075 = vmatprep.subr.bf16.mxu0 0
  %3076 = vmatpush1.bf16.msra.mxu0 0
  %3077 = vmatprep.subr.bf16.mxu0 0
  %3078 = vmatpush1.bf16.msra.mxu0 0
  %3079 = vmatprep.subr.bf16.mxu0 0
  %3080 = vmatpush1.bf16.msra.mxu0 0
  %3081 = vmatprep.subr.bf16.mxu0 0
  %3082 = vmatpush1.bf16.msra.mxu0 0
  %3083 = vmatprep.subr.bf16.mxu0 0
  %3084 = vmatpush1.bf16.msra.mxu0 0
  %3085 = vmatprep.mubr.bf16.mxu0 0
  %3086 = vmatmul.mubr.bf16.gmra.mrb[0].mxu0 %v3052
  %v3087 = vpop.f32.mrb[0].mxu0
  %v3088 = vadd.f32 %v1152, %v3087
  %v3089 = vpop.f32.mrb[0].mxu0
  %v3090 = vadd.f32 %v1156, %v3089
  %v3091 = vpop.f32.mrb[0].mxu0
  %v3092 = vadd.f32 %v1152, %v3091
  %v3093 = vpop.f32.mrb[0].mxu0
  %v3094 = vadd.f32 %v1156, %v3093
  %3095 = vdwg.mxu0
  %3096 = vmatprep.subr.bf16.mxu0 0
  %3097 = vmatpush1.bf16.msra.mxu0 %v1246
  %3098 = vmatprep.subr.bf16.mxu0 0
  %3099 = vmatpush1.bf16.msra.mxu0 %v1249
  %3100 = vmatprep.subr.bf16.mxu0 0
  %3101 = vmatpush1.bf16.msra.mxu0 %v1252
  %3102 = vmatprep.subr.bf16.mxu0 0
  %3103 = vmatpush1.bf16.msra.mxu0 %v1255
  %3104 = vmatprep.subr.bf16.mxu0 0
  %3105 = vmatpush1.bf16.msra.mxu0 %v1258
  %3106 = vmatprep.subr.bf16.mxu0 0
  %3107 = vmatpush1.bf16.msra.mxu0 %v1261
  %3108 = vmatprep.subr.bf16.mxu0 0
  %3109 = vmatpush1.bf16.msra.mxu0 %v1264
  %3110 = vmatprep.subr.bf16.mxu0 0
  %3111 = vmatpush1.bf16.msra.mxu0 %v1267
  %3112 = vmatprep.subr.bf16.mxu0 0
  %3113 = vmatpush1.bf16.msra.mxu0 0
  %3114 = vmatprep.subr.bf16.mxu0 0
  %3115 = vmatpush1.bf16.msra.mxu0 0
  %3116 = vmatprep.subr.bf16.mxu0 0
  %3117 = vmatpush1.bf16.msra.mxu0 0
  %3118 = vmatprep.subr.bf16.mxu0 0
  %3119 = vmatpush1.bf16.msra.mxu0 0
  %3120 = vmatprep.subr.bf16.mxu0 0
  %3121 = vmatpush1.bf16.msra.mxu0 0
  %3122 = vmatprep.subr.bf16.mxu0 0
  %3123 = vmatpush1.bf16.msra.mxu0 0
  %3124 = vmatprep.subr.bf16.mxu0 0
  %3125 = vmatpush1.bf16.msra.mxu0 0
  %3126 = vmatprep.subr.bf16.mxu0 0
  %3127 = vmatpush1.bf16.msra.mxu0 0
  %3128 = vmatprep.mubr.bf16.mxu0 0
  %3129 = vmatmul.mubr.bf16.gmra.mrb[0].mxu0 %v3052
  %v3130 = vpop.f32.mrb[0].mxu0
  %v3131 = vadd.f32 %v1160, %v3130
  %v3132 = vpop.f32.mrb[0].mxu0
  %v3133 = vpop.f32.mrb[0].mxu0
  %v3134 = vadd.f32 %v1160, %v3133
  %v3135 = vpop.f32.mrb[0].mxu0
  %3136 = vdwg.mxu0
  %v3137 = vadd.f32 %v3088, %v2875
  %v3138 = vadd.f32 %v3092, %v2879
  %v3139 = vxor.u32 %v3137, 2147483648
  %v3140 = vxor.u32 %v3138, 2147483648
  %v3141 = vmul.f32 %v3139, 1.442695
  %v3142 = vpow.pop %v3141
  %v3143 = vmul.f32 %v3140, 1.442695
  %v3144 = vpow.pop %v3143
  %v3145 = vadd.f32 %v3142, 1.0
  %v3146 = vadd.f32 %v3144, 1.0
  %v3147 = vrcp.pop %v3145
  %v3148 = vmul.f32 1.0, %v3147
  %v3149 = vrcp.pop %v3146
  %v3150 = vmul.f32 1.0, %v3149
  %v3151 = vadd.f32 %v3090, %v2877
  %v3152 = vadd.f32 %v3094, %v2881
  %v3153 = vxor.u32 %v3151, 2147483648
  %v3154 = vxor.u32 %v3152, 2147483648
  %v3155 = vmul.f32 %v3153, 1.442695
  %v3156 = vpow.pop %v3155
  %v3157 = vmul.f32 %v3154, 1.442695
  %v3158 = vpow.pop %v3157
  %v3159 = vadd.f32 %v3156, 1.0
  %v3160 = vadd.f32 %v3158, 1.0
  %v3161 = vrcp.pop %v3159
  %v3162 = vmul.f32 1.0, %v3161
  %v3163 = vrcp.pop %v3160
  %v3164 = vmul.f32 1.0, %v3163
  %v3165 = vadd.f32 %v2918, %v1408
  %v3166 = vadd.f32 %v2921, %v1408
  %v3167 = vmul.f32 %v3148, %v3165
  %v3168 = vmul.f32 %v3150, %v3166
  %v3169 = vadd.f32 %v3131, %v3167
  %v3170 = vadd.f32 %v3134, %v3168
  %v3171 = vtanh.pop %v3169
  %v3172 = vtanh.pop %v3170
  %v3173 = vsub.f32 1.0, %v3162
  %v3174 = vsub.f32 1.0, %v3164
  %v3175 = vmul.f32 %v3173, %v3171
  %v3176 = vmul.f32 %v3174, %v3172
  %v3177 = vmul.f32 %v3162, %v2828
  %v3178 = vmul.f32 %v3164, %v2829
  %v3179 = vadd.f32 %v3175, %v3177
  %v3180 = vadd.f32 %v3176, %v3178
  %s3181 = smul.u32 12, 3
  %s3182 = smul.addr %s3181, 8
  %s3183 = scalar_lea.vmem [#allocation2], %s3182
  %v3184 = vld [vmem:[%s3183] sm:$0xff]
  %v3185 = vld [vmem:[%s3183 + $0x8] sm:$0xff]
  %v3186 = vld [vmem:[%s3183 + $0x10] sm:$0xff]
  %v3187 = vld [vmem:[%s3183 + $0x18] sm:$0xff]
  %v3188 = vld [vmem:[%s3183 + $0x20] sm:$0xff]
  %v3189 = vld [vmem:[%s3183 + $0x28] sm:$0xff]
  %v3190 = vpack.c.bf16 %v3180, %v3179
  %3191 = vmatprep.subr.bf16.mxu0 %v754
  %3192 = vmatpush1.bf16.msra.mxu0 %v753
  %3193 = vmatprep.subr.bf16.mxu0 %v757
  %3194 = vmatpush1.bf16.msra.mxu0 %v756
  %3195 = vmatprep.subr.bf16.mxu0 %v760
  %3196 = vmatpush1.bf16.msra.mxu0 %v759
  %3197 = vmatprep.subr.bf16.mxu0 %v763
  %3198 = vmatpush1.bf16.msra.mxu0 %v762
  %3199 = vmatprep.subr.bf16.mxu0 %v766
  %3200 = vmatpush1.bf16.msra.mxu0 %v765
  %3201 = vmatprep.subr.bf16.mxu0 %v769
  %3202 = vmatpush1.bf16.msra.mxu0 %v768
  %3203 = vmatprep.subr.bf16.mxu0 %v772
  %3204 = vmatpush1.bf16.msra.mxu0 %v771
  %3205 = vmatprep.subr.bf16.mxu0 %v775
  %3206 = vmatpush1.bf16.msra.mxu0 %v774
  %3207 = vmatprep.subr.bf16.mxu0 0
  %3208 = vmatpush1.bf16.msra.mxu0 0
  %3209 = vmatprep.subr.bf16.mxu0 0
  %3210 = vmatpush1.bf16.msra.mxu0 0
  %3211 = vmatprep.subr.bf16.mxu0 0
  %3212 = vmatpush1.bf16.msra.mxu0 0
  %3213 = vmatprep.subr.bf16.mxu0 0
  %3214 = vmatpush1.bf16.msra.mxu0 0
  %3215 = vmatprep.subr.bf16.mxu0 0
  %3216 = vmatpush1.bf16.msra.mxu0 0
  %3217 = vmatprep.subr.bf16.mxu0 0
  %3218 = vmatpush1.bf16.msra.mxu0 0
  %3219 = vmatprep.subr.bf16.mxu0 0
  %3220 = vmatpush1.bf16.msra.mxu0 0
  %3221 = vmatprep.subr.bf16.mxu0 0
  %3222 = vmatpush1.bf16.msra.mxu0 0
  %3223 = vmatprep.mubr.bf16.mxu0 0
  %3224 = vmatmul.mubr.bf16.gmra.mrb[0].mxu0 %v3190
  %v3225 = vpop.f32.mrb[0].mxu0
  %v3226 = vadd.f32 0.0, %v3225
  %v3227 = vpop.f32.mrb[0].mxu0
  %v3228 = vadd.f32 0.0, %v3227
  %v3229 = vpop.f32.mrb[0].mxu0
  %v3230 = vadd.f32 0.0, %v3229
  %v3231 = vpop.f32.mrb[0].mxu0
  %v3232 = vadd.f32 0.0, %v3231
  %3233 = vdwg.mxu0
  %3234 = vmatprep.subr.bf16.mxu0 0
  %3235 = vmatpush1.bf16.msra.mxu0 %v755
  %3236 = vmatprep.subr.bf16.mxu0 0
  %3237 = vmatpush1.bf16.msra.mxu0 %v758
  %3238 = vmatprep.subr.bf16.mxu0 0
  %3239 = vmatpush1.bf16.msra.mxu0 %v761
  %3240 = vmatprep.subr.bf16.mxu0 0
  %3241 = vmatpush1.bf16.msra.mxu0 %v764
  %3242 = vmatprep.subr.bf16.mxu0 0
  %3243 = vmatpush1.bf16.msra.mxu0 %v767
  %3244 = vmatprep.subr.bf16.mxu0 0
  %3245 = vmatpush1.bf16.msra.mxu0 %v770
  %3246 = vmatprep.subr.bf16.mxu0 0
  %3247 = vmatpush1.bf16.msra.mxu0 %v773
  %3248 = vmatprep.subr.bf16.mxu0 0
  %3249 = vmatpush1.bf16.msra.mxu0 %v776
  %3250 = vmatprep.subr.bf16.mxu0 0
  %3251 = vmatpush1.bf16.msra.mxu0 0
  %3252 = vmatprep.subr.bf16.mxu0 0
  %3253 = vmatpush1.bf16.msra.mxu0 0
  %3254 = vmatprep.subr.bf16.mxu0 0
  %3255 = vmatpush1.bf16.msra.mxu0 0
  %3256 = vmatprep.subr.bf16.mxu0 0
  %3257 = vmatpush1.bf16.msra.mxu0 0
  %3258 = vmatprep.subr.bf16.mxu0 0
  %3259 = vmatpush1.bf16.msra.mxu0 0
  %3260 = vmatprep.subr.bf16.mxu0 0
  %3261 = vmatpush1.bf16.msra.mxu0 0
  %3262 = vmatprep.subr.bf16.mxu0 0
  %3263 = vmatpush1.bf16.msra.mxu0 0
  %3264 = vmatprep.subr.bf16.mxu0 0
  %3265 = vmatpush1.bf16.msra.mxu0 0
  %3266 = vmatprep.mubr.bf16.mxu0 0
  %3267 = vmatmul.mubr.bf16.gmra.mrb[0].mxu0 %v3190
  %v3268 = vpop.f32.mrb[0].mxu0
  %v3269 = vadd.f32 0.0, %v3268
  %v3270 = vpop.f32.mrb[0].mxu0
  %v3271 = vpop.f32.mrb[0].mxu0
  %v3272 = vadd.f32 0.0, %v3271
  %v3273 = vpop.f32.mrb[0].mxu0
  %3274 = vdwg.mxu0
  %3275 = vmatprep.subr.bf16.mxu0 %v966
  %3276 = vmatpush1.bf16.msra.mxu0 %v965
  %3277 = vmatprep.subr.bf16.mxu0 %v969
  %3278 = vmatpush1.bf16.msra.mxu0 %v968
  %3279 = vmatprep.subr.bf16.mxu0 %v972
  %3280 = vmatpush1.bf16.msra.mxu0 %v971
  %3281 = vmatprep.subr.bf16.mxu0 %v975
  %3282 = vmatpush1.bf16.msra.mxu0 %v974
  %3283 = vmatprep.subr.bf16.mxu0 %v978
  %3284 = vmatpush1.bf16.msra.mxu0 %v977
  %3285 = vmatprep.subr.bf16.mxu0 %v981
  %3286 = vmatpush1.bf16.msra.mxu0 %v980
  %3287 = vmatprep.subr.bf16.mxu0 %v984
  %3288 = vmatpush1.bf16.msra.mxu0 %v983
  %3289 = vmatprep.subr.bf16.mxu0 %v987
  %3290 = vmatpush1.bf16.msra.mxu0 %v986
  %3291 = vmatprep.subr.bf16.mxu0 0
  %3292 = vmatpush1.bf16.msra.mxu0 0
  %3293 = vmatprep.subr.bf16.mxu0 0
  %3294 = vmatpush1.bf16.msra.mxu0 0
  %3295 = vmatprep.subr.bf16.mxu0 0
  %3296 = vmatpush1.bf16.msra.mxu0 0
  %3297 = vmatprep.subr.bf16.mxu0 0
  %3298 = vmatpush1.bf16.msra.mxu0 0
  %3299 = vmatprep.subr.bf16.mxu0 0
  %3300 = vmatpush1.bf16.msra.mxu0 0
  %3301 = vmatprep.subr.bf16.mxu0 0
  %3302 = vmatpush1.bf16.msra.mxu0 0
  %3303 = vmatprep.subr.bf16.mxu0 0
  %3304 = vmatpush1.bf16.msra.mxu0 0
  %3305 = vmatprep.subr.bf16.mxu0 0
  %3306 = vmatpush1.bf16.msra.mxu0 0
  %3307 = vmatprep.mubr.bf16.mxu0 0
  %3308 = vmatmul.mubr.bf16.gmra.mrb[0].mxu0 %v3052
  %v3309 = vpop.f32.mrb[0].mxu0
  %v3310 = vadd.f32 0.0, %v3309
  %v3311 = vpop.f32.mrb[0].mxu0
  %v3312 = vadd.f32 0.0, %v3311
  %v3313 = vpop.f32.mrb[0].mxu0
  %v3314 = vadd.f32 0.0, %v3313
  %v3315 = vpop.f32.mrb[0].mxu0
  %v3316 = vadd.f32 0.0, %v3315
  %3317 = vdwg.mxu0
  %3318 = vmatprep.subr.bf16.mxu0 0
  %3319 = vmatpush1.bf16.msra.mxu0 %v967
  %3320 = vmatprep.subr.bf16.mxu0 0
  %3321 = vmatpush1.bf16.msra.mxu0 %v970
  %3322 = vmatprep.subr.bf16.mxu0 0
  %3323 = vmatpush1.bf16.msra.mxu0 %v973
  %3324 = vmatprep.subr.bf16.mxu0 0
  %3325 = vmatpush1.bf16.msra.mxu0 %v976
  %3326 = vmatprep.subr.bf16.mxu0 0
  %3327 = vmatpush1.bf16.msra.mxu0 %v979
  %3328 = vmatprep.subr.bf16.mxu0 0
  %3329 = vmatpush1.bf16.msra.mxu0 %v982
  %3330 = vmatprep.subr.bf16.mxu0 0
  %3331 = vmatpush1.bf16.msra.mxu0 %v985
  %3332 = vmatprep.subr.bf16.mxu0 0
  %3333 = vmatpush1.bf16.msra.mxu0 %v988
  %3334 = vmatprep.subr.bf16.mxu0 0
  %3335 = vmatpush1.bf16.msra.mxu0 0
  %3336 = vmatprep.subr.bf16.mxu0 0
  %3337 = vmatpush1.bf16.msra.mxu0 0
  %3338 = vmatprep.subr.bf16.mxu0 0
  %3339 = vmatpush1.bf16.msra.mxu0 0
  %3340 = vmatprep.subr.bf16.mxu0 0
  %3341 = vmatpush1.bf16.msra.mxu0 0
  %3342 = vmatprep.subr.bf16.mxu0 0
  %3343 = vmatpush1.bf16.msra.mxu0 0
  %3344 = vmatprep.subr.bf16.mxu0 0
  %3345 = vmatpush1.bf16.msra.mxu0 0
  %3346 = vmatprep.subr.bf16.mxu0 0
  %3347 = vmatpush1.bf16.msra.mxu0 0
  %3348 = vmatprep.subr.bf16.mxu0 0
  %3349 = vmatpush1.bf16.msra.mxu0 0
  %3350 = vmatprep.mubr.bf16.mxu0 0
  %3351 = vmatmul.mubr.bf16.gmra.mrb[0].mxu0 %v3052
  %v3352 = vpop.f32.mrb[0].mxu0
  %v3353 = vadd.f32 0.0, %v3352
  %v3354 = vpop.f32.mrb[0].mxu0
  %v3355 = vpop.f32.mrb[0].mxu0
  %v3356 = vadd.f32 0.0, %v3355
  %v3357 = vpop.f32.mrb[0].mxu0
  %3358 = vdwg.mxu0
  %v3359 = vadd.f32 %v3184, %v3310
  %v3360 = vadd.f32 %v3187, %v3314
  %v3361 = vxor.u32 %v3359, 2147483648
  %v3362 = vxor.u32 %v3360, 2147483648
  %v3363 = vmul.f32 %v3361, 1.442695
  %v3364 = vpow.pop %v3363
  %v3365 = vmul.f32 %v3362, 1.442695
  %v3366 = vpow.pop %v3365
  %v3367 = vadd.f32 %v3364, 1.0
  %v3368 = vadd.f32 %v3366, 1.0
  %v3369 = vrcp.pop %v3367
  %v3370 = vmul.f32 1.0, %v3369
  %v3371 = vrcp.pop %v3368
  %v3372 = vmul.f32 1.0, %v3371
  %v3373 = vadd.f32 %v3185, %v3312
  %v3374 = vadd.f32 %v3188, %v3316
  %v3375 = vxor.u32 %v3373, 2147483648
  %v3376 = vxor.u32 %v3374, 2147483648
  %v3377 = vmul.f32 %v3375, 1.442695
  %v3378 = vpow.pop %v3377
  %v3379 = vmul.f32 %v3376, 1.442695
  %v3380 = vpow.pop %v3379
  %v3381 = vadd.f32 %v3378, 1.0
  %v3382 = vadd.f32 %v3380, 1.0
  %v3383 = vrcp.pop %v3381
  %v3384 = vmul.f32 1.0, %v3383
  %v3385 = vrcp.pop %v3382
  %v3386 = vmul.f32 1.0, %v3385
  %v3387 = vadd.f32 %v3353, %v1129
  %v3388 = vadd.f32 %v3356, %v1129
  %v3389 = vmul.f32 %v3370, %v3387
  %v3390 = vmul.f32 %v3372, %v3388
  %v3391 = vadd.f32 %v3186, %v3389
  %v3392 = vadd.f32 %v3189, %v3390
  %v3393 = vtanh.pop %v3391
  %v3394 = vtanh.pop %v3392
  %v3395 = vsub.f32 1.0, %v3384
  %v3396 = vsub.f32 1.0, %v3386
  %v3397 = vmul.f32 %v3395, %v3393
  %v3398 = vmul.f32 %v3396, %v3394
  %v3399 = vmul.f32 %v3384, %v3050
  %v3400 = vmul.f32 %v3386, %v3051
  %v3401 = vadd.f32 %v3397, %v3399
  %v3402 = vadd.f32 %v3398, %v3400
  %v3403 = vpack.c.bf16 %v3402, %v3401
  %3404 = vmatprep.subr.bf16.mxu0 %v1245
  %3405 = vmatpush1.bf16.msra.mxu0 %v1244
  %3406 = vmatprep.subr.bf16.mxu0 %v1248
  %3407 = vmatpush1.bf16.msra.mxu0 %v1247
  %3408 = vmatprep.subr.bf16.mxu0 %v1251
  %3409 = vmatpush1.bf16.msra.mxu0 %v1250
  %3410 = vmatprep.subr.bf16.mxu0 %v1254
  %3411 = vmatpush1.bf16.msra.mxu0 %v1253
  %3412 = vmatprep.subr.bf16.mxu0 %v1257
  %3413 = vmatpush1.bf16.msra.mxu0 %v1256
  %3414 = vmatprep.subr.bf16.mxu0 %v1260
  %3415 = vmatpush1.bf16.msra.mxu0 %v1259
  %3416 = vmatprep.subr.bf16.mxu0 %v1263
  %3417 = vmatpush1.bf16.msra.mxu0 %v1262
  %3418 = vmatprep.subr.bf16.mxu0 %v1266
  %3419 = vmatpush1.bf16.msra.mxu0 %v1265
  %3420 = vmatprep.subr.bf16.mxu0 0
  %3421 = vmatpush1.bf16.msra.mxu0 0
  %3422 = vmatprep.subr.bf16.mxu0 0
  %3423 = vmatpush1.bf16.msra.mxu0 0
  %3424 = vmatprep.subr.bf16.mxu0 0
  %3425 = vmatpush1.bf16.msra.mxu0 0
  %3426 = vmatprep.subr.bf16.mxu0 0
  %3427 = vmatpush1.bf16.msra.mxu0 0
  %3428 = vmatprep.subr.bf16.mxu0 0
  %3429 = vmatpush1.bf16.msra.mxu0 0
  %3430 = vmatprep.subr.bf16.mxu0 0
  %3431 = vmatpush1.bf16.msra.mxu0 0
  %3432 = vmatprep.subr.bf16.mxu0 0
  %3433 = vmatpush1.bf16.msra.mxu0 0
  %3434 = vmatprep.subr.bf16.mxu0 0
  %3435 = vmatpush1.bf16.msra.mxu0 0
  %3436 = vmatprep.mubr.bf16.mxu0 0
  %3437 = vmatmul.mubr.bf16.gmra.mrb[0].mxu0 %v3403
  %v3438 = vpop.f32.mrb[0].mxu0
  %v3439 = vadd.f32 %v1152, %v3438
  %v3440 = vpop.f32.mrb[0].mxu0
  %v3441 = vadd.f32 %v1156, %v3440
  %v3442 = vpop.f32.mrb[0].mxu0
  %v3443 = vadd.f32 %v1152, %v3442
  %v3444 = vpop.f32.mrb[0].mxu0
  %v3445 = vadd.f32 %v1156, %v3444
  %3446 = vdwg.mxu0
  %3447 = vmatprep.subr.bf16.mxu0 0
  %3448 = vmatpush1.bf16.msra.mxu0 %v1246
  %3449 = vmatprep.subr.bf16.mxu0 0
  %3450 = vmatpush1.bf16.msra.mxu0 %v1249
  %3451 = vmatprep.subr.bf16.mxu0 0
  %3452 = vmatpush1.bf16.msra.mxu0 %v1252
  %3453 = vmatprep.subr.bf16.mxu0 0
  %3454 = vmatpush1.bf16.msra.mxu0 %v1255
  %3455 = vmatprep.subr.bf16.mxu0 0
  %3456 = vmatpush1.bf16.msra.mxu0 %v1258
  %3457 = vmatprep.subr.bf16.mxu0 0
  %3458 = vmatpush1.bf16.msra.mxu0 %v1261
  %3459 = vmatprep.subr.bf16.mxu0 0
  %3460 = vmatpush1.bf16.msra.mxu0 %v1264
  %3461 = vmatprep.subr.bf16.mxu0 0
  %3462 = vmatpush1.bf16.msra.mxu0 %v1267
  %3463 = vmatprep.subr.bf16.mxu0 0
  %3464 = vmatpush1.bf16.msra.mxu0 0
  %3465 = vmatprep.subr.bf16.mxu0 0
  %3466 = vmatpush1.bf16.msra.mxu0 0
  %3467 = vmatprep.subr.bf16.mxu0 0
  %3468 = vmatpush1.bf16.msra.mxu0 0
  %3469 = vmatprep.subr.bf16.mxu0 0
  %3470 = vmatpush1.bf16.msra.mxu0 0
  %3471 = vmatprep.subr.bf16.mxu0 0
  %3472 = vmatpush1.bf16.msra.mxu0 0
  %3473 = vmatprep.subr.bf16.mxu0 0
  %3474 = vmatpush1.bf16.msra.mxu0 0
  %3475 = vmatprep.subr.bf16.mxu0 0
  %3476 = vmatpush1.bf16.msra.mxu0 0
  %3477 = vmatprep.subr.bf16.mxu0 0
  %3478 = vmatpush1.bf16.msra.mxu0 0
  %3479 = vmatprep.mubr.bf16.mxu0 0
  %3480 = vmatmul.mubr.bf16.gmra.mrb[0].mxu0 %v3403
  %v3481 = vpop.f32.mrb[0].mxu0
  %v3482 = vadd.f32 %v1160, %v3481
  %v3483 = vpop.f32.mrb[0].mxu0
  %v3484 = vpop.f32.mrb[0].mxu0
  %v3485 = vadd.f32 %v1160, %v3484
  %v3486 = vpop.f32.mrb[0].mxu0
  %3487 = vdwg.mxu0
  %v3488 = vadd.f32 %v3439, %v3226
  %v3489 = vadd.f32 %v3443, %v3230
  %v3490 = vxor.u32 %v3488, 2147483648
  %v3491 = vxor.u32 %v3489, 2147483648
  %v3492 = vmul.f32 %v3490, 1.442695
  %v3493 = vpow.pop %v3492
  %v3494 = vmul.f32 %v3491, 1.442695
  %v3495 = vpow.pop %v3494
  %v3496 = vadd.f32 %v3493, 1.0
  %v3497 = vadd.f32 %v3495, 1.0
  %v3498 = vrcp.pop %v3496
  %v3499 = vmul.f32 1.0, %v3498
  %v3500 = vrcp.pop %v3497
  %v3501 = vmul.f32 1.0, %v3500
  %v3502 = vadd.f32 %v3441, %v3228
  %v3503 = vadd.f32 %v3445, %v3232
  %v3504 = vxor.u32 %v3502, 2147483648
  %v3505 = vxor.u32 %v3503, 2147483648
  %v3506 = vmul.f32 %v3504, 1.442695
  %v3507 = vpow.pop %v3506
  %v3508 = vmul.f32 %v3505, 1.442695
  %v3509 = vpow.pop %v3508
  %v3510 = vadd.f32 %v3507, 1.0
  %v3511 = vadd.f32 %v3509, 1.0
  %v3512 = vrcp.pop %v3510
  %v3513 = vmul.f32 1.0, %v3512
  %v3514 = vrcp.pop %v3511
  %v3515 = vmul.f32 1.0, %v3514
  %v3516 = vadd.f32 %v3269, %v1408
  %v3517 = vadd.f32 %v3272, %v1408
  %v3518 = vmul.f32 %v3499, %v3516
  %v3519 = vmul.f32 %v3501, %v3517
  %v3520 = vadd.f32 %v3482, %v3518
  %v3521 = vadd.f32 %v3485, %v3519
  %v3522 = vtanh.pop %v3520
  %v3523 = vtanh.pop %v3521
  %v3524 = vsub.f32 1.0, %v3513
  %v3525 = vsub.f32 1.0, %v3515
  %v3526 = vmul.f32 %v3524, %v3522
  %v3527 = vmul.f32 %v3525, %v3523
  %v3528 = vmul.f32 %v3513, %v3179
  %v3529 = vmul.f32 %v3515, %v3180
  %v3530 = vadd.f32 %v3526, %v3528
  %v3531 = vadd.f32 %v3527, %v3529
  %s3532 = smul.u32 14, 3
  %s3533 = smul.addr %s3532, 8
  %s3534 = scalar_lea.vmem [#allocation2], %s3533
  %v3535 = vld [vmem:[%s3534] sm:$0xff]
  %v3536 = vld [vmem:[%s3534 + $0x8] sm:$0xff]
  %v3537 = vld [vmem:[%s3534 + $0x10] sm:$0xff]
  %v3538 = vld [vmem:[%s3534 + $0x18] sm:$0xff]
  %v3539 = vld [vmem:[%s3534 + $0x20] sm:$0xff]
  %v3540 = vld [vmem:[%s3534 + $0x28] sm:$0xff]
  %v3541 = vpack.c.bf16 %v3531, %v3530
  %3542 = vmatprep.subr.bf16.mxu0 %v754
  %3543 = vmatpush1.bf16.msra.mxu0 %v753
  %3544 = vmatprep.subr.bf16.mxu0 %v757
  %3545 = vmatpush1.bf16.msra.mxu0 %v756
  %3546 = vmatprep.subr.bf16.mxu0 %v760
  %3547 = vmatpush1.bf16.msra.mxu0 %v759
  %3548 = vmatprep.subr.bf16.mxu0 %v763
  %3549 = vmatpush1.bf16.msra.mxu0 %v762
  %3550 = vmatprep.subr.bf16.mxu0 %v766
  %3551 = vmatpush1.bf16.msra.mxu0 %v765
  %3552 = vmatprep.subr.bf16.mxu0 %v769
  %3553 = vmatpush1.bf16.msra.mxu0 %v768
  %3554 = vmatprep.subr.bf16.mxu0 %v772
  %3555 = vmatpush1.bf16.msra.mxu0 %v771
  %3556 = vmatprep.subr.bf16.mxu0 %v775
  %3557 = vmatpush1.bf16.msra.mxu0 %v774
  %3558 = vmatprep.subr.bf16.mxu0 0
  %3559 = vmatpush1.bf16.msra.mxu0 0
  %3560 = vmatprep.subr.bf16.mxu0 0
  %3561 = vmatpush1.bf16.msra.mxu0 0
  %3562 = vmatprep.subr.bf16.mxu0 0
  %3563 = vmatpush1.bf16.msra.mxu0 0
  %3564 = vmatprep.subr.bf16.mxu0 0
  %3565 = vmatpush1.bf16.msra.mxu0 0
  %3566 = vmatprep.subr.bf16.mxu0 0
  %3567 = vmatpush1.bf16.msra.mxu0 0
  %3568 = vmatprep.subr.bf16.mxu0 0
  %3569 = vmatpush1.bf16.msra.mxu0 0
  %3570 = vmatprep.subr.bf16.mxu0 0
  %3571 = vmatpush1.bf16.msra.mxu0 0
  %3572 = vmatprep.subr.bf16.mxu0 0
  %3573 = vmatpush1.bf16.msra.mxu0 0
  %3574 = vmatprep.mubr.bf16.mxu0 0
  %3575 = vmatmul.mubr.bf16.gmra.mrb[0].mxu0 %v3541
  %v3576 = vpop.f32.mrb[0].mxu0
  %v3577 = vadd.f32 0.0, %v3576
  %v3578 = vpop.f32.mrb[0].mxu0
  %v3579 = vadd.f32 0.0, %v3578
  %v3580 = vpop.f32.mrb[0].mxu0
  %v3581 = vadd.f32 0.0, %v3580
  %v3582 = vpop.f32.mrb[0].mxu0
  %v3583 = vadd.f32 0.0, %v3582
  %3584 = vdwg.mxu0
  %3585 = vmatprep.subr.bf16.mxu0 0
  %3586 = vmatpush1.bf16.msra.mxu0 %v755
  %3587 = vmatprep.subr.bf16.mxu0 0
  %3588 = vmatpush1.bf16.msra.mxu0 %v758
  %3589 = vmatprep.subr.bf16.mxu0 0
  %3590 = vmatpush1.bf16.msra.mxu0 %v761
  %3591 = vmatprep.subr.bf16.mxu0 0
  %3592 = vmatpush1.bf16.msra.mxu0 %v764
  %3593 = vmatprep.subr.bf16.mxu0 0
  %3594 = vmatpush1.bf16.msra.mxu0 %v767
  %3595 = vmatprep.subr.bf16.mxu0 0
  %3596 = vmatpush1.bf16.msra.mxu0 %v770
  %3597 = vmatprep.subr.bf16.mxu0 0
  %3598 = vmatpush1.bf16.msra.mxu0 %v773
  %3599 = vmatprep.subr.bf16.mxu0 0
  %3600 = vmatpush1.bf16.msra.mxu0 %v776
  %3601 = vmatprep.subr.bf16.mxu0 0
  %3602 = vmatpush1.bf16.msra.mxu0 0
  %3603 = vmatprep.subr.bf16.mxu0 0
  %3604 = vmatpush1.bf16.msra.mxu0 0
  %3605 = vmatprep.subr.bf16.mxu0 0
  %3606 = vmatpush1.bf16.msra.mxu0 0
  %3607 = vmatprep.subr.bf16.mxu0 0
  %3608 = vmatpush1.bf16.msra.mxu0 0
  %3609 = vmatprep.subr.bf16.mxu0 0
  %3610 = vmatpush1.bf16.msra.mxu0 0
  %3611 = vmatprep.subr.bf16.mxu0 0
  %3612 = vmatpush1.bf16.msra.mxu0 0
  %3613 = vmatprep.subr.bf16.mxu0 0
  %3614 = vmatpush1.bf16.msra.mxu0 0
  %3615 = vmatprep.subr.bf16.mxu0 0
  %3616 = vmatpush1.bf16.msra.mxu0 0
  %3617 = vmatprep.mubr.bf16.mxu0 0
  %3618 = vmatmul.mubr.bf16.gmra.mrb[0].mxu0 %v3541
  %v3619 = vpop.f32.mrb[0].mxu0
  %v3620 = vadd.f32 0.0, %v3619
  %v3621 = vpop.f32.mrb[0].mxu0
  %v3622 = vpop.f32.mrb[0].mxu0
  %v3623 = vadd.f32 0.0, %v3622
  %v3624 = vpop.f32.mrb[0].mxu0
  %3625 = vdwg.mxu0
  %3626 = vmatprep.subr.bf16.mxu0 %v966
  %3627 = vmatpush1.bf16.msra.mxu0 %v965
  %3628 = vmatprep.subr.bf16.mxu0 %v969
  %3629 = vmatpush1.bf16.msra.mxu0 %v968
  %3630 = vmatprep.subr.bf16.mxu0 %v972
  %3631 = vmatpush1.bf16.msra.mxu0 %v971
  %3632 = vmatprep.subr.bf16.mxu0 %v975
  %3633 = vmatpush1.bf16.msra.mxu0 %v974
  %3634 = vmatprep.subr.bf16.mxu0 %v978
  %3635 = vmatpush1.bf16.msra.mxu0 %v977
  %3636 = vmatprep.subr.bf16.mxu0 %v981
  %3637 = vmatpush1.bf16.msra.mxu0 %v980
  %3638 = vmatprep.subr.bf16.mxu0 %v984
  %3639 = vmatpush1.bf16.msra.mxu0 %v983
  %3640 = vmatprep.subr.bf16.mxu0 %v987
  %3641 = vmatpush1.bf16.msra.mxu0 %v986
  %3642 = vmatprep.subr.bf16.mxu0 0
  %3643 = vmatpush1.bf16.msra.mxu0 0
  %3644 = vmatprep.subr.bf16.mxu0 0
  %3645 = vmatpush1.bf16.msra.mxu0 0
  %3646 = vmatprep.subr.bf16.mxu0 0
  %3647 = vmatpush1.bf16.msra.mxu0 0
  %3648 = vmatprep.subr.bf16.mxu0 0
  %3649 = vmatpush1.bf16.msra.mxu0 0
  %3650 = vmatprep.subr.bf16.mxu0 0
  %3651 = vmatpush1.bf16.msra.mxu0 0
  %3652 = vmatprep.subr.bf16.mxu0 0
  %3653 = vmatpush1.bf16.msra.mxu0 0
  %3654 = vmatprep.subr.bf16.mxu0 0
  %3655 = vmatpush1.bf16.msra.mxu0 0
  %3656 = vmatprep.subr.bf16.mxu0 0
  %3657 = vmatpush1.bf16.msra.mxu0 0
  %3658 = vmatprep.mubr.bf16.mxu0 0
  %3659 = vmatmul.mubr.bf16.gmra.mrb[0].mxu0 %v3403
  %v3660 = vpop.f32.mrb[0].mxu0
  %v3661 = vadd.f32 0.0, %v3660
  %v3662 = vpop.f32.mrb[0].mxu0
  %v3663 = vadd.f32 0.0, %v3662
  %v3664 = vpop.f32.mrb[0].mxu0
  %v3665 = vadd.f32 0.0, %v3664
  %v3666 = vpop.f32.mrb[0].mxu0
  %v3667 = vadd.f32 0.0, %v3666
  %3668 = vdwg.mxu0
  %3669 = vmatprep.subr.bf16.mxu0 0
  %3670 = vmatpush1.bf16.msra.mxu0 %v967
  %3671 = vmatprep.subr.bf16.mxu0 0
  %3672 = vmatpush1.bf16.msra.mxu0 %v970
  %3673 = vmatprep.subr.bf16.mxu0 0
  %3674 = vmatpush1.bf16.msra.mxu0 %v973
  %3675 = vmatprep.subr.bf16.mxu0 0
  %3676 = vmatpush1.bf16.msra.mxu0 %v976
  %3677 = vmatprep.subr.bf16.mxu0 0
  %3678 = vmatpush1.bf16.msra.mxu0 %v979
  %3679 = vmatprep.subr.bf16.mxu0 0
  %3680 = vmatpush1.bf16.msra.mxu0 %v982
  %3681 = vmatprep.subr.bf16.mxu0 0
  %3682 = vmatpush1.bf16.msra.mxu0 %v985
  %3683 = vmatprep.subr.bf16.mxu0 0
  %3684 = vmatpush1.bf16.msra.mxu0 %v988
  %3685 = vmatprep.subr.bf16.mxu0 0
  %3686 = vmatpush1.bf16.msra.mxu0 0
  %3687 = vmatprep.subr.bf16.mxu0 0
  %3688 = vmatpush1.bf16.msra.mxu0 0
  %3689 = vmatprep.subr.bf16.mxu0 0
  %3690 = vmatpush1.bf16.msra.mxu0 0
  %3691 = vmatprep.subr.bf16.mxu0 0
  %3692 = vmatpush1.bf16.msra.mxu0 0
  %3693 = vmatprep.subr.bf16.mxu0 0
  %3694 = vmatpush1.bf16.msra.mxu0 0
  %3695 = vmatprep.subr.bf16.mxu0 0
  %3696 = vmatpush1.bf16.msra.mxu0 0
  %3697 = vmatprep.subr.bf16.mxu0 0
  %3698 = vmatpush1.bf16.msra.mxu0 0
  %3699 = vmatprep.subr.bf16.mxu0 0
  %3700 = vmatpush1.bf16.msra.mxu0 0
  %3701 = vmatprep.mubr.bf16.mxu0 0
  %3702 = vmatmul.mubr.bf16.gmra.mrb[0].mxu0 %v3403
  %v3703 = vpop.f32.mrb[0].mxu0
  %v3704 = vadd.f32 0.0, %v3703
  %v3705 = vpop.f32.mrb[0].mxu0
  %v3706 = vpop.f32.mrb[0].mxu0
  %v3707 = vadd.f32 0.0, %v3706
  %v3708 = vpop.f32.mrb[0].mxu0
  %3709 = vdwg.mxu0
  %v3710 = vadd.f32 %v3535, %v3661
  %v3711 = vadd.f32 %v3538, %v3665
  %v3712 = vxor.u32 %v3710, 2147483648
  %v3713 = vxor.u32 %v3711, 2147483648
  %v3714 = vmul.f32 %v3712, 1.442695
  %v3715 = vpow.pop %v3714
  %v3716 = vmul.f32 %v3713, 1.442695
  %v3717 = vpow.pop %v3716
  %v3718 = vadd.f32 %v3715, 1.0
  %v3719 = vadd.f32 %v3717, 1.0
  %v3720 = vrcp.pop %v3718
  %v3721 = vmul.f32 1.0, %v3720
  %v3722 = vrcp.pop %v3719
  %v3723 = vmul.f32 1.0, %v3722
  %v3724 = vadd.f32 %v3536, %v3663
  %v3725 = vadd.f32 %v3539, %v3667
  %v3726 = vxor.u32 %v3724, 2147483648
  %v3727 = vxor.u32 %v3725, 2147483648
  %v3728 = vmul.f32 %v3726, 1.442695
  %v3729 = vpow.pop %v3728
  %v3730 = vmul.f32 %v3727, 1.442695
  %v3731 = vpow.pop %v3730
  %v3732 = vadd.f32 %v3729, 1.0
  %v3733 = vadd.f32 %v3731, 1.0
  %v3734 = vrcp.pop %v3732
  %v3735 = vmul.f32 1.0, %v3734
  %v3736 = vrcp.pop %v3733
  %v3737 = vmul.f32 1.0, %v3736
  %v3738 = vadd.f32 %v3704, %v1129
  %v3739 = vadd.f32 %v3707, %v1129
  %v3740 = vmul.f32 %v3721, %v3738
  %v3741 = vmul.f32 %v3723, %v3739
  %v3742 = vadd.f32 %v3537, %v3740
  %v3743 = vadd.f32 %v3540, %v3741
  %v3744 = vtanh.pop %v3742
  %v3745 = vtanh.pop %v3743
  %v3746 = vsub.f32 1.0, %v3735
  %v3747 = vsub.f32 1.0, %v3737
  %v3748 = vmul.f32 %v3746, %v3744
  %v3749 = vmul.f32 %v3747, %v3745
  %v3750 = vmul.f32 %v3735, %v3401
  %v3751 = vmul.f32 %v3737, %v3402
  %v3752 = vadd.f32 %v3748, %v3750
  %v3753 = vadd.f32 %v3749, %v3751
  %v3754 = vpack.c.bf16 %v3753, %v3752
  %3755 = vmatprep.subr.bf16.mxu0 %v1245
  %3756 = vmatpush1.bf16.msra.mxu0 %v1244
  %3757 = vmatprep.subr.bf16.mxu0 %v1248
  %3758 = vmatpush1.bf16.msra.mxu0 %v1247
  %3759 = vmatprep.subr.bf16.mxu0 %v1251
  %3760 = vmatpush1.bf16.msra.mxu0 %v1250
  %3761 = vmatprep.subr.bf16.mxu0 %v1254
  %3762 = vmatpush1.bf16.msra.mxu0 %v1253
  %3763 = vmatprep.subr.bf16.mxu0 %v1257
  %3764 = vmatpush1.bf16.msra.mxu0 %v1256
  %3765 = vmatprep.subr.bf16.mxu0 %v1260
  %3766 = vmatpush1.bf16.msra.mxu0 %v1259
  %3767 = vmatprep.subr.bf16.mxu0 %v1263
  %3768 = vmatpush1.bf16.msra.mxu0 %v1262
  %3769 = vmatprep.subr.bf16.mxu0 %v1266
  %3770 = vmatpush1.bf16.msra.mxu0 %v1265
  %3771 = vmatprep.subr.bf16.mxu0 0
  %3772 = vmatpush1.bf16.msra.mxu0 0
  %3773 = vmatprep.subr.bf16.mxu0 0
  %3774 = vmatpush1.bf16.msra.mxu0 0
  %3775 = vmatprep.subr.bf16.mxu0 0
  %3776 = vmatpush1.bf16.msra.mxu0 0
  %3777 = vmatprep.subr.bf16.mxu0 0
  %3778 = vmatpush1.bf16.msra.mxu0 0
  %3779 = vmatprep.subr.bf16.mxu0 0
  %3780 = vmatpush1.bf16.msra.mxu0 0
  %3781 = vmatprep.subr.bf16.mxu0 0
  %3782 = vmatpush1.bf16.msra.mxu0 0
  %3783 = vmatprep.subr.bf16.mxu0 0
  %3784 = vmatpush1.bf16.msra.mxu0 0
  %3785 = vmatprep.subr.bf16.mxu0 0
  %3786 = vmatpush1.bf16.msra.mxu0 0
  %3787 = vmatprep.mubr.bf16.mxu0 0
  %3788 = vmatmul.mubr.bf16.gmra.mrb[0].mxu0 %v3754
  %v3789 = vpop.f32.mrb[0].mxu0
  %v3790 = vadd.f32 %v1152, %v3789
  %v3791 = vpop.f32.mrb[0].mxu0
  %v3792 = vadd.f32 %v1156, %v3791
  %v3793 = vpop.f32.mrb[0].mxu0
  %v3794 = vadd.f32 %v1152, %v3793
  %v3795 = vpop.f32.mrb[0].mxu0
  %v3796 = vadd.f32 %v1156, %v3795
  %3797 = vdwg.mxu0
  %3798 = vmatprep.subr.bf16.mxu0 0
  %3799 = vmatpush1.bf16.msra.mxu0 %v1246
  %3800 = vmatprep.subr.bf16.mxu0 0
  %3801 = vmatpush1.bf16.msra.mxu0 %v1249
  %3802 = vmatprep.subr.bf16.mxu0 0
  %3803 = vmatpush1.bf16.msra.mxu0 %v1252
  %3804 = vmatprep.subr.bf16.mxu0 0
  %3805 = vmatpush1.bf16.msra.mxu0 %v1255
  %3806 = vmatprep.subr.bf16.mxu0 0
  %3807 = vmatpush1.bf16.msra.mxu0 %v1258
  %3808 = vmatprep.subr.bf16.mxu0 0
  %3809 = vmatpush1.bf16.msra.mxu0 %v1261
  %3810 = vmatprep.subr.bf16.mxu0 0
  %3811 = vmatpush1.bf16.msra.mxu0 %v1264
  %3812 = vmatprep.subr.bf16.mxu0 0
  %3813 = vmatpush1.bf16.msra.mxu0 %v1267
  %3814 = vmatprep.subr.bf16.mxu0 0
  %3815 = vmatpush1.bf16.msra.mxu0 0
  %3816 = vmatprep.subr.bf16.mxu0 0
  %3817 = vmatpush1.bf16.msra.mxu0 0
  %3818 = vmatprep.subr.bf16.mxu0 0
  %3819 = vmatpush1.bf16.msra.mxu0 0
  %3820 = vmatprep.subr.bf16.mxu0 0
  %3821 = vmatpush1.bf16.msra.mxu0 0
  %3822 = vmatprep.subr.bf16.mxu0 0
  %3823 = vmatpush1.bf16.msra.mxu0 0
  %3824 = vmatprep.subr.bf16.mxu0 0
  %3825 = vmatpush1.bf16.msra.mxu0 0
  %3826 = vmatprep.subr.bf16.mxu0 0
  %3827 = vmatpush1.bf16.msra.mxu0 0
  %3828 = vmatprep.subr.bf16.mxu0 0
  %3829 = vmatpush1.bf16.msra.mxu0 0
  %3830 = vmatprep.mubr.bf16.mxu0 0
  %3831 = vmatmul.mubr.bf16.gmra.mrb[0].mxu0 %v3754
  %v3832 = vpop.f32.mrb[0].mxu0
  %v3833 = vadd.f32 %v1160, %v3832
  %v3834 = vpop.f32.mrb[0].mxu0
  %v3835 = vpop.f32.mrb[0].mxu0
  %v3836 = vadd.f32 %v1160, %v3835
  %v3837 = vpop.f32.mrb[0].mxu0
  %3838 = vdwg.mxu0
  %v3839 = vadd.f32 %v3790, %v3577
  %v3840 = vadd.f32 %v3794, %v3581
  %v3841 = vxor.u32 %v3839, 2147483648
  %v3842 = vxor.u32 %v3840, 2147483648
  %v3843 = vmul.f32 %v3841, 1.442695
  %v3844 = vpow.pop %v3843
  %v3845 = vmul.f32 %v3842, 1.442695
  %v3846 = vpow.pop %v3845
  %v3847 = vadd.f32 %v3844, 1.0
  %v3848 = vadd.f32 %v3846, 1.0
  %v3849 = vrcp.pop %v3847
  %v3850 = vmul.f32 1.0, %v3849
  %v3851 = vrcp.pop %v3848
  %v3852 = vmul.f32 1.0, %v3851
  %v3853 = vadd.f32 %v3792, %v3579
  %v3854 = vadd.f32 %v3796, %v3583
  %v3855 = vxor.u32 %v3853, 2147483648
  %v3856 = vxor.u32 %v3854, 2147483648
  %v3857 = vmul.f32 %v3855, 1.442695
  %v3858 = vpow.pop %v3857
  %v3859 = vmul.f32 %v3856, 1.442695
  %v3860 = vpow.pop %v3859
  %v3861 = vadd.f32 %v3858, 1.0
  %v3862 = vadd.f32 %v3860, 1.0
  %v3863 = vrcp.pop %v3861
  %v3864 = vmul.f32 1.0, %v3863
  %v3865 = vrcp.pop %v3862
  %v3866 = vmul.f32 1.0, %v3865
  %v3867 = vadd.f32 %v3620, %v1408
  %v3868 = vadd.f32 %v3623, %v1408
  %v3869 = vmul.f32 %v3850, %v3867
  %v3870 = vmul.f32 %v3852, %v3868
  %v3871 = vadd.f32 %v3833, %v3869
  %v3872 = vadd.f32 %v3836, %v3870
  %v3873 = vtanh.pop %v3871
  %v3874 = vtanh.pop %v3872
  %v3875 = vsub.f32 1.0, %v3864
  %v3876 = vsub.f32 1.0, %v3866
  %v3877 = vmul.f32 %v3875, %v3873
  %v3878 = vmul.f32 %v3876, %v3874
  %v3879 = vmul.f32 %v3864, %v3530
  %v3880 = vmul.f32 %v3866, %v3531
  %v3881 = vadd.f32 %v3877, %v3879
  %v3882 = vadd.f32 %v3878, %v3880
  %v3883 = vpack.c.bf16 %v3882, %v3881
  %v3884 = vld [vmem:[%s10] sm:$0xf]
  %v3885 = vld [vmem:[%s10 + $0x4] sm:$0xf]
  %v3886 = vld [vmem:[%s10 + $0x8] sm:$0xf]
  %v3887 = vld [vmem:[%s10 + $0xc] sm:$0xf]
  %v3888 = vld [vmem:[%s10 + $0x10] sm:$0xf]
  %v3889 = vld [vmem:[%s10 + $0x14] sm:$0xf]
  %v3890 = vld [vmem:[%s10 + $0x18] sm:$0xf]
  %v3891 = vld [vmem:[%s10 + $0x1c] sm:$0xf]
  %v3892 = vld [vmem:[%s10 + $0x20] sm:$0xf]
  %v3893 = vld [vmem:[%s10 + $0x24] sm:$0xf]
  %v3894 = vld [vmem:[%s10 + $0x28] sm:$0xf]
  %v3895 = vld [vmem:[%s10 + $0x2c] sm:$0xf]
  %v3896 = vld [vmem:[%s10 + $0x30] sm:$0xf]
  %v3897 = vld [vmem:[%s10 + $0x34] sm:$0xf]
  %v3898 = vld [vmem:[%s10 + $0x38] sm:$0xf]
  %v3899 = vld [vmem:[%s10 + $0x3c] sm:$0xf]
  %v3900 = vld [vmem:[%s11] sm:$0x1]
  %v3902 = vlaneseq
  %v3903 = vshrl.u32 %v3902, 7
  %v3904 = vsub.s32 0, %v3903
  %v3905 = vrot.slane %v3900, %v3904
  %v3923 = vunpack.c.l.b16 %v3884
  %v3924 = vunpack.c.l.b16 %v3885
  %v3925 = vunpack.c.l.b16 %v3886
  %v3926 = vunpack.c.l.b16 %v3887
  %v3927 = vunpack.c.l.b16 %v3888
  %v3928 = vunpack.c.l.b16 %v3889
  %v3929 = vunpack.c.l.b16 %v3890
  %v3930 = vunpack.c.l.b16 %v3891
  %v3931 = vunpack.c.l.b16 %v3892
  %v3932 = vunpack.c.l.b16 %v3893
  %v3933 = vunpack.c.l.b16 %v3894
  %v3934 = vunpack.c.l.b16 %v3895
  %v3935 = vunpack.c.l.b16 %v3896
  %v3936 = vunpack.c.l.b16 %v3897
  %v3937 = vunpack.c.l.b16 %v3898
  %v3938 = vunpack.c.l.b16 %v3899
  %v3939 = vpack.c.b16 %v3924, %v3923
  %v3940 = vpack.c.b16 %v3926, %v3925
  %v3941 = vpack.c.b16 %v3928, %v3927
  %v3942 = vpack.c.b16 %v3930, %v3929
  %v3943 = vpack.c.b16 %v3932, %v3931
  %v3944 = vpack.c.b16 %v3934, %v3933
  %v3945 = vpack.c.b16 %v3936, %v3935
  %v3946 = vpack.c.b16 %v3938, %v3937
  %3955 = vmatprep.subr.bf16.mxu0 0
  %3956 = vmatpush1.bf16.msra.mxu0 %v3939
  %3957 = vmatprep.subr.bf16.mxu0 0
  %3958 = vmatpush1.bf16.msra.mxu0 %v3940
  %3959 = vmatprep.subr.bf16.mxu0 0
  %3960 = vmatpush1.bf16.msra.mxu0 %v3941
  %3961 = vmatprep.subr.bf16.mxu0 0
  %3962 = vmatpush1.bf16.msra.mxu0 %v3942
  %3963 = vmatprep.subr.bf16.mxu0 0
  %3964 = vmatpush1.bf16.msra.mxu0 %v3943
  %3965 = vmatprep.subr.bf16.mxu0 0
  %3966 = vmatpush1.bf16.msra.mxu0 %v3944
  %3967 = vmatprep.subr.bf16.mxu0 0
  %3968 = vmatpush1.bf16.msra.mxu0 %v3945
  %3969 = vmatprep.subr.bf16.mxu0 0
  %3970 = vmatpush1.bf16.msra.mxu0 %v3946
  %3971 = vmatprep.subr.bf16.mxu0 0
  %3972 = vmatpush1.bf16.msra.mxu0 0
  %3973 = vmatprep.subr.bf16.mxu0 0
  %3974 = vmatpush1.bf16.msra.mxu0 0
  %3975 = vmatprep.subr.bf16.mxu0 0
  %3976 = vmatpush1.bf16.msra.mxu0 0
  %3977 = vmatprep.subr.bf16.mxu0 0
  %3978 = vmatpush1.bf16.msra.mxu0 0
  %3979 = vmatprep.subr.bf16.mxu0 0
  %3980 = vmatpush1.bf16.msra.mxu0 0
  %3981 = vmatprep.subr.bf16.mxu0 0
  %3982 = vmatpush1.bf16.msra.mxu0 0
  %3983 = vmatprep.subr.bf16.mxu0 0
  %3984 = vmatpush1.bf16.msra.mxu0 0
  %3985 = vmatprep.subr.bf16.mxu0 0
  %3986 = vmatpush1.bf16.msra.mxu0 0
  %3987 = vmatprep.mubr.bf16.mxu0 0
  %3988 = vmatmul.mubr.bf16.gmra.mrb[0].mxu0 %v3883
  %v3989 = vpop.f32.mrb[0].mxu0
  %v3990 = vadd.f32 %v3905, %v3989
  %v3991 = vpop.f32.mrb[0].mxu0
  %v3992 = vpop.f32.mrb[0].mxu0
  %v3993 = vadd.f32 %v3905, %v3992
  %v3994 = vpop.f32.mrb[0].mxu0
  %3995 = vdwg.mxu0
  %3996 = vst [vmem:[%s12] sm:$0xff] %v3990
  %3997 = vst [vmem:[%s12 + $0x8] sm:$0xff] %v3993
  // Predicated region
  $region50: #{dqn_base_forward.1} parent=0 // pred_check
    _
  $region51: #{dqn_base_forward.1} parent=0 // pred_check_branch
    %3999 = sbr.rel (0) target = $region53
  $region52: #{dqn_base_forward.1} parent=0 // pred_region
    _
  $region53: #{dqn_base_forward.1} parent=0 // pred_fallthru
    _
  // Predicated region
  $region54: #{dqn_base_forward.1} parent=0 // pred_check
    _
  $region55: #{dqn_base_forward.1} parent=0 // pred_check_branch
    %4001 = sbr.rel (0) target = $region57
  $region56: #{dqn_base_forward.1} parent=0 // pred_region
    _
  $region57: #{dqn_base_forward.1} parent=0 // pred_fallthru
    _

</llo_original>
